<compile_context>
chip_gen: v6e
topology: v6e:2x2x1
jax: 0.10.0
libtpu: 0.0.40
codegen_flags: <defaults>
</compile_context>

<pallas_src>
import math
from functools import partial

import jax
import jax.numpy as jnp
from jax.experimental import pallas as pl
from jax.experimental.pallas import tpu as pltpu

BN_EPS = 1e-5


def _round_up(a, b):
    return (a + b - 1) // b * b


# ---------------------------------------------------------------------------
# Pallas kernels: fused matmul + bias (+ residual) (+ ReLU)
# ---------------------------------------------------------------------------
def _mm_bias_kernel(x_ref, w_ref, b_ref, o_ref, *, relu):
    acc = jnp.dot(x_ref[...], w_ref[...], preferred_element_type=jnp.float32)
    acc = acc + b_ref[...]
    if relu:
        acc = jnp.maximum(acc, 0.0)
    o_ref[...] = acc.astype(o_ref.dtype)


def _mm_bias_res_kernel(x_ref, w_ref, b_ref, r_ref, o_ref, *, relu):
    acc = jnp.dot(x_ref[...], w_ref[...], preferred_element_type=jnp.float32)
    acc = acc + b_ref[...] + r_ref[...]
    if relu:
        acc = jnp.maximum(acc, 0.0)
    o_ref[...] = acc.astype(o_ref.dtype)


def fused_matmul(x2d, w2d, bias, *, residual=None, relu=False, out_dtype=jnp.float32):
    """x2d: (M, K) bf16, w2d: (K, N) bf16 (BN scale pre-folded), bias: (1, N) f32,
    residual: (M, N) f32 or None."""
    M, K = x2d.shape
    Kw, Ncol = w2d.shape
    assert K == Kw

    # >=2 M-steps when M is large enough so v7x's two TensorCores both get work;
    # a single full-dim step otherwise (v5e/v6e have 1 TC; per-step overhead dominates).
    if M >= 512:
        tm = _round_up(pl.cdiv(M, 2), 16)   # 16-row multiple keeps bf16 sublane tiling legal
    else:
        tm = M                              # full-dim block is always layout-legal
    grid = (pl.cdiv(M, tm),)

    in_specs = [
        pl.BlockSpec((tm, K), lambda i: (i, 0)),     # activations / patches (bf16)
        pl.BlockSpec((K, Ncol), lambda i: (0, 0)),   # weight (bf16), resident across steps
        pl.BlockSpec((1, Ncol), lambda i: (0, 0)),   # folded BN bias (f32)
    ]
    args = [x2d, w2d, bias]
    if residual is not None:
        in_specs.append(pl.BlockSpec((tm, Ncol), lambda i: (i, 0)))
        args.append(residual)
        kern = partial(_mm_bias_res_kernel, relu=relu)
    else:
        kern = partial(_mm_bias_kernel, relu=relu)

    return pl.pallas_call(
        kern,
        out_shape=jax.ShapeDtypeStruct((M, Ncol), out_dtype),
        grid=grid,
        in_specs=in_specs,
        out_specs=pl.BlockSpec((tm, Ncol), lambda i: (i, 0)),
        compiler_params=pltpu.CompilerParams(dimension_semantics=("parallel",)),
    )(*args)


# ---------------------------------------------------------------------------
# One-time parameter preparation (hoisted out of the forward pass)
# ---------------------------------------------------------------------------
def _fold_bn(bn):
    gamma, beta, mean, var = bn
    scale = gamma / jnp.sqrt(var + BN_EPS)
    return scale, beta - mean * scale


def prepare_params(raw, *, stride, has_upsample):
    """Fold BN into weights, build matmul-ready (bf16) weight matrices once."""
    assert stride in (1, 2)
    p = {}

    # conv1 (1x1): Conv2d weight (Cmid, Cin, 1, 1) -> (Cin, Cmid), bn1 folded.
    s1, b1 = _fold_bn(raw['bn1'])
    w1 = jnp.transpose(raw['w1'][:, :, 0, 0], (1, 0)) * s1[None, :]
    p['w1'] = w1.astype(jnp.bfloat16)
    p['b1'] = b1.reshape(1, -1).astype(jnp.float32)

    # conv2: ConvTranspose2d weight, PyTorch layout (Cin=Cmid, Cout=Cmid, kh, kw).
    s2, b2 = _fold_bn(raw['bn2'])
    w = raw['w2']
    C = w.shape[0]
    if stride == 2:
        # Sub-pixel phase split (stride-2, pad 1, k=3, no output_padding):
        #   out[2i  ,2j  ] = x[i,j]@w[1,1]
        #   out[2i  ,2j+1] = x[i,j]@w[1,2] + x[i,j+1]@w[1,0]
        #   out[2i+1,2j  ] = x[i,j]@w[2,1] + x[i+1,j]@w[0,1]
        #   out[2i+1,2j+1] = x[i,j]@w[2,2] + x[i,j+1]@w[2,0] + x[i+1,j]@w[0,2] + x[i+1,j+1]@w[0,0]
        # Patch (K) order: x[i,j], x[i,j+1], x[i+1,j], x[i+1,j+1]
        # Output (N) order: (ee, eo, oe, oo) phases.
        Z = jnp.zeros((C, C), w.dtype)
        t = lambda ky, kx: w[:, :, ky, kx]
        w2 = jnp.block([
            [t(1, 1), t(1, 2), t(2, 1), t(2, 2)],
            [Z,       t(1, 0), Z,       t(2, 0)],
            [Z,       Z,       t(0, 1), t(0, 2)],
            [Z,       Z,       Z,       t(0, 0)],
        ])
        w2 = w2 * jnp.tile(s2, 4)[None, :]
        p['b2'] = jnp.tile(b2, 4).reshape(1, -1).astype(jnp.float32)
    else:
        # stride 1: equivalent 3x3 stride-1 conv; tap (dy,dx) uses w[:, :, 2-dy, 2-dx].
        w2 = jnp.concatenate(
            [w[:, :, 2 - dy, 2 - dx] for dy in range(3) for dx in range(3)], axis=0)
        w2 = w2 * s2[None, :]
        p['b2'] = b2.reshape(1, -1).astype(jnp.float32)
    p['w2'] = w2.astype(jnp.bfloat16)

    # conv3 (1x1): (Cout, Cmid, 1, 1) -> (Cmid, Cout), bn3 folded.
    s3, b3 = _fold_bn(raw['bn3'])
    w3 = jnp.transpose(raw['w3'][:, :, 0, 0], (1, 0)) * s3[None, :]
    p['w3'] = w3.astype(jnp.bfloat16)
    p['b3'] = b3.reshape(1, -1).astype(jnp.float32)

    # upsample branch: ConvTranspose2d(Cin, Cout, k=1, stride=2, bias=False) + BN.
    if has_upsample:
        su, bu = _fold_bn(raw['bnu'])
        wu = raw['wu'][:, :, 0, 0] * su[None, :]      # already (Cin, Cout)
        p['wu'] = wu.astype(jnp.bfloat16)
        p['bu'] = bu.reshape(1, -1).astype(jnp.float32)
        p['bu_fill'] = bu.astype(jnp.float32)         # BN bias = value at the odd output positions
    return p


# ---------------------------------------------------------------------------
# BottleneckUp forward (NCHW in / NCHW out, matching the PyTorch boundary)
# ---------------------------------------------------------------------------
def bottleneck_up_forward(x_nchw, p, *, stride, has_upsample, residue=True):
    N, Cin, H, W = x_nchw.shape
    x = jnp.transpose(x_nchw, (0, 2, 3, 1)).astype(jnp.float32)    # NHWC
    x_bf = x.astype(jnp.bfloat16)
    Cmid = p['w1'].shape[1]
    Cout = p['w3'].shape[1]

    # conv1 + bn1 + relu (1x1 conv == per-pixel channel matmul)
    y1 = fused_matmul(x_bf.reshape(N * H * W, Cin), p['w1'], p['b1'],
                      relu=True, out_dtype=jnp.bfloat16).reshape(N, H, W, Cmid)

    # conv2 (ConvTranspose2d k=3, pad=1) + bn2 + relu
    if stride == 2:
        OH, OW = 2 * H - 1, 2 * W - 1
        # one matmul on the UNdilated input; 4 taps, 4 output phases
        y1p = jnp.pad(y1, ((0, 0), (0, 1), (0, 1), (0, 0)))
        patches = jnp.concatenate(
            [y1p[:, :H, :W, :], y1p[:, :H, 1:W + 1, :],
             y1p[:, 1:H + 1, :W, :], y1p[:, 1:H + 1, 1:W + 1, :]], axis=-1)
        ph = fused_matmul(patches.reshape(N * H * W, 4 * Cmid), p['w2'], p['b2'],
                          relu=True, out_dtype=jnp.bfloat16)
        ph = ph.reshape(N, H, W, 2, 2, Cmid)           # (n, i, j, row-parity, col-parity, c)
        y2 = jnp.transpose(ph, (0, 1, 3, 2, 4, 5)).reshape(N, 2 * H, 2 * W, Cmid)
        y2 = y2[:, :OH, :OW, :]
    else:
        OH, OW = H, W
        y1p = jnp.pad(y1, ((0, 0), (1, 1), (1, 1), (0, 0)))
        patches = jnp.concatenate(
            [y1p[:, dy:dy + H, dx:dx + W, :] for dy in range(3) for dx in range(3)],
            axis=-1)
        y2 = fused_matmul(patches.reshape(N * H * W, 9 * Cmid), p['w2'], p['b2'],
                          relu=True, out_dtype=jnp.bfloat16).reshape(N, H, W, Cmid)

    # residual branch
    residual = None
    if residue:
        if has_upsample:
            # ConvTranspose2d(Cin, Cout, k=1, stride=2) + BN: non-trivial only at even/even
            # output positions; everywhere else it is just the folded BN bias.
            up = fused_matmul(x_bf.reshape(N * H * W, Cin), p['wu'], p['bu'],
                              relu=False, out_dtype=jnp.float32).reshape(N, H, W, Cout)
            residual = jnp.broadcast_to(p['bu_fill'], (N, OH, OW, Cout))
            residual = residual.at[:, 0::2, 0::2, :].set(up)
        else:
            residual = x                               # identity (requires Cin == Cout)
        residual = residual.reshape(N * OH * OW, Cout)

    # conv3 + bn3 (+ residual) + relu : residual add fused in the kernel epilogue
    y3 = fused_matmul(y2.reshape(N * OH * OW, Cmid), p['w3'], p['b3'],
                      residual=residual, relu=True, out_dtype=jnp.float32)
    return jnp.transpose(y3.reshape(N, OH, OW, Cout), (0, 3, 1, 2))


# ---------------------------------------------------------------------------
# Deterministic raw (PyTorch-layout) parameters + pure-JAX reference
# ---------------------------------------------------------------------------
def init_raw_params(key, cin, cmid, cout, *, has_upsample):
    ks = iter(jax.random.split(key, 8))

    def bn(c):   # fresh BatchNorm: gamma=1, beta=0, running_mean=0, running_var=1
        return (jnp.ones((c,), jnp.float32), jnp.zeros((c,), jnp.float32),
                jnp.zeros((c,), jnp.float32), jnp.ones((c,), jnp.float32))

    def conv_w(co, ci, k):                  # Conv2d weight, OIHW
        n = k * k * co
        return jax.random.normal(next(ks), (co, ci, k, k), jnp.float32) * math.sqrt(2.0 / n)

    def convT_w(ci, co, k):                 # ConvTranspose2d weight, (Cin, Cout, kh, kw)
        n = k * k * co
        return jax.random.normal(next(ks), (ci, co, k, k), jnp.float32) * math.sqrt(2.0 / n)

    raw = dict(w1=conv_w(cmid, cin, 1), bn1=bn(cmid),
               w2=convT_w(cmid, cmid, 3), bn2=bn(cmid),
               w3=conv_w(cout, cmid, 1), bn3=bn(cout))
    if has_upsample:
        raw['wu'] = convT_w(cin, cout, 1)
        raw['bnu'] = bn(cout)
    return raw


def _ref_bn(y, bn):
    gamma, beta, mean, var = bn
    return (y - mean) * (gamma / jnp.sqrt(var + BN_EPS)) + beta


def _ref_conv1x1(x, w_oihw):
    return jnp.einsum('nhwc,oc->nhwo', x, w_oihw[:, :, 0, 0],
                      precision=jax.lax.Precision.HIGHEST)


def _ref_convT(x, w_iohw, stride, padding):
    k = w_iohw.shape[2]
    w_hwio = jnp.transpose(jnp.flip(w_iohw, (2, 3)), (2, 3, 0, 1))
    pad = k - 1 - padding
    return jax.lax.conv_general_dilated(
        x, w_hwio, window_strides=(1, 1), padding=[(pad, pad), (pad, pad)],
        lhs_dilation=(stride, stride),
        dimension_numbers=('NHWC', 'HWIO', 'NHWC'),
        precision=jax.lax.Precision.HIGHEST)


def bottleneck_up_reference(x_nchw, raw, *, stride, has_upsample, residue=True):
    x = jnp.transpose(x_nchw, (0, 2, 3, 1)).astype(jnp.float32)
    out = jax.nn.relu(_ref_bn(_ref_conv1x1(x, raw['w1']), raw['bn1']))
    out = jax.nn.relu(_ref_bn(_ref_convT(out, raw['w2'], stride, 1), raw['bn2']))
    out = _ref_bn(_ref_conv1x1(out, raw['w3']), raw['bn3'])
    res = x
    if has_upsample:
        res = _ref_bn(_ref_convT(x, raw['wu'], stride, 0), raw['bnu'])
    if residue:
        out = out + res
    return jnp.transpose(jax.nn.relu(out), (0, 3, 1, 2))


# ---------------------------------------------------------------------------
if __name__ == "__main__":
    key = jax.random.PRNGKey(0)
    kp1, kp2, kx = jax.random.split(key, 3)
    N, CIN, CMID, COUT, H, W = 2, 64, 32, 64, 16, 16     # outplanes = midplanes * expansion(2)
    x = jax.random.normal(kx, (N, CIN, H, W), jnp.float32)

    # stride-2 block with an upsample branch (ConvTranspose2d 1x1 stride 2 + BN)
    raw2 = init_raw_params(kp1, CIN, CMID, COUT, has_upsample=True)
    p2 = prepare_params(raw2, stride=2, has_upsample=True)
    fwd2 = jax.jit(partial(bottleneck_up_forward, stride=2, has_upsample=True))
    out2 = jax.block_until_ready(fwd2(x, p2))
    assert out2.shape == (N, COUT, 2 * H - 1, 2 * W - 1), out2.shape
    assert bool(jnp.all(jnp.isfinite(out2)))
    ref2 = bottleneck_up_reference(x, raw2, stride=2, has_upsample=True)
    err2 = float(jnp.max(jnp.abs(out2 - ref2)))
    assert err2 <= 5e-2 * float(jnp.max(jnp.abs(ref2))) + 1e-2, ("stride2 mismatch", err2)

    # stride-1 block, identity residual (default constructor configuration)
    raw1 = init_raw_params(kp2, CIN, CMID, COUT, has_upsample=False)
    p1 = prepare_params(raw1, stride=1, has_upsample=False)
    fwd1 = jax.jit(partial(bottleneck_up_forward, stride=1, has_upsample=False))
    out1 = jax.block_until_ready(fwd1(x, p1))
    assert out1.shape == (N, COUT, H, W), out1.shape
    assert bool(jnp.all(jnp.isfinite(out1)))
    ref1 = bottleneck_up_reference(x, raw1, stride=1, has_upsample=False)
    err1 = float(jnp.max(jnp.abs(out1 - ref1)))
    assert err1 <= 5e-2 * float(jnp.max(jnp.abs(ref1))) + 1e-2, ("stride1 mismatch", err1)

    print("KERNEL_OK")
</pallas_src>

<mosaic_0001>
module attributes {stable_mosaic.version = 11 : i64} {
  func.func @_mm_bias_kernel(%arg0: i32, %arg1: memref<256x64xbf16, #tpu.memory_space<vmem>>, %arg2: memref<64x32xbf16, #tpu.memory_space<vmem>>, %arg3: memref<1x32xf32, #tpu.memory_space<vmem>>, %arg4: memref<256x32xbf16, #tpu.memory_space<vmem>>) attributes {dimension_semantics = [#tpu.dimension_semantics<parallel>], iteration_bounds = array<i64: 2>, scalar_prefetch = 0 : i64, scratch_operands = 0 : i64, tpu.core_type = #tpu.core_type<tc>, window_params = [{transform_indices = @transform_0, window_bounds = array<i64: 256, 64>}, {pipeline_mode = #tpu.pipeline_mode<synchronous>, transform_indices = @transform_1, window_bounds = array<i64: 64, 32>}, {pipeline_mode = #tpu.pipeline_mode<synchronous>, transform_indices = @transform_2, window_bounds = array<i64: 1, 32>}, {transform_indices = @transform_3, window_bounds = array<i64: 256, 32>}]} {
    %c0 = arith.constant 0 : index
    %c0_0 = arith.constant 0 : index
    %0 = vector.load %arg1[%c0, %c0_0] : memref<256x64xbf16, #tpu.memory_space<vmem>>, vector<256x64xbf16>
    %c0_1 = arith.constant 0 : index
    %c0_2 = arith.constant 0 : index
    %1 = vector.load %arg2[%c0_1, %c0_2] : memref<64x32xbf16, #tpu.memory_space<vmem>>, vector<64x32xbf16>
    %cst = arith.constant dense<0.000000e+00> : vector<256x32xf32>
    %2 = tpu.matmul %0, %1, %cst {dimension_numbers = #tpu.dot_dimension_numbers<[1], [0], [0], [1], [0, 0, 1, 1], [], []>} : vector<256x64xbf16>, vector<64x32xbf16>, vector<256x32xf32> -> vector<256x32xf32>
    %c0_3 = arith.constant 0 : index
    %c0_4 = arith.constant 0 : index
    %3 = vector.load %arg3[%c0_3, %c0_4] : memref<1x32xf32, #tpu.memory_space<vmem>>, vector<1x32xf32>
    %4 = vector.broadcast %3 : vector<1x32xf32> to vector<256x32xf32>
    %5 = arith.addf %2, %4 : vector<256x32xf32>
    %cst_5 = arith.constant 0.000000e+00 : f32
    %6 = vector.broadcast %cst_5 : f32 to vector<256x32xf32>
    %7 = arith.maximumf %5, %6 : vector<256x32xf32>
    %8 = arith.truncf %7 : vector<256x32xf32> to vector<256x32xbf16>
    %c0_6 = arith.constant 0 : index
    %c0_7 = arith.constant 0 : index
    %9 = vector.load %arg4[%c0_6, %c0_7] : memref<256x32xbf16, #tpu.memory_space<vmem>>, vector<256x32xbf16>
    tpu.vector_store %arg4[%c0_6, %c0_7], %8 {strides = array<i32>} : memref<256x32xbf16, #tpu.memory_space<vmem>>, vector<256x32xbf16>,
    return
  }
  func.func @transform_0(%arg0: i32) -> (i32, i32) {
    %c0_i32 = arith.constant 0 : i32
    %c0_i32_0 = arith.constant 0 : i32
    return %arg0, %c0_i32 : i32, i32
  }
  func.func @transform_1(%arg0: i32) -> (i32, i32) {
    %c0_i32 = arith.constant 0 : i32
    %c0_i32_0 = arith.constant 0 : i32
    %c0_i32_1 = arith.constant 0 : i32
    return %c0_i32, %c0_i32_0 : i32, i32
  }
  func.func @transform_2(%arg0: i32) -> (i32, i32) {
    %c0_i32 = arith.constant 0 : i32
    %c0_i32_0 = arith.constant 0 : i32
    %c0_i32_1 = arith.constant 0 : i32
    return %c0_i32, %c0_i32_0 : i32, i32
  }
  func.func @transform_3(%arg0: i32) -> (i32, i32) {
    %c0_i32 = arith.constant 0 : i32
    %c0_i32_0 = arith.constant 0 : i32
    return %arg0, %c0_i32 : i32, i32
  }
}

module attributes {stable_mosaic.version = 11 : i64} {
  func.func @_mm_bias_kernel(%arg0: i32, %arg1: memref<256x64xbf16, #tpu.memory_space<vmem>>, %arg2: memref<64x64xbf16, #tpu.memory_space<vmem>>, %arg3: memref<1x64xf32, #tpu.memory_space<vmem>>, %arg4: memref<256x64xf32, #tpu.memory_space<vmem>>) attributes {dimension_semantics = [#tpu.dimension_semantics<parallel>], iteration_bounds = array<i64: 2>, scalar_prefetch = 0 : i64, scratch_operands = 0 : i64, tpu.core_type = #tpu.core_type<tc>, window_params = [{transform_indices = @transform_0, window_bounds = array<i64: 256, 64>}, {pipeline_mode = #tpu.pipeline_mode<synchronous>, transform_indices = @transform_1, window_bounds = array<i64: 64, 64>}, {pipeline_mode = #tpu.pipeline_mode<synchronous>, transform_indices = @transform_2, window_bounds = array<i64: 1, 64>}, {transform_indices = @transform_3, window_bounds = array<i64: 256, 64>}]} {
    %c0 = arith.constant 0 : index
    %c0_0 = arith.constant 0 : index
    %0 = vector.load %arg1[%c0, %c0_0] : memref<256x64xbf16, #tpu.memory_space<vmem>>, vector<256x64xbf16>
    %c0_1 = arith.constant 0 : index
    %c0_2 = arith.constant 0 : index
    %1 = vector.load %arg2[%c0_1, %c0_2] : memref<64x64xbf16, #tpu.memory_space<vmem>>, vector<64x64xbf16>
    %cst = arith.constant dense<0.000000e+00> : vector<256x64xf32>
    %2 = tpu.matmul %0, %1, %cst {dimension_numbers = #tpu.dot_dimension_numbers<[1], [0], [0], [1], [0, 0, 1, 1], [], []>} : vector<256x64xbf16>, vector<64x64xbf16>, vector<256x64xf32> -> vector<256x64xf32>
    %c0_3 = arith.constant 0 : index
    %c0_4 = arith.constant 0 : index
    %3 = vector.load %arg3[%c0_3, %c0_4] : memref<1x64xf32, #tpu.memory_space<vmem>>, vector<1x64xf32>
    %4 = vector.broadcast %3 : vector<1x64xf32> to vector<256x64xf32>
    %5 = arith.addf %2, %4 : vector<256x64xf32>
    %c0_5 = arith.constant 0 : index
    %c0_6 = arith.constant 0 : index
    %6 = vector.load %arg4[%c0_5, %c0_6] : memref<256x64xf32, #tpu.memory_space<vmem>>, vector<256x64xf32>
    tpu.vector_store %arg4[%c0_5, %c0_6], %5 {strides = array<i32>} : memref<256x64xf32, #tpu.memory_space<vmem>>, vector<256x64xf32>,
    return
  }
  func.func @transform_0(%arg0: i32) -> (i32, i32) {
    %c0_i32 = arith.constant 0 : i32
    %c0_i32_0 = arith.constant 0 : i32
    return %arg0, %c0_i32 : i32, i32
  }
  func.func @transform_1(%arg0: i32) -> (i32, i32) {
    %c0_i32 = arith.constant 0 : i32
    %c0_i32_0 = arith.constant 0 : i32
    %c0_i32_1 = arith.constant 0 : i32
    return %c0_i32, %c0_i32_0 : i32, i32
  }
  func.func @transform_2(%arg0: i32) -> (i32, i32) {
    %c0_i32 = arith.constant 0 : i32
    %c0_i32_0 = arith.constant 0 : i32
    %c0_i32_1 = arith.constant 0 : i32
    return %c0_i32, %c0_i32_0 : i32, i32
  }
  func.func @transform_3(%arg0: i32) -> (i32, i32) {
    %c0_i32 = arith.constant 0 : i32
    %c0_i32_0 = arith.constant 0 : i32
    return %arg0, %c0_i32 : i32, i32
  }
}

module attributes {stable_mosaic.version = 11 : i64} {
  func.func @_mm_bias_kernel(%arg0: i32, %arg1: memref<256x128xbf16, #tpu.memory_space<vmem>>, %arg2: memref<128x128xbf16, #tpu.memory_space<vmem>>, %arg3: memref<1x128xf32, #tpu.memory_space<vmem>>, %arg4: memref<256x128xbf16, #tpu.memory_space<vmem>>) attributes {dimension_semantics = [#tpu.dimension_semantics<parallel>], iteration_bounds = array<i64: 2>, scalar_prefetch = 0 : i64, scratch_operands = 0 : i64, tpu.core_type = #tpu.core_type<tc>, window_params = [{transform_indices = @transform_0, window_bounds = array<i64: 256, 128>}, {pipeline_mode = #tpu.pipeline_mode<synchronous>, transform_indices = @transform_1, window_bounds = array<i64: 128, 128>}, {pipeline_mode = #tpu.pipeline_mode<synchronous>, transform_indices = @transform_2, window_bounds = array<i64: 1, 128>}, {transform_indices = @transform_3, window_bounds = array<i64: 256, 128>}]} {
    %c0 = arith.constant 0 : index
    %c0_0 = arith.constant 0 : index
    %0 = vector.load %arg1[%c0, %c0_0] : memref<256x128xbf16, #tpu.memory_space<vmem>>, vector<256x128xbf16>
    %c0_1 = arith.constant 0 : index
    %c0_2 = arith.constant 0 : index
    %1 = vector.load %arg2[%c0_1, %c0_2] : memref<128x128xbf16, #tpu.memory_space<vmem>>, vector<128x128xbf16>
    %cst = arith.constant dense<0.000000e+00> : vector<256x128xf32>
    %2 = tpu.matmul %0, %1, %cst {dimension_numbers = #tpu.dot_dimension_numbers<[1], [0], [0], [1], [0, 0, 1, 1], [], []>} : vector<256x128xbf16>, vector<128x128xbf16>, vector<256x128xf32> -> vector<256x128xf32>
    %c0_3 = arith.constant 0 : index
    %c0_4 = arith.constant 0 : index
    %3 = vector.load %arg3[%c0_3, %c0_4] : memref<1x128xf32, #tpu.memory_space<vmem>>, vector<1x128xf32>
    %4 = vector.broadcast %3 : vector<1x128xf32> to vector<256x128xf32>
    %5 = arith.addf %2, %4 : vector<256x128xf32>
    %cst_5 = arith.constant 0.000000e+00 : f32
    %6 = vector.broadcast %cst_5 : f32 to vector<256x128xf32>
    %7 = arith.maximumf %5, %6 : vector<256x128xf32>
    %8 = arith.truncf %7 : vector<256x128xf32> to vector<256x128xbf16>
    %c0_6 = arith.constant 0 : index
    %c0_7 = arith.constant 0 : index
    %9 = vector.load %arg4[%c0_6, %c0_7] : memref<256x128xbf16, #tpu.memory_space<vmem>>, vector<256x128xbf16>
    tpu.vector_store %arg4[%c0_6, %c0_7], %8 {strides = array<i32>} : memref<256x128xbf16, #tpu.memory_space<vmem>>, vector<256x128xbf16>,
    return
  }
  func.func @transform_0(%arg0: i32) -> (i32, i32) {
    %c0_i32 = arith.constant 0 : i32
    %c0_i32_0 = arith.constant 0 : i32
    return %arg0, %c0_i32 : i32, i32
  }
  func.func @transform_1(%arg0: i32) -> (i32, i32) {
    %c0_i32 = arith.constant 0 : i32
    %c0_i32_0 = arith.constant 0 : i32
    %c0_i32_1 = arith.constant 0 : i32
    return %c0_i32, %c0_i32_0 : i32, i32
  }
  func.func @transform_2(%arg0: i32) -> (i32, i32) {
    %c0_i32 = arith.constant 0 : i32
    %c0_i32_0 = arith.constant 0 : i32
    %c0_i32_1 = arith.constant 0 : i32
    return %c0_i32, %c0_i32_0 : i32, i32
  }
  func.func @transform_3(%arg0: i32) -> (i32, i32) {
    %c0_i32 = arith.constant 0 : i32
    %c0_i32_0 = arith.constant 0 : i32
    return %arg0, %c0_i32 : i32, i32
  }
}

module attributes {stable_mosaic.version = 11 : i64} {
  func.func @_mm_bias_res_kernel(%arg0: i32, %arg1: memref<976x32xbf16, #tpu.memory_space<vmem>>, %arg2: memref<32x64xbf16, #tpu.memory_space<vmem>>, %arg3: memref<1x64xf32, #tpu.memory_space<vmem>>, %arg4: memref<976x64xf32, #tpu.memory_space<vmem>>, %arg5: memref<976x64xf32, #tpu.memory_space<vmem>>) attributes {dimension_semantics = [#tpu.dimension_semantics<parallel>], iteration_bounds = array<i64: 2>, scalar_prefetch = 0 : i64, scratch_operands = 0 : i64, tpu.core_type = #tpu.core_type<tc>, window_params = [{transform_indices = @transform_0, window_bounds = array<i64: 976, 32>}, {pipeline_mode = #tpu.pipeline_mode<synchronous>, transform_indices = @transform_1, window_bounds = array<i64: 32, 64>}, {pipeline_mode = #tpu.pipeline_mode<synchronous>, transform_indices = @transform_2, window_bounds = array<i64: 1, 64>}, {transform_indices = @transform_3, window_bounds = array<i64: 976, 64>}, {transform_indices = @transform_4, window_bounds = array<i64: 976, 64>}]} {
    %c0 = arith.constant 0 : index
    %c0_0 = arith.constant 0 : index
    %0 = vector.load %arg1[%c0, %c0_0] : memref<976x32xbf16, #tpu.memory_space<vmem>>, vector<976x32xbf16>
    %c0_1 = arith.constant 0 : index
    %c0_2 = arith.constant 0 : index
    %1 = vector.load %arg2[%c0_1, %c0_2] : memref<32x64xbf16, #tpu.memory_space<vmem>>, vector<32x64xbf16>
    %cst = arith.constant dense<0.000000e+00> : vector<976x64xf32>
    %2 = tpu.matmul %0, %1, %cst {dimension_numbers = #tpu.dot_dimension_numbers<[1], [0], [0], [1], [0, 0, 1, 1], [], []>} : vector<976x32xbf16>, vector<32x64xbf16>, vector<976x64xf32> -> vector<976x64xf32>
    %c0_3 = arith.constant 0 : index
    %c0_4 = arith.constant 0 : index
    %3 = vector.load %arg3[%c0_3, %c0_4] : memref<1x64xf32, #tpu.memory_space<vmem>>, vector<1x64xf32>
    %4 = vector.broadcast %3 : vector<1x64xf32> to vector<976x64xf32>
    %5 = arith.addf %2, %4 : vector<976x64xf32>
    %c0_5 = arith.constant 0 : index
    %c0_6 = arith.constant 0 : index
    %6 = vector.load %arg4[%c0_5, %c0_6] : memref<976x64xf32, #tpu.memory_space<vmem>>, vector<976x64xf32>
    %7 = arith.addf %5, %6 : vector<976x64xf32>
    %cst_7 = arith.constant 0.000000e+00 : f32
    %8 = vector.broadcast %cst_7 : f32 to vector<976x64xf32>
    %9 = arith.maximumf %7, %8 : vector<976x64xf32>
    %c0_8 = arith.constant 0 : index
    %c0_9 = arith.constant 0 : index
    %10 = vector.load %arg5[%c0_8, %c0_9] : memref<976x64xf32, #tpu.memory_space<vmem>>, vector<976x64xf32>
    tpu.vector_store %arg5[%c0_8, %c0_9], %9 {strides = array<i32>} : memref<976x64xf32, #tpu.memory_space<vmem>>, vector<976x64xf32>,
    return
  }
  func.func @transform_0(%arg0: i32) -> (i32, i32) {
    %c0_i32 = arith.constant 0 : i32
    %c0_i32_0 = arith.constant 0 : i32
    return %arg0, %c0_i32 : i32, i32
  }
  func.func @transform_1(%arg0: i32) -> (i32, i32) {
    %c0_i32 = arith.constant 0 : i32
    %c0_i32_0 = arith.constant 0 : i32
    %c0_i32_1 = arith.constant 0 : i32
    return %c0_i32, %c0_i32_0 : i32, i32
  }
  func.func @transform_2(%arg0: i32) -> (i32, i32) {
    %c0_i32 = arith.constant 0 : i32
    %c0_i32_0 = arith.constant 0 : i32
    %c0_i32_1 = arith.constant 0 : i32
    return %c0_i32, %c0_i32_0 : i32, i32
  }
  func.func @transform_3(%arg0: i32) -> (i32, i32) {
    %c0_i32 = arith.constant 0 : i32
    %c0_i32_0 = arith.constant 0 : i32
    return %arg0, %c0_i32 : i32, i32
  }
  func.func @transform_4(%arg0: i32) -> (i32, i32) {
    %c0_i32 = arith.constant 0 : i32
    %c0_i32_0 = arith.constant 0 : i32
    return %arg0, %c0_i32 : i32, i32
  }
}

</mosaic_0001>

<llo_original>
// kernel: bottleneck_up_forward.4
$region0: #{bottleneck_up_forward.4}
  #allocation0 [shape = 'u32[]', space=smem, size = 0x4, offset = 0x4, fixed_abs, tag = 'smem constant byte address 0x4 - core index']
  #allocation1 [shape = 'u32[144,128]{1,0:T(1,128)}', space=vmem, size = 0x12000, scoped, tag = 'internal scratch']
  %s0 = inlined_call_operand.vmem [shape: bf16[512,64], index: 0, kind: input, shape index: {}]
  %s1 = inlined_call_operand.vmem [shape: bf16[64,32], index: 1, kind: input, shape index: {}]
  %s2 = inlined_call_operand.vmem [shape: f32[1,32], index: 2, kind: input, shape index: {}]
  %s3 = inlined_call_operand.vmem [shape: bf16[512,32], index: 3, kind: output, shape index: {}]
  %s4 = sld [smem:[#allocation0]]
  $region45: #{bottleneck_up_forward.4} parent=0
    _
  %s6 = ssub.s32 1, %s4
  %s7 = scalar_select 0, %s6, %s4
  loop: start=0, step=1, limit=4
  $region2: #{bottleneck_up_forward.4} parent=0 // loop_pre_header
    _
  $region3: #{bottleneck_up_forward.4} parent=0 // loop_header
    %s9 = sphi 0, %s13
    %p10 = scmp.ge.s32.totalorder %s9, 4
    %s19 = sphi 0, %s21
    %s22 = sphi 0, %s19
    %s23 = sphi 0, %s22
    %s39 = sphi 0, %s23
    %s43 = sphi 0, %s43
    %s45 = sphi 0, %s43
    %s46 = sphi 0, %s45
    %s60 = sphi 0, %s46
    %s64 = sphi 0, %s64
    %s66 = sphi 0, %s64
    %s67 = sphi 0, %s66
    %s81 = sphi 0, %s67
    %s87 = sphi 0, %s89
    %s90 = sphi 0, %s87
    %s91 = sphi 0, %s90
    %s107 = sphi 0, %s91
  $region4: #{bottleneck_up_forward.4} parent=0 // loop_header_branch
    %12 = sbr.rel (%p10) target = $region8
  $region5: #{bottleneck_up_forward.4} parent=0 // loop_body
    %s14 = ssub.s32 %s9, 1
    %s15 = ssub.s32 %s9, 2
    %s16 = sadd.s32 %s9, 1
    %s17 = ssub.s32 %s9, %s16
    %p18 = scmp.eq.s32.totalorder %s17, 0
    %s20 = sadd.s32 %s19, 1
    %s21 = scalar_select %p18, %s19, %s20
    %p24 = pneg %p18
    %p25 = scmp.eq.s32.totalorder %s9, 1
    %p26 = por %p24, %p25
    %p27 = scmp.ne.s32.totalorder %s19, %s22
    %p28 = scmp.eq.s32.totalorder %s9, 0
    %p29 = por %p27, %p28
    %p30 = scmp.ne.s32.totalorder %s19, %s22
    %p31 = scmp.eq.s32.totalorder %s14, 1
    %p32 = por %p30, %p31
    %p33 = scmp.ne.s32.totalorder %s22, %s23
    %p34 = scmp.eq.s32.totalorder %s14, 0
    %p35 = por %p33, %p34
    %p36 = scmp.ne.s32.totalorder %s22, %s23
    %p37 = scmp.eq.s32.totalorder %s15, 1
    %p38 = por %p36, %p37
    %p40 = scmp.ne.s32.totalorder %s23, %s39
    %p41 = scmp.eq.s32.totalorder %s15, 0
    %p42 = por %p40, %p41
    %s44 = sadd.s32 %s43, 1
    %p47 = scmp.eq.s32.totalorder %s9, 1
    %p48 = scmp.ne.s32.totalorder %s43, %s45
    %p49 = scmp.eq.s32.totalorder %s9, 0
    %p50 = por %p48, %p49
    %p51 = scmp.ne.s32.totalorder %s43, %s45
    %p52 = scmp.eq.s32.totalorder %s14, 1
    %p53 = por %p51, %p52
    %p54 = scmp.ne.s32.totalorder %s45, %s46
    %p55 = scmp.eq.s32.totalorder %s14, 0
    %p56 = por %p54, %p55
    %p57 = scmp.ne.s32.totalorder %s45, %s46
    %p58 = scmp.eq.s32.totalorder %s15, 1
    %p59 = por %p57, %p58
    %p61 = scmp.ne.s32.totalorder %s46, %s60
    %p62 = scmp.eq.s32.totalorder %s15, 0
    %p63 = por %p61, %p62
    %s65 = sadd.s32 %s64, 1
    %p68 = scmp.eq.s32.totalorder %s9, 1
    %p69 = scmp.ne.s32.totalorder %s64, %s66
    %p70 = scmp.eq.s32.totalorder %s9, 0
    %p71 = por %p69, %p70
    %p72 = scmp.ne.s32.totalorder %s64, %s66
    %p73 = scmp.eq.s32.totalorder %s14, 1
    %p74 = por %p72, %p73
    %p75 = scmp.ne.s32.totalorder %s66, %s67
    %p76 = scmp.eq.s32.totalorder %s14, 0
    %p77 = por %p75, %p76
    %p78 = scmp.ne.s32.totalorder %s66, %s67
    %p79 = scmp.eq.s32.totalorder %s15, 1
    %p80 = por %p78, %p79
    %p82 = scmp.ne.s32.totalorder %s67, %s81
    %p83 = scmp.eq.s32.totalorder %s15, 0
    %p84 = por %p82, %p83
    %s85 = ssub.s32 %s9, %s16
    %p86 = scmp.eq.s32.totalorder %s85, 0
    %s88 = sadd.s32 %s87, 1
    %s89 = scalar_select %p86, %s87, %s88
    %p92 = pneg %p86
    %p93 = scmp.eq.s32.totalorder %s9, 1
    %p94 = por %p92, %p93
    %p95 = scmp.ne.s32.totalorder %s87, %s90
    %p96 = scmp.eq.s32.totalorder %s9, 0
    %p97 = por %p95, %p96
    %p98 = scmp.ne.s32.totalorder %s87, %s90
    %p99 = scmp.eq.s32.totalorder %s14, 1
    %p100 = por %p98, %p99
    %p101 = scmp.ne.s32.totalorder %s90, %s91
    %p102 = scmp.eq.s32.totalorder %s14, 0
    %p103 = por %p101, %p102
    %p104 = scmp.ne.s32.totalorder %s90, %s91
    %p105 = scmp.eq.s32.totalorder %s15, 1
    %p106 = por %p104, %p105
    %p108 = scmp.ne.s32.totalorder %s91, %s107
    %p109 = scmp.eq.s32.totalorder %s15, 0
    %p110 = por %p108, %p109
    %p111 = scmp.le.s32.totalorder 1, %s9
    %p112 = scmp.lt.s32.totalorder %s9, 3
    %p113 = pnand %p111, %p112
    %p114 = pneg %p113
    // Predicated region
    $region9: #{bottleneck_up_forward.4} parent=5 // pred_check
      _
    $region10: #{bottleneck_up_forward.4} parent=5 // pred_check_branch
      %116 = sbr.rel (%p113) target = $region12
    $region11: #{bottleneck_up_forward.4} parent=5 // pred_region
      %s117 = ssub.s32 %s9, 1
      // Predicated region
      $region13: #{bottleneck_up_forward.4} parent=11 // pred_check
        %p118 = pneg %p56
      $region14: #{bottleneck_up_forward.4} parent=11 // pred_check_branch
        %120 = sbr.rel (%p118) target = $region16
      $region15: #{bottleneck_up_forward.4} parent=11 // pred_region
        _
      $region16: #{bottleneck_up_forward.4} parent=11 // pred_fallthru
        _
      // Predicated region
      $region17: #{bottleneck_up_forward.4} parent=11 // pred_check
        %p121 = pneg %p77
      $region18: #{bottleneck_up_forward.4} parent=11 // pred_check_branch
        %123 = sbr.rel (%p121) target = $region20
      $region19: #{bottleneck_up_forward.4} parent=11 // pred_region
        _
      $region20: #{bottleneck_up_forward.4} parent=11 // pred_fallthru
        _
    $region12: #{bottleneck_up_forward.4} parent=5 // pred_fallthru
      _
    %p124 = scmp.lt.s32.totalorder %s9, 2
    // Predicated region
    $region21: #{bottleneck_up_forward.4} parent=5 // pred_check
      %p125 = pneg %p124
    $region22: #{bottleneck_up_forward.4} parent=5 // pred_check_branch
      %127 = sbr.rel (%p125) target = $region24
    $region23: #{bottleneck_up_forward.4} parent=5 // pred_region
      // Predicated region
      $region25: #{bottleneck_up_forward.4} parent=23 // pred_check
        %p128 = pneg %p29
      $region26: #{bottleneck_up_forward.4} parent=23 // pred_check_branch
        %130 = sbr.rel (%p128) target = $region28
      $region27: #{bottleneck_up_forward.4} parent=23 // pred_region
        %s131 = smul.u32 32, %s9
        %p132 = scmp.lt.s32.totalorder %s131, 63
        %s133 = scalar_select %p132, %s131, 63
        %s134 = smul.addr %s133, 4
        %s135 = scalar_lea.vmem %s0, %s134
        %s136 = smul.u32 32, %s9
      $region28: #{bottleneck_up_forward.4} parent=23 // pred_fallthru
        _
    $region24: #{bottleneck_up_forward.4} parent=5 // pred_fallthru
      _
    %p137 = scmp.le.s32.totalorder 1, %s9
    %p138 = scmp.lt.s32.totalorder %s9, 3
    %p139 = pnand %p137, %p138
    %p140 = pneg %p139
    // Predicated region
    $region29: #{bottleneck_up_forward.4} parent=5 // pred_check
      _
    $region30: #{bottleneck_up_forward.4} parent=5 // pred_check_branch
      %142 = sbr.rel (%p139) target = $region32
    $region31: #{bottleneck_up_forward.4} parent=5 // pred_region
      %s143 = ssub.s32 %s9, 1
      %s144 = smul.u32 32, %s14
      %p145 = scmp.lt.s32.totalorder %s144, 63
      %s146 = scalar_select %p145, %s144, 63
      %s147 = smul.addr %s146, 4
      %s148 = scalar_lea.vmem %s0, %s147
      %p149 = pneg %p35
      %p150 = pneg %p32
      %p151 = pneg %p56
      %p152 = pneg %p53
      %p153 = pneg %p77
      %p154 = pneg %p74
      %p155 = pneg %p103
      %p156 = pneg %p100
      %s157 = smul.u32 32, %s14
      %p158 = scmp.lt.s32.totalorder %s157, 63
      %s159 = scalar_select %p158, %s157, 63
      %s160 = smul.addr %s159, 4
      %s161 = scalar_lea.vmem %s3, %s160
      %s162 = smul.u32 32, %s14
      %p163 = scmp.lt.s32.totalorder %s162, 63
      %s164 = scalar_select %p163, %s162, 63
      %s165 = smul.addr %s164, 4
      %s166 = scalar_lea.vmem %s0, %s165
      %s167 = smul.u32 32, %s14
      %s168 = smul.u32 32, %s14
      %p169 = scmp.lt.s32.totalorder %s168, 63
      %s170 = scalar_select %p169, %s168, 63
      %s171 = smul.addr %s170, 4
      %s172 = scalar_lea.vmem %s3, %s171
      %s173 = smul.u32 32, %s14
      %v175 = vld [vmem:[%s166] sm:$0xf]
      %v176 = vld [vmem:[%s166 + $0x4] sm:$0xf]
      %v177 = vld [vmem:[%s166 + $0x8] sm:$0xf]
      %v178 = vld [vmem:[%s166 + $0xc] sm:$0xf]
      %v179 = vld [vmem:[%s166 + $0x10] sm:$0xf]
      %v180 = vld [vmem:[%s166 + $0x14] sm:$0xf]
      %v181 = vld [vmem:[%s166 + $0x18] sm:$0xf]
      %v182 = vld [vmem:[%s166 + $0x1c] sm:$0xf]
      %v183 = vld [vmem:[%s166 + $0x20] sm:$0xf]
      %v184 = vld [vmem:[%s166 + $0x24] sm:$0xf]
      %v185 = vld [vmem:[%s166 + $0x28] sm:$0xf]
      %v186 = vld [vmem:[%s166 + $0x2c] sm:$0xf]
      %v187 = vld [vmem:[%s166 + $0x30] sm:$0xf]
      %v188 = vld [vmem:[%s166 + $0x34] sm:$0xf]
      %v189 = vld [vmem:[%s166 + $0x38] sm:$0xf]
      %v190 = vld [vmem:[%s166 + $0x3c] sm:$0xf]
      %v191 = vld [vmem:[%s166 + $0x40] sm:$0xf]
      %v192 = vld [vmem:[%s166 + $0x44] sm:$0xf]
      %v193 = vld [vmem:[%s166 + $0x48] sm:$0xf]
      %v194 = vld [vmem:[%s166 + $0x4c] sm:$0xf]
      %v195 = vld [vmem:[%s166 + $0x50] sm:$0xf]
      %v196 = vld [vmem:[%s166 + $0x54] sm:$0xf]
      %v197 = vld [vmem:[%s166 + $0x58] sm:$0xf]
      %v198 = vld [vmem:[%s166 + $0x5c] sm:$0xf]
      %v199 = vld [vmem:[%s166 + $0x60] sm:$0xf]
      %v200 = vld [vmem:[%s166 + $0x64] sm:$0xf]
      %v201 = vld [vmem:[%s166 + $0x68] sm:$0xf]
      %v202 = vld [vmem:[%s166 + $0x6c] sm:$0xf]
      %v203 = vld [vmem:[%s166 + $0x70] sm:$0xf]
      %v204 = vld [vmem:[%s166 + $0x74] sm:$0xf]
      %v205 = vld [vmem:[%s166 + $0x78] sm:$0xf]
      %v206 = vld [vmem:[%s166 + $0x7c] sm:$0xf]
      %v207 = vld [vmem:[%s1] sm:$0xf]
      %v208 = vld [vmem:[%s1 + $0x4] sm:$0xf]
      %v209 = vld [vmem:[%s1 + $0x8] sm:$0xf]
      %v210 = vld [vmem:[%s1 + $0xc] sm:$0xf]
      %v211 = vld [vmem:[%s1 + $0x10] sm:$0xf]
      %v212 = vld [vmem:[%s1 + $0x14] sm:$0xf]
      %v213 = vld [vmem:[%s1 + $0x18] sm:$0xf]
      %v214 = vld [vmem:[%s1 + $0x1c] sm:$0xf]
      %v215 = vld [vmem:[%s2] sm:$0x1]
      %v217 = vlaneseq
      %v218 = vshrl.u32 %v217, 7
      %v219 = vsub.s32 0, %v218
      %v220 = vrot.slane %v215, %v219
      %v254 = vunpack.c.l.b16 %v175
      %v255 = vunpack.c.l.b16 %v176
      %v256 = vunpack.c.l.b16 %v177
      %v257 = vunpack.c.l.b16 %v178
      %v258 = vunpack.c.l.b16 %v179
      %v259 = vunpack.c.l.b16 %v180
      %v260 = vunpack.c.l.b16 %v181
      %v261 = vunpack.c.l.b16 %v182
      %v262 = vunpack.c.l.b16 %v183
      %v263 = vunpack.c.l.b16 %v184
      %v264 = vunpack.c.l.b16 %v185
      %v265 = vunpack.c.l.b16 %v186
      %v266 = vunpack.c.l.b16 %v187
      %v267 = vunpack.c.l.b16 %v188
      %v268 = vunpack.c.l.b16 %v189
      %v269 = vunpack.c.l.b16 %v190
      %v270 = vunpack.c.l.b16 %v191
      %v271 = vunpack.c.l.b16 %v192
      %v272 = vunpack.c.l.b16 %v193
      %v273 = vunpack.c.l.b16 %v194
      %v274 = vunpack.c.l.b16 %v195
      %v275 = vunpack.c.l.b16 %v196
      %v276 = vunpack.c.l.b16 %v197
      %v277 = vunpack.c.l.b16 %v198
      %v278 = vunpack.c.l.b16 %v199
      %v279 = vunpack.c.l.b16 %v200
      %v280 = vunpack.c.l.b16 %v201
      %v281 = vunpack.c.l.b16 %v202
      %v282 = vunpack.c.l.b16 %v203
      %v283 = vunpack.c.l.b16 %v204
      %v284 = vunpack.c.l.b16 %v205
      %v285 = vunpack.c.l.b16 %v206
      %v286 = vpack.c.b16 %v255, %v254
      %v287 = vpack.c.b16 %v257, %v256
      %v288 = vpack.c.b16 %v259, %v258
      %v289 = vpack.c.b16 %v261, %v260
      %v290 = vpack.c.b16 %v263, %v262
      %v291 = vpack.c.b16 %v265, %v264
      %v292 = vpack.c.b16 %v267, %v266
      %v293 = vpack.c.b16 %v269, %v268
      %v294 = vpack.c.b16 %v271, %v270
      %v295 = vpack.c.b16 %v273, %v272
      %v296 = vpack.c.b16 %v275, %v274
      %v297 = vpack.c.b16 %v277, %v276
      %v298 = vpack.c.b16 %v279, %v278
      %v299 = vpack.c.b16 %v281, %v280
      %v300 = vpack.c.b16 %v283, %v282
      %v301 = vpack.c.b16 %v285, %v284
      %v310 = vunpack.c.l.b16 %v207
      %v311 = vunpack.c.l.b16 %v208
      %v312 = vunpack.c.l.b16 %v209
      %v313 = vunpack.c.l.b16 %v210
      %v314 = vunpack.c.l.b16 %v211
      %v315 = vunpack.c.l.b16 %v212
      %v316 = vunpack.c.l.b16 %v213
      %v317 = vunpack.c.l.b16 %v214
      %v318 = vpack.c.b16 %v311, %v310
      %v319 = vpack.c.b16 %v313, %v312
      %v320 = vpack.c.b16 %v315, %v314
      %v321 = vpack.c.b16 %v317, %v316
      %vm326 = vcmask 523264
      %v328 = vsel %vm326, %v286, 0
      %v331 = vsel %vm326, %v287, 0
      %v334 = vsel %vm326, %v288, 0
      %v337 = vsel %vm326, %v289, 0
      %v340 = vsel %vm326, %v290, 0
      %v343 = vsel %vm326, %v291, 0
      %v346 = vsel %vm326, %v292, 0
      %v349 = vsel %vm326, %v293, 0
      %v352 = vsel %vm326, %v294, 0
      %v355 = vsel %vm326, %v295, 0
      %v358 = vsel %vm326, %v296, 0
      %v361 = vsel %vm326, %v297, 0
      %v364 = vsel %vm326, %v298, 0
      %v367 = vsel %vm326, %v299, 0
      %v370 = vsel %vm326, %v300, 0
      %v373 = vsel %vm326, %v301, 0
      %375 = vmatprep.subr.bf16.mxu0 0
      %376 = vmatpush1.bf16.msra.mxu0 0
      %377 = vmatprep.subr.bf16.mxu0 0
      %378 = vmatpush1.bf16.msra.mxu0 0
      %379 = vmatprep.subr.bf16.mxu0 0
      %380 = vmatpush1.bf16.msra.mxu0 0
      %381 = vmatprep.subr.bf16.mxu0 0
      %382 = vmatpush1.bf16.msra.mxu0 0
      %383 = vmatprep.subr.bf16.mxu0 0
      %384 = vmatpush1.bf16.msra.mxu0 %v321
      %385 = vmatprep.subr.bf16.mxu0 0
      %386 = vmatpush1.bf16.msra.mxu0 %v320
      %387 = vmatprep.subr.bf16.mxu0 0
      %388 = vmatpush1.bf16.msra.mxu0 %v319
      %389 = vmatprep.subr.bf16.mxu0 0
      %390 = vmatpush1.bf16.msra.mxu0 %v318
      %391 = vmatprep.subr.bf16.mxu0 0
      %392 = vmatpush2.bf16.msra.mxu0 0
      %393 = vmatprep.subr.bf16.mxu0 0
      %394 = vmatpush2.bf16.msra.mxu0 0
      %395 = vmatprep.subr.bf16.mxu0 0
      %396 = vmatpush2.bf16.msra.mxu0 0
      %397 = vmatprep.subr.bf16.mxu0 0
      %398 = vmatpush2.bf16.msra.mxu0 0
      %399 = vmatprep.subr.bf16.mxu0 0
      %400 = vmatpush2.bf16.msra.mxu0 0
      %401 = vmatprep.subr.bf16.mxu0 0
      %402 = vmatpush2.bf16.msra.mxu0 0
      %403 = vmatprep.subr.bf16.mxu0 0
      %404 = vmatpush2.bf16.msra.mxu0 0
      %405 = vmatprep.subr.bf16.mxu0 0
      %406 = vmatpush2.bf16.msra.mxu0 0
      %407 = vmatprep.mubr.bf16.mxu0 0
      %408 = vmatmul.mubr.bf16.gmra.mxu0 %v328
      %v409 = vpop.f32.mrf.mxu0
      %v410 = vadd.f32 %v220, %v409
      %v411 = vpop.f32.mrf.mxu0
      %v412 = vpop.f32.mrf.mxu0
      %v413 = vadd.f32 %v220, %v412
      %v414 = vpop.f32.mrf.mxu0
      %415 = vmatprep.mubr.bf16.mxu0 0
      %416 = vmatmul.mubr.bf16.gmra.mxu0 %v331
      %v417 = vpop.f32.mrf.mxu0
      %v418 = vadd.f32 %v220, %v417
      %v419 = vpop.f32.mrf.mxu0
      %v420 = vpop.f32.mrf.mxu0
      %v421 = vadd.f32 %v220, %v420
      %v422 = vpop.f32.mrf.mxu0
      %423 = vmatprep.mubr.bf16.mxu0 0
      %424 = vmatmul.mubr.bf16.gmra.mxu0 %v334
      %v425 = vpop.f32.mrf.mxu0
      %v426 = vadd.f32 %v220, %v425
      %v427 = vpop.f32.mrf.mxu0
      %v428 = vpop.f32.mrf.mxu0
      %v429 = vadd.f32 %v220, %v428
      %v430 = vpop.f32.mrf.mxu0
      %431 = vmatprep.mubr.bf16.mxu0 0
      %432 = vmatmul.mubr.bf16.gmra.mxu0 %v337
      %v433 = vpop.f32.mrf.mxu0
      %v434 = vadd.f32 %v220, %v433
      %v435 = vpop.f32.mrf.mxu0
      %v436 = vpop.f32.mrf.mxu0
      %v437 = vadd.f32 %v220, %v436
      %v438 = vpop.f32.mrf.mxu0
      %439 = vmatprep.mubr.bf16.mxu0 0
      %440 = vmatmul.mubr.bf16.gmra.mxu0 %v340
      %v441 = vpop.f32.mrf.mxu0
      %v442 = vadd.f32 %v220, %v441
      %v443 = vpop.f32.mrf.mxu0
      %v444 = vpop.f32.mrf.mxu0
      %v445 = vadd.f32 %v220, %v444
      %v446 = vpop.f32.mrf.mxu0
      %447 = vmatprep.mubr.bf16.mxu0 0
      %448 = vmatmul.mubr.bf16.gmra.mxu0 %v343
      %v449 = vpop.f32.mrf.mxu0
      %v450 = vadd.f32 %v220, %v449
      %v451 = vpop.f32.mrf.mxu0
      %v452 = vpop.f32.mrf.mxu0
      %v453 = vadd.f32 %v220, %v452
      %v454 = vpop.f32.mrf.mxu0
      %455 = vmatprep.mubr.bf16.mxu0 0
      %456 = vmatmul.mubr.bf16.gmra.mxu0 %v346
      %v457 = vpop.f32.mrf.mxu0
      %v458 = vadd.f32 %v220, %v457
      %v459 = vpop.f32.mrf.mxu0
      %v460 = vpop.f32.mrf.mxu0
      %v461 = vadd.f32 %v220, %v460
      %v462 = vpop.f32.mrf.mxu0
      %463 = vmatprep.mubr.bf16.mxu0 0
      %464 = vmatmul.mubr.bf16.gmra.mxu0 %v349
      %v465 = vpop.f32.mrf.mxu0
      %v466 = vadd.f32 %v220, %v465
      %v467 = vpop.f32.mrf.mxu0
      %v468 = vpop.f32.mrf.mxu0
      %v469 = vadd.f32 %v220, %v468
      %v470 = vpop.f32.mrf.mxu0
      %471 = vmatprep.mubr.bf16.mxu0 0
      %472 = vmatmul.mubr.bf16.gmra.mxu0 %v352
      %v473 = vpop.f32.mrf.mxu0
      %v474 = vadd.f32 %v220, %v473
      %v475 = vpop.f32.mrf.mxu0
      %v476 = vpop.f32.mrf.mxu0
      %v477 = vadd.f32 %v220, %v476
      %v478 = vpop.f32.mrf.mxu0
      %479 = vmatprep.mubr.bf16.mxu0 0
      %480 = vmatmul.mubr.bf16.gmra.mxu0 %v355
      %v481 = vpop.f32.mrf.mxu0
      %v482 = vadd.f32 %v220, %v481
      %v483 = vpop.f32.mrf.mxu0
      %v484 = vpop.f32.mrf.mxu0
      %v485 = vadd.f32 %v220, %v484
      %v486 = vpop.f32.mrf.mxu0
      %487 = vmatprep.mubr.bf16.mxu0 0
      %488 = vmatmul.mubr.bf16.gmra.mxu0 %v358
      %v489 = vpop.f32.mrf.mxu0
      %v490 = vadd.f32 %v220, %v489
      %v491 = vpop.f32.mrf.mxu0
      %v492 = vpop.f32.mrf.mxu0
      %v493 = vadd.f32 %v220, %v492
      %v494 = vpop.f32.mrf.mxu0
      %495 = vmatprep.mubr.bf16.mxu0 0
      %496 = vmatmul.mubr.bf16.gmra.mxu0 %v361
      %v497 = vpop.f32.mrf.mxu0
      %v498 = vadd.f32 %v220, %v497
      %v499 = vpop.f32.mrf.mxu0
      %v500 = vpop.f32.mrf.mxu0
      %v501 = vadd.f32 %v220, %v500
      %v502 = vpop.f32.mrf.mxu0
      %503 = vmatprep.mubr.bf16.mxu0 0
      %504 = vmatmul.mubr.bf16.gmra.mxu0 %v364
      %v505 = vpop.f32.mrf.mxu0
      %v506 = vadd.f32 %v220, %v505
      %v507 = vpop.f32.mrf.mxu0
      %v508 = vpop.f32.mrf.mxu0
      %v509 = vadd.f32 %v220, %v508
      %v510 = vpop.f32.mrf.mxu0
      %511 = vmatprep.mubr.bf16.mxu0 0
      %512 = vmatmul.mubr.bf16.gmra.mxu0 %v367
      %v513 = vpop.f32.mrf.mxu0
      %v514 = vadd.f32 %v220, %v513
      %v515 = vpop.f32.mrf.mxu0
      %v516 = vpop.f32.mrf.mxu0
      %v517 = vadd.f32 %v220, %v516
      %v518 = vpop.f32.mrf.mxu0
      %519 = vmatprep.mubr.bf16.mxu0 0
      %520 = vmatmul.mubr.bf16.gmra.mxu0 %v370
      %v521 = vpop.f32.mrf.mxu0
      %v522 = vadd.f32 %v220, %v521
      %v523 = vpop.f32.mrf.mxu0
      %v524 = vpop.f32.mrf.mxu0
      %v525 = vadd.f32 %v220, %v524
      %v526 = vpop.f32.mrf.mxu0
      %527 = vmatprep.mubr.bf16.mxu0 0
      %528 = vmatmul.mubr.bf16.gmra.mxu0 %v373
      %v529 = vpop.f32.mrf.mxu0
      %v530 = vadd.f32 %v220, %v529
      %v531 = vpop.f32.mrf.mxu0
      %v532 = vpop.f32.mrf.mxu0
      %v533 = vadd.f32 %v220, %v532
      %v534 = vpop.f32.mrf.mxu0
      %535 = vdwg.mxu0
      %v536 = vmax.f32 %v410, 0.0
      %v537 = vmax.f32 %v413, 0.0
      %v538 = vmax.f32 %v418, 0.0
      %v539 = vmax.f32 %v421, 0.0
      %v540 = vmax.f32 %v426, 0.0
      %v541 = vmax.f32 %v429, 0.0
      %v542 = vmax.f32 %v434, 0.0
      %v543 = vmax.f32 %v437, 0.0
      %v544 = vmax.f32 %v442, 0.0
      %v545 = vmax.f32 %v445, 0.0
      %v546 = vmax.f32 %v450, 0.0
      %v547 = vmax.f32 %v453, 0.0
      %v548 = vmax.f32 %v458, 0.0
      %v549 = vmax.f32 %v461, 0.0
      %v550 = vmax.f32 %v466, 0.0
      %v551 = vmax.f32 %v469, 0.0
      %v552 = vmax.f32 %v474, 0.0
      %v553 = vmax.f32 %v477, 0.0
      %v554 = vmax.f32 %v482, 0.0
      %v555 = vmax.f32 %v485, 0.0
      %v556 = vmax.f32 %v490, 0.0
      %v557 = vmax.f32 %v493, 0.0
      %v558 = vmax.f32 %v498, 0.0
      %v559 = vmax.f32 %v501, 0.0
      %v560 = vmax.f32 %v506, 0.0
      %v561 = vmax.f32 %v509, 0.0
      %v562 = vmax.f32 %v514, 0.0
      %v563 = vmax.f32 %v517, 0.0
      %v564 = vmax.f32 %v522, 0.0
      %v565 = vmax.f32 %v525, 0.0
      %v566 = vmax.f32 %v530, 0.0
      %v567 = vmax.f32 %v533, 0.0
      %v568 = vpack.c.bf16 %v537, %v536
      %v569 = vpack.c.bf16 %v539, %v538
      %v570 = vpack.c.bf16 %v541, %v540
      %v571 = vpack.c.bf16 %v543, %v542
      %v572 = vpack.c.bf16 %v545, %v544
      %v573 = vpack.c.bf16 %v547, %v546
      %v574 = vpack.c.bf16 %v549, %v548
      %v575 = vpack.c.bf16 %v551, %v550
      %v576 = vpack.c.bf16 %v553, %v552
      %v577 = vpack.c.bf16 %v555, %v554
      %v578 = vpack.c.bf16 %v557, %v556
      %v579 = vpack.c.bf16 %v559, %v558
      %v580 = vpack.c.bf16 %v561, %v560
      %v581 = vpack.c.bf16 %v563, %v562
      %v582 = vpack.c.bf16 %v565, %v564
      %v583 = vpack.c.bf16 %v567, %v566
      %v600 = vunpack.c.l.b16 %v568
      %v601 = vunpack.c.h.b16 %v568
      %v602 = vunpack.c.l.b16 %v569
      %v603 = vunpack.c.h.b16 %v569
      %v604 = vunpack.c.l.b16 %v570
      %v605 = vunpack.c.h.b16 %v570
      %v606 = vunpack.c.l.b16 %v571
      %v607 = vunpack.c.h.b16 %v571
      %v608 = vunpack.c.l.b16 %v572
      %v609 = vunpack.c.h.b16 %v572
      %v610 = vunpack.c.l.b16 %v573
      %v611 = vunpack.c.h.b16 %v573
      %v612 = vunpack.c.l.b16 %v574
      %v613 = vunpack.c.h.b16 %v574
      %v614 = vunpack.c.l.b16 %v575
      %v615 = vunpack.c.h.b16 %v575
      %v616 = vunpack.c.l.b16 %v576
      %v617 = vunpack.c.h.b16 %v576
      %v618 = vunpack.c.l.b16 %v577
      %v619 = vunpack.c.h.b16 %v577
      %v620 = vunpack.c.l.b16 %v578
      %v621 = vunpack.c.h.b16 %v578
      %v622 = vunpack.c.l.b16 %v579
      %v623 = vunpack.c.h.b16 %v579
      %v624 = vunpack.c.l.b16 %v580
      %v625 = vunpack.c.h.b16 %v580
      %v626 = vunpack.c.l.b16 %v581
      %v627 = vunpack.c.h.b16 %v581
      %v628 = vunpack.c.l.b16 %v582
      %v629 = vunpack.c.h.b16 %v582
      %v630 = vunpack.c.l.b16 %v583
      %v631 = vunpack.c.h.b16 %v583
      %v632 = vpack.c.b16 %v600, %v600
      %v633 = vpack.c.b16 %v601, %v601
      %v634 = vpack.c.b16 %v602, %v602
      %v635 = vpack.c.b16 %v603, %v603
      %v636 = vpack.c.b16 %v604, %v604
      %v637 = vpack.c.b16 %v605, %v605
      %v638 = vpack.c.b16 %v606, %v606
      %v639 = vpack.c.b16 %v607, %v607
      %v640 = vpack.c.b16 %v608, %v608
      %v641 = vpack.c.b16 %v609, %v609
      %v642 = vpack.c.b16 %v610, %v610
      %v643 = vpack.c.b16 %v611, %v611
      %v644 = vpack.c.b16 %v612, %v612
      %v645 = vpack.c.b16 %v613, %v613
      %v646 = vpack.c.b16 %v614, %v614
      %v647 = vpack.c.b16 %v615, %v615
      %v648 = vpack.c.b16 %v616, %v616
      %v649 = vpack.c.b16 %v617, %v617
      %v650 = vpack.c.b16 %v618, %v618
      %v651 = vpack.c.b16 %v619, %v619
      %v652 = vpack.c.b16 %v620, %v620
      %v653 = vpack.c.b16 %v621, %v621
      %v654 = vpack.c.b16 %v622, %v622
      %v655 = vpack.c.b16 %v623, %v623
      %v656 = vpack.c.b16 %v624, %v624
      %v657 = vpack.c.b16 %v625, %v625
      %v658 = vpack.c.b16 %v626, %v626
      %v659 = vpack.c.b16 %v627, %v627
      %v660 = vpack.c.b16 %v628, %v628
      %v661 = vpack.c.b16 %v629, %v629
      %v662 = vpack.c.b16 %v630, %v630
      %v663 = vpack.c.b16 %v631, %v631
      %vm696 = vcmask 257024
      %697 = vst.msk [vmem:[%s172] sm:$0xf] %vm696, %v632
      %698 = vst.msk [vmem:[%s172 + $0x4] sm:$0xf] %vm696, %v633
      %699 = vst.msk [vmem:[%s172 + $0x8] sm:$0xf] %vm696, %v634
      %700 = vst.msk [vmem:[%s172 + $0xc] sm:$0xf] %vm696, %v635
      %701 = vst.msk [vmem:[%s172 + $0x10] sm:$0xf] %vm696, %v636
      %702 = vst.msk [vmem:[%s172 + $0x14] sm:$0xf] %vm696, %v637
      %703 = vst.msk [vmem:[%s172 + $0x18] sm:$0xf] %vm696, %v638
      %704 = vst.msk [vmem:[%s172 + $0x1c] sm:$0xf] %vm696, %v639
      %705 = vst.msk [vmem:[%s172 + $0x20] sm:$0xf] %vm696, %v640
      %706 = vst.msk [vmem:[%s172 + $0x24] sm:$0xf] %vm696, %v641
      %707 = vst.msk [vmem:[%s172 + $0x28] sm:$0xf] %vm696, %v642
      %708 = vst.msk [vmem:[%s172 + $0x2c] sm:$0xf] %vm696, %v643
      %709 = vst.msk [vmem:[%s172 + $0x30] sm:$0xf] %vm696, %v644
      %710 = vst.msk [vmem:[%s172 + $0x34] sm:$0xf] %vm696, %v645
      %711 = vst.msk [vmem:[%s172 + $0x38] sm:$0xf] %vm696, %v646
      %712 = vst.msk [vmem:[%s172 + $0x3c] sm:$0xf] %vm696, %v647
      %713 = vst.msk [vmem:[%s172 + $0x40] sm:$0xf] %vm696, %v648
      %714 = vst.msk [vmem:[%s172 + $0x44] sm:$0xf] %vm696, %v649
      %715 = vst.msk [vmem:[%s172 + $0x48] sm:$0xf] %vm696, %v650
      %716 = vst.msk [vmem:[%s172 + $0x4c] sm:$0xf] %vm696, %v651
      %717 = vst.msk [vmem:[%s172 + $0x50] sm:$0xf] %vm696, %v652
      %718 = vst.msk [vmem:[%s172 + $0x54] sm:$0xf] %vm696, %v653
      %719 = vst.msk [vmem:[%s172 + $0x58] sm:$0xf] %vm696, %v654
      %720 = vst.msk [vmem:[%s172 + $0x5c] sm:$0xf] %vm696, %v655
      %721 = vst.msk [vmem:[%s172 + $0x60] sm:$0xf] %vm696, %v656
      %722 = vst.msk [vmem:[%s172 + $0x64] sm:$0xf] %vm696, %v657
      %723 = vst.msk [vmem:[%s172 + $0x68] sm:$0xf] %vm696, %v658
      %724 = vst.msk [vmem:[%s172 + $0x6c] sm:$0xf] %vm696, %v659
      %725 = vst.msk [vmem:[%s172 + $0x70] sm:$0xf] %vm696, %v660
      %726 = vst.msk [vmem:[%s172 + $0x74] sm:$0xf] %vm696, %v661
      %727 = vst.msk [vmem:[%s172 + $0x78] sm:$0xf] %vm696, %v662
      %728 = vst.msk [vmem:[%s172 + $0x7c] sm:$0xf] %vm696, %v663
      %s729 = smul.u32 32, %s14
      %p730 = scmp.lt.s32.totalorder %s729, 63
      %s731 = scalar_select %p730, %s729, 63
      %s732 = smul.addr %s731, 4
      %s733 = scalar_lea.vmem %s3, %s732
      // Predicated region
      $region33: #{bottleneck_up_forward.4} parent=31 // pred_check
        %p734 = pneg %p100
      $region34: #{bottleneck_up_forward.4} parent=31 // pred_check_branch
        %736 = sbr.rel (%p734) target = $region36
      $region35: #{bottleneck_up_forward.4} parent=31 // pred_region
        %s737 = smul.u32 32, %s14
      $region36: #{bottleneck_up_forward.4} parent=31 // pred_fallthru
        _
    $region32: #{bottleneck_up_forward.4} parent=5 // pred_fallthru
      _
    %p738 = scmp.le.s32.totalorder 2, %s9
    // Predicated region
    $region37: #{bottleneck_up_forward.4} parent=5 // pred_check
      %p739 = pneg %p738
    $region38: #{bottleneck_up_forward.4} parent=5 // pred_check_branch
      %741 = sbr.rel (%p739) target = $region40
    $region39: #{bottleneck_up_forward.4} parent=5 // pred_region
      %s742 = ssub.s32 %s9, 2
      // Predicated region
      $region41: #{bottleneck_up_forward.4} parent=39 // pred_check
        %p743 = pneg %p106
      $region42: #{bottleneck_up_forward.4} parent=39 // pred_check_branch
        %745 = sbr.rel (%p743) target = $region44
      $region43: #{bottleneck_up_forward.4} parent=39 // pred_region
        %s746 = smul.u32 32, %s15
        %p747 = scmp.lt.s32.totalorder %s746, 63
        %s748 = scalar_select %p747, %s746, 63
        %s749 = smul.addr %s748, 4
        %s750 = scalar_lea.vmem %s3, %s749
      $region44: #{bottleneck_up_forward.4} parent=39 // pred_fallthru
        _
    $region40: #{bottleneck_up_forward.4} parent=5 // pred_fallthru
      _
  $region6: #{bottleneck_up_forward.4} parent=0 // loop_footer
    %s13 = sadd.s32 1, %s9
  $region7: #{bottleneck_up_forward.4} parent=0 // loop_footer_branch
    %8 = sbr.rel target = $region3
  $region8: #{bottleneck_up_forward.4} parent=0 // loop_exit
    _

// kernel: bottleneck_up_forward.6
$region0: #{bottleneck_up_forward.6}
  #allocation0 [shape = 'u32[]', space=smem, size = 0x4, offset = 0x4, fixed_abs, tag = 'smem constant byte address 0x4 - core index']
  #allocation1 [shape = 'u32[144,128]{1,0:T(1,128)}', space=vmem, size = 0x12000, scoped, tag = 'internal scratch']
  %s0 = inlined_call_operand.vmem [shape: bf16[512,64], index: 0, kind: input, shape index: {}]
  %s1 = inlined_call_operand.vmem [shape: bf16[64,64], index: 1, kind: input, shape index: {}]
  %s2 = inlined_call_operand.vmem [shape: f32[1,64], index: 2, kind: input, shape index: {}]
  %s3 = inlined_call_operand.vmem [shape: f32[512,64], index: 3, kind: output, shape index: {}]
  %s4 = sld [smem:[#allocation0]]
  $region45: #{bottleneck_up_forward.6} parent=0
    _
  %s6 = ssub.s32 1, %s4
  %s7 = scalar_select 0, %s6, %s4
  loop: start=0, step=1, limit=4
  $region2: #{bottleneck_up_forward.6} parent=0 // loop_pre_header
    _
  $region3: #{bottleneck_up_forward.6} parent=0 // loop_header
    %s9 = sphi 0, %s13
    %p10 = scmp.ge.s32.totalorder %s9, 4
    %s19 = sphi 0, %s21
    %s22 = sphi 0, %s19
    %s23 = sphi 0, %s22
    %s39 = sphi 0, %s23
    %s43 = sphi 0, %s43
    %s45 = sphi 0, %s43
    %s46 = sphi 0, %s45
    %s60 = sphi 0, %s46
    %s64 = sphi 0, %s64
    %s66 = sphi 0, %s64
    %s67 = sphi 0, %s66
    %s81 = sphi 0, %s67
    %s87 = sphi 0, %s89
    %s90 = sphi 0, %s87
    %s91 = sphi 0, %s90
    %s107 = sphi 0, %s91
  $region4: #{bottleneck_up_forward.6} parent=0 // loop_header_branch
    %12 = sbr.rel (%p10) target = $region8
  $region5: #{bottleneck_up_forward.6} parent=0 // loop_body
    %s14 = ssub.s32 %s9, 1
    %s15 = ssub.s32 %s9, 2
    %s16 = sadd.s32 %s9, 1
    %s17 = ssub.s32 %s9, %s16
    %p18 = scmp.eq.s32.totalorder %s17, 0
    %s20 = sadd.s32 %s19, 1
    %s21 = scalar_select %p18, %s19, %s20
    %p24 = pneg %p18
    %p25 = scmp.eq.s32.totalorder %s9, 1
    %p26 = por %p24, %p25
    %p27 = scmp.ne.s32.totalorder %s19, %s22
    %p28 = scmp.eq.s32.totalorder %s9, 0
    %p29 = por %p27, %p28
    %p30 = scmp.ne.s32.totalorder %s19, %s22
    %p31 = scmp.eq.s32.totalorder %s14, 1
    %p32 = por %p30, %p31
    %p33 = scmp.ne.s32.totalorder %s22, %s23
    %p34 = scmp.eq.s32.totalorder %s14, 0
    %p35 = por %p33, %p34
    %p36 = scmp.ne.s32.totalorder %s22, %s23
    %p37 = scmp.eq.s32.totalorder %s15, 1
    %p38 = por %p36, %p37
    %p40 = scmp.ne.s32.totalorder %s23, %s39
    %p41 = scmp.eq.s32.totalorder %s15, 0
    %p42 = por %p40, %p41
    %s44 = sadd.s32 %s43, 1
    %p47 = scmp.eq.s32.totalorder %s9, 1
    %p48 = scmp.ne.s32.totalorder %s43, %s45
    %p49 = scmp.eq.s32.totalorder %s9, 0
    %p50 = por %p48, %p49
    %p51 = scmp.ne.s32.totalorder %s43, %s45
    %p52 = scmp.eq.s32.totalorder %s14, 1
    %p53 = por %p51, %p52
    %p54 = scmp.ne.s32.totalorder %s45, %s46
    %p55 = scmp.eq.s32.totalorder %s14, 0
    %p56 = por %p54, %p55
    %p57 = scmp.ne.s32.totalorder %s45, %s46
    %p58 = scmp.eq.s32.totalorder %s15, 1
    %p59 = por %p57, %p58
    %p61 = scmp.ne.s32.totalorder %s46, %s60
    %p62 = scmp.eq.s32.totalorder %s15, 0
    %p63 = por %p61, %p62
    %s65 = sadd.s32 %s64, 1
    %p68 = scmp.eq.s32.totalorder %s9, 1
    %p69 = scmp.ne.s32.totalorder %s64, %s66
    %p70 = scmp.eq.s32.totalorder %s9, 0
    %p71 = por %p69, %p70
    %p72 = scmp.ne.s32.totalorder %s64, %s66
    %p73 = scmp.eq.s32.totalorder %s14, 1
    %p74 = por %p72, %p73
    %p75 = scmp.ne.s32.totalorder %s66, %s67
    %p76 = scmp.eq.s32.totalorder %s14, 0
    %p77 = por %p75, %p76
    %p78 = scmp.ne.s32.totalorder %s66, %s67
    %p79 = scmp.eq.s32.totalorder %s15, 1
    %p80 = por %p78, %p79
    %p82 = scmp.ne.s32.totalorder %s67, %s81
    %p83 = scmp.eq.s32.totalorder %s15, 0
    %p84 = por %p82, %p83
    %s85 = ssub.s32 %s9, %s16
    %p86 = scmp.eq.s32.totalorder %s85, 0
    %s88 = sadd.s32 %s87, 1
    %s89 = scalar_select %p86, %s87, %s88
    %p92 = pneg %p86
    %p93 = scmp.eq.s32.totalorder %s9, 1
    %p94 = por %p92, %p93
    %p95 = scmp.ne.s32.totalorder %s87, %s90
    %p96 = scmp.eq.s32.totalorder %s9, 0
    %p97 = por %p95, %p96
    %p98 = scmp.ne.s32.totalorder %s87, %s90
    %p99 = scmp.eq.s32.totalorder %s14, 1
    %p100 = por %p98, %p99
    %p101 = scmp.ne.s32.totalorder %s90, %s91
    %p102 = scmp.eq.s32.totalorder %s14, 0
    %p103 = por %p101, %p102
    %p104 = scmp.ne.s32.totalorder %s90, %s91
    %p105 = scmp.eq.s32.totalorder %s15, 1
    %p106 = por %p104, %p105
    %p108 = scmp.ne.s32.totalorder %s91, %s107
    %p109 = scmp.eq.s32.totalorder %s15, 0
    %p110 = por %p108, %p109
    %p111 = scmp.le.s32.totalorder 1, %s9
    %p112 = scmp.lt.s32.totalorder %s9, 3
    %p113 = pnand %p111, %p112
    %p114 = pneg %p113
    // Predicated region
    $region9: #{bottleneck_up_forward.6} parent=5 // pred_check
      _
    $region10: #{bottleneck_up_forward.6} parent=5 // pred_check_branch
      %116 = sbr.rel (%p113) target = $region12
    $region11: #{bottleneck_up_forward.6} parent=5 // pred_region
      %s117 = ssub.s32 %s9, 1
      // Predicated region
      $region13: #{bottleneck_up_forward.6} parent=11 // pred_check
        %p118 = pneg %p56
      $region14: #{bottleneck_up_forward.6} parent=11 // pred_check_branch
        %120 = sbr.rel (%p118) target = $region16
      $region15: #{bottleneck_up_forward.6} parent=11 // pred_region
        _
      $region16: #{bottleneck_up_forward.6} parent=11 // pred_fallthru
        _
      // Predicated region
      $region17: #{bottleneck_up_forward.6} parent=11 // pred_check
        %p121 = pneg %p77
      $region18: #{bottleneck_up_forward.6} parent=11 // pred_check_branch
        %123 = sbr.rel (%p121) target = $region20
      $region19: #{bottleneck_up_forward.6} parent=11 // pred_region
        _
      $region20: #{bottleneck_up_forward.6} parent=11 // pred_fallthru
        _
    $region12: #{bottleneck_up_forward.6} parent=5 // pred_fallthru
      _
    %p124 = scmp.lt.s32.totalorder %s9, 2
    // Predicated region
    $region21: #{bottleneck_up_forward.6} parent=5 // pred_check
      %p125 = pneg %p124
    $region22: #{bottleneck_up_forward.6} parent=5 // pred_check_branch
      %127 = sbr.rel (%p125) target = $region24
    $region23: #{bottleneck_up_forward.6} parent=5 // pred_region
      // Predicated region
      $region25: #{bottleneck_up_forward.6} parent=23 // pred_check
        %p128 = pneg %p29
      $region26: #{bottleneck_up_forward.6} parent=23 // pred_check_branch
        %130 = sbr.rel (%p128) target = $region28
      $region27: #{bottleneck_up_forward.6} parent=23 // pred_region
        %s131 = smul.u32 32, %s9
        %p132 = scmp.lt.s32.totalorder %s131, 63
        %s133 = scalar_select %p132, %s131, 63
        %s134 = smul.addr %s133, 4
        %s135 = scalar_lea.vmem %s0, %s134
        %s136 = smul.u32 32, %s9
      $region28: #{bottleneck_up_forward.6} parent=23 // pred_fallthru
        _
    $region24: #{bottleneck_up_forward.6} parent=5 // pred_fallthru
      _
    %p137 = scmp.le.s32.totalorder 1, %s9
    %p138 = scmp.lt.s32.totalorder %s9, 3
    %p139 = pnand %p137, %p138
    %p140 = pneg %p139
    // Predicated region
    $region29: #{bottleneck_up_forward.6} parent=5 // pred_check
      _
    $region30: #{bottleneck_up_forward.6} parent=5 // pred_check_branch
      %142 = sbr.rel (%p139) target = $region32
    $region31: #{bottleneck_up_forward.6} parent=5 // pred_region
      %s143 = ssub.s32 %s9, 1
      %s144 = smul.u32 32, %s14
      %p145 = scmp.lt.s32.totalorder %s144, 63
      %s146 = scalar_select %p145, %s144, 63
      %s147 = smul.addr %s146, 4
      %s148 = scalar_lea.vmem %s0, %s147
      %p149 = pneg %p35
      %p150 = pneg %p32
      %p151 = pneg %p56
      %p152 = pneg %p53
      %p153 = pneg %p77
      %p154 = pneg %p74
      %p155 = pneg %p103
      %p156 = pneg %p100
      %s157 = smul.u32 32, %s14
      %p158 = scmp.lt.s32.totalorder %s157, 63
      %s159 = scalar_select %p158, %s157, 63
      %s160 = smul.addr %s159, 8
      %s161 = scalar_lea.vmem %s3, %s160
      %s162 = smul.u32 32, %s14
      %p163 = scmp.lt.s32.totalorder %s162, 63
      %s164 = scalar_select %p163, %s162, 63
      %s165 = smul.addr %s164, 4
      %s166 = scalar_lea.vmem %s0, %s165
      %s167 = smul.u32 32, %s14
      %s168 = smul.u32 32, %s14
      %p169 = scmp.lt.s32.totalorder %s168, 63
      %s170 = scalar_select %p169, %s168, 63
      %s171 = smul.addr %s170, 8
      %s172 = scalar_lea.vmem %s3, %s171
      %s173 = smul.u32 32, %s14
      %v175 = vld [vmem:[%s166] sm:$0xf]
      %v176 = vld [vmem:[%s166 + $0x4] sm:$0xf]
      %v177 = vld [vmem:[%s166 + $0x8] sm:$0xf]
      %v178 = vld [vmem:[%s166 + $0xc] sm:$0xf]
      %v179 = vld [vmem:[%s166 + $0x10] sm:$0xf]
      %v180 = vld [vmem:[%s166 + $0x14] sm:$0xf]
      %v181 = vld [vmem:[%s166 + $0x18] sm:$0xf]
      %v182 = vld [vmem:[%s166 + $0x1c] sm:$0xf]
      %v183 = vld [vmem:[%s166 + $0x20] sm:$0xf]
      %v184 = vld [vmem:[%s166 + $0x24] sm:$0xf]
      %v185 = vld [vmem:[%s166 + $0x28] sm:$0xf]
      %v186 = vld [vmem:[%s166 + $0x2c] sm:$0xf]
      %v187 = vld [vmem:[%s166 + $0x30] sm:$0xf]
      %v188 = vld [vmem:[%s166 + $0x34] sm:$0xf]
      %v189 = vld [vmem:[%s166 + $0x38] sm:$0xf]
      %v190 = vld [vmem:[%s166 + $0x3c] sm:$0xf]
      %v191 = vld [vmem:[%s166 + $0x40] sm:$0xf]
      %v192 = vld [vmem:[%s166 + $0x44] sm:$0xf]
      %v193 = vld [vmem:[%s166 + $0x48] sm:$0xf]
      %v194 = vld [vmem:[%s166 + $0x4c] sm:$0xf]
      %v195 = vld [vmem:[%s166 + $0x50] sm:$0xf]
      %v196 = vld [vmem:[%s166 + $0x54] sm:$0xf]
      %v197 = vld [vmem:[%s166 + $0x58] sm:$0xf]
      %v198 = vld [vmem:[%s166 + $0x5c] sm:$0xf]
      %v199 = vld [vmem:[%s166 + $0x60] sm:$0xf]
      %v200 = vld [vmem:[%s166 + $0x64] sm:$0xf]
      %v201 = vld [vmem:[%s166 + $0x68] sm:$0xf]
      %v202 = vld [vmem:[%s166 + $0x6c] sm:$0xf]
      %v203 = vld [vmem:[%s166 + $0x70] sm:$0xf]
      %v204 = vld [vmem:[%s166 + $0x74] sm:$0xf]
      %v205 = vld [vmem:[%s166 + $0x78] sm:$0xf]
      %v206 = vld [vmem:[%s166 + $0x7c] sm:$0xf]
      %v207 = vld [vmem:[%s1] sm:$0xf]
      %v208 = vld [vmem:[%s1 + $0x4] sm:$0xf]
      %v209 = vld [vmem:[%s1 + $0x8] sm:$0xf]
      %v210 = vld [vmem:[%s1 + $0xc] sm:$0xf]
      %v211 = vld [vmem:[%s1 + $0x10] sm:$0xf]
      %v212 = vld [vmem:[%s1 + $0x14] sm:$0xf]
      %v213 = vld [vmem:[%s1 + $0x18] sm:$0xf]
      %v214 = vld [vmem:[%s1 + $0x1c] sm:$0xf]
      %v215 = vld [vmem:[%s2] sm:$0x1]
      %v217 = vlaneseq
      %v218 = vshrl.u32 %v217, 7
      %v219 = vsub.s32 0, %v218
      %v220 = vrot.slane %v215, %v219
      %v254 = vunpack.c.l.b16 %v175
      %v255 = vunpack.c.l.b16 %v176
      %v256 = vunpack.c.l.b16 %v177
      %v257 = vunpack.c.l.b16 %v178
      %v258 = vunpack.c.l.b16 %v179
      %v259 = vunpack.c.l.b16 %v180
      %v260 = vunpack.c.l.b16 %v181
      %v261 = vunpack.c.l.b16 %v182
      %v262 = vunpack.c.l.b16 %v183
      %v263 = vunpack.c.l.b16 %v184
      %v264 = vunpack.c.l.b16 %v185
      %v265 = vunpack.c.l.b16 %v186
      %v266 = vunpack.c.l.b16 %v187
      %v267 = vunpack.c.l.b16 %v188
      %v268 = vunpack.c.l.b16 %v189
      %v269 = vunpack.c.l.b16 %v190
      %v270 = vunpack.c.l.b16 %v191
      %v271 = vunpack.c.l.b16 %v192
      %v272 = vunpack.c.l.b16 %v193
      %v273 = vunpack.c.l.b16 %v194
      %v274 = vunpack.c.l.b16 %v195
      %v275 = vunpack.c.l.b16 %v196
      %v276 = vunpack.c.l.b16 %v197
      %v277 = vunpack.c.l.b16 %v198
      %v278 = vunpack.c.l.b16 %v199
      %v279 = vunpack.c.l.b16 %v200
      %v280 = vunpack.c.l.b16 %v201
      %v281 = vunpack.c.l.b16 %v202
      %v282 = vunpack.c.l.b16 %v203
      %v283 = vunpack.c.l.b16 %v204
      %v284 = vunpack.c.l.b16 %v205
      %v285 = vunpack.c.l.b16 %v206
      %v286 = vpack.c.b16 %v255, %v254
      %v287 = vpack.c.b16 %v257, %v256
      %v288 = vpack.c.b16 %v259, %v258
      %v289 = vpack.c.b16 %v261, %v260
      %v290 = vpack.c.b16 %v263, %v262
      %v291 = vpack.c.b16 %v265, %v264
      %v292 = vpack.c.b16 %v267, %v266
      %v293 = vpack.c.b16 %v269, %v268
      %v294 = vpack.c.b16 %v271, %v270
      %v295 = vpack.c.b16 %v273, %v272
      %v296 = vpack.c.b16 %v275, %v274
      %v297 = vpack.c.b16 %v277, %v276
      %v298 = vpack.c.b16 %v279, %v278
      %v299 = vpack.c.b16 %v281, %v280
      %v300 = vpack.c.b16 %v283, %v282
      %v301 = vpack.c.b16 %v285, %v284
      %v310 = vunpack.c.l.b16 %v207
      %v311 = vunpack.c.l.b16 %v208
      %v312 = vunpack.c.l.b16 %v209
      %v313 = vunpack.c.l.b16 %v210
      %v314 = vunpack.c.l.b16 %v211
      %v315 = vunpack.c.l.b16 %v212
      %v316 = vunpack.c.l.b16 %v213
      %v317 = vunpack.c.l.b16 %v214
      %v318 = vpack.c.b16 %v311, %v310
      %v319 = vpack.c.b16 %v313, %v312
      %v320 = vpack.c.b16 %v315, %v314
      %v321 = vpack.c.b16 %v317, %v316
      %vm326 = vcmask 523264
      %v328 = vsel %vm326, %v286, 0
      %v331 = vsel %vm326, %v287, 0
      %v334 = vsel %vm326, %v288, 0
      %v337 = vsel %vm326, %v289, 0
      %v340 = vsel %vm326, %v290, 0
      %v343 = vsel %vm326, %v291, 0
      %v346 = vsel %vm326, %v292, 0
      %v349 = vsel %vm326, %v293, 0
      %v352 = vsel %vm326, %v294, 0
      %v355 = vsel %vm326, %v295, 0
      %v358 = vsel %vm326, %v296, 0
      %v361 = vsel %vm326, %v297, 0
      %v364 = vsel %vm326, %v298, 0
      %v367 = vsel %vm326, %v299, 0
      %v370 = vsel %vm326, %v300, 0
      %v373 = vsel %vm326, %v301, 0
      %375 = vmatprep.subr.bf16.mxu0 0
      %376 = vmatpush1.bf16.msra.mxu0 0
      %377 = vmatprep.subr.bf16.mxu0 0
      %378 = vmatpush1.bf16.msra.mxu0 0
      %379 = vmatprep.subr.bf16.mxu0 0
      %380 = vmatpush1.bf16.msra.mxu0 0
      %381 = vmatprep.subr.bf16.mxu0 0
      %382 = vmatpush1.bf16.msra.mxu0 0
      %383 = vmatprep.subr.bf16.mxu0 0
      %384 = vmatpush1.bf16.msra.mxu0 %v321
      %385 = vmatprep.subr.bf16.mxu0 0
      %386 = vmatpush1.bf16.msra.mxu0 %v320
      %387 = vmatprep.subr.bf16.mxu0 0
      %388 = vmatpush1.bf16.msra.mxu0 %v319
      %389 = vmatprep.subr.bf16.mxu0 0
      %390 = vmatpush1.bf16.msra.mxu0 %v318
      %391 = vmatprep.subr.bf16.mxu0 0
      %392 = vmatpush2.bf16.msra.mxu0 0
      %393 = vmatprep.subr.bf16.mxu0 0
      %394 = vmatpush2.bf16.msra.mxu0 0
      %395 = vmatprep.subr.bf16.mxu0 0
      %396 = vmatpush2.bf16.msra.mxu0 0
      %397 = vmatprep.subr.bf16.mxu0 0
      %398 = vmatpush2.bf16.msra.mxu0 0
      %399 = vmatprep.subr.bf16.mxu0 0
      %400 = vmatpush2.bf16.msra.mxu0 0
      %401 = vmatprep.subr.bf16.mxu0 0
      %402 = vmatpush2.bf16.msra.mxu0 0
      %403 = vmatprep.subr.bf16.mxu0 0
      %404 = vmatpush2.bf16.msra.mxu0 0
      %405 = vmatprep.subr.bf16.mxu0 0
      %406 = vmatpush2.bf16.msra.mxu0 0
      %407 = vmatprep.mubr.bf16.mxu0 0
      %408 = vmatmul.mubr.bf16.gmra.mxu0 %v328
      %v409 = vpop.f32.mrf.mxu0
      %v410 = vadd.f32 %v220, %v409
      %v411 = vpop.f32.mrf.mxu0
      %v412 = vpop.f32.mrf.mxu0
      %v413 = vadd.f32 %v220, %v412
      %v414 = vpop.f32.mrf.mxu0
      %415 = vmatprep.mubr.bf16.mxu0 0
      %416 = vmatmul.mubr.bf16.gmra.mxu0 %v331
      %v417 = vpop.f32.mrf.mxu0
      %v418 = vadd.f32 %v220, %v417
      %v419 = vpop.f32.mrf.mxu0
      %v420 = vpop.f32.mrf.mxu0
      %v421 = vadd.f32 %v220, %v420
      %v422 = vpop.f32.mrf.mxu0
      %423 = vmatprep.mubr.bf16.mxu0 0
      %424 = vmatmul.mubr.bf16.gmra.mxu0 %v334
      %v425 = vpop.f32.mrf.mxu0
      %v426 = vadd.f32 %v220, %v425
      %v427 = vpop.f32.mrf.mxu0
      %v428 = vpop.f32.mrf.mxu0
      %v429 = vadd.f32 %v220, %v428
      %v430 = vpop.f32.mrf.mxu0
      %431 = vmatprep.mubr.bf16.mxu0 0
      %432 = vmatmul.mubr.bf16.gmra.mxu0 %v337
      %v433 = vpop.f32.mrf.mxu0
      %v434 = vadd.f32 %v220, %v433
      %v435 = vpop.f32.mrf.mxu0
      %v436 = vpop.f32.mrf.mxu0
      %v437 = vadd.f32 %v220, %v436
      %v438 = vpop.f32.mrf.mxu0
      %439 = vmatprep.mubr.bf16.mxu0 0
      %440 = vmatmul.mubr.bf16.gmra.mxu0 %v340
      %v441 = vpop.f32.mrf.mxu0
      %v442 = vadd.f32 %v220, %v441
      %v443 = vpop.f32.mrf.mxu0
      %v444 = vpop.f32.mrf.mxu0
      %v445 = vadd.f32 %v220, %v444
      %v446 = vpop.f32.mrf.mxu0
      %447 = vmatprep.mubr.bf16.mxu0 0
      %448 = vmatmul.mubr.bf16.gmra.mxu0 %v343
      %v449 = vpop.f32.mrf.mxu0
      %v450 = vadd.f32 %v220, %v449
      %v451 = vpop.f32.mrf.mxu0
      %v452 = vpop.f32.mrf.mxu0
      %v453 = vadd.f32 %v220, %v452
      %v454 = vpop.f32.mrf.mxu0
      %455 = vmatprep.mubr.bf16.mxu0 0
      %456 = vmatmul.mubr.bf16.gmra.mxu0 %v346
      %v457 = vpop.f32.mrf.mxu0
      %v458 = vadd.f32 %v220, %v457
      %v459 = vpop.f32.mrf.mxu0
      %v460 = vpop.f32.mrf.mxu0
      %v461 = vadd.f32 %v220, %v460
      %v462 = vpop.f32.mrf.mxu0
      %463 = vmatprep.mubr.bf16.mxu0 0
      %464 = vmatmul.mubr.bf16.gmra.mxu0 %v349
      %v465 = vpop.f32.mrf.mxu0
      %v466 = vadd.f32 %v220, %v465
      %v467 = vpop.f32.mrf.mxu0
      %v468 = vpop.f32.mrf.mxu0
      %v469 = vadd.f32 %v220, %v468
      %v470 = vpop.f32.mrf.mxu0
      %471 = vmatprep.mubr.bf16.mxu0 0
      %472 = vmatmul.mubr.bf16.gmra.mxu0 %v352
      %v473 = vpop.f32.mrf.mxu0
      %v474 = vadd.f32 %v220, %v473
      %v475 = vpop.f32.mrf.mxu0
      %v476 = vpop.f32.mrf.mxu0
      %v477 = vadd.f32 %v220, %v476
      %v478 = vpop.f32.mrf.mxu0
      %479 = vmatprep.mubr.bf16.mxu0 0
      %480 = vmatmul.mubr.bf16.gmra.mxu0 %v355
      %v481 = vpop.f32.mrf.mxu0
      %v482 = vadd.f32 %v220, %v481
      %v483 = vpop.f32.mrf.mxu0
      %v484 = vpop.f32.mrf.mxu0
      %v485 = vadd.f32 %v220, %v484
      %v486 = vpop.f32.mrf.mxu0
      %487 = vmatprep.mubr.bf16.mxu0 0
      %488 = vmatmul.mubr.bf16.gmra.mxu0 %v358
      %v489 = vpop.f32.mrf.mxu0
      %v490 = vadd.f32 %v220, %v489
      %v491 = vpop.f32.mrf.mxu0
      %v492 = vpop.f32.mrf.mxu0
      %v493 = vadd.f32 %v220, %v492
      %v494 = vpop.f32.mrf.mxu0
      %495 = vmatprep.mubr.bf16.mxu0 0
      %496 = vmatmul.mubr.bf16.gmra.mxu0 %v361
      %v497 = vpop.f32.mrf.mxu0
      %v498 = vadd.f32 %v220, %v497
      %v499 = vpop.f32.mrf.mxu0
      %v500 = vpop.f32.mrf.mxu0
      %v501 = vadd.f32 %v220, %v500
      %v502 = vpop.f32.mrf.mxu0
      %503 = vmatprep.mubr.bf16.mxu0 0
      %504 = vmatmul.mubr.bf16.gmra.mxu0 %v364
      %v505 = vpop.f32.mrf.mxu0
      %v506 = vadd.f32 %v220, %v505
      %v507 = vpop.f32.mrf.mxu0
      %v508 = vpop.f32.mrf.mxu0
      %v509 = vadd.f32 %v220, %v508
      %v510 = vpop.f32.mrf.mxu0
      %511 = vmatprep.mubr.bf16.mxu0 0
      %512 = vmatmul.mubr.bf16.gmra.mxu0 %v367
      %v513 = vpop.f32.mrf.mxu0
      %v514 = vadd.f32 %v220, %v513
      %v515 = vpop.f32.mrf.mxu0
      %v516 = vpop.f32.mrf.mxu0
      %v517 = vadd.f32 %v220, %v516
      %v518 = vpop.f32.mrf.mxu0
      %519 = vmatprep.mubr.bf16.mxu0 0
      %520 = vmatmul.mubr.bf16.gmra.mxu0 %v370
      %v521 = vpop.f32.mrf.mxu0
      %v522 = vadd.f32 %v220, %v521
      %v523 = vpop.f32.mrf.mxu0
      %v524 = vpop.f32.mrf.mxu0
      %v525 = vadd.f32 %v220, %v524
      %v526 = vpop.f32.mrf.mxu0
      %527 = vmatprep.mubr.bf16.mxu0 0
      %528 = vmatmul.mubr.bf16.gmra.mxu0 %v373
      %v529 = vpop.f32.mrf.mxu0
      %v530 = vadd.f32 %v220, %v529
      %v531 = vpop.f32.mrf.mxu0
      %v532 = vpop.f32.mrf.mxu0
      %v533 = vadd.f32 %v220, %v532
      %v534 = vpop.f32.mrf.mxu0
      %535 = vdwg.mxu0
      %536 = vst.msk [vmem:[%s172] sm:$0xff] %vm326, %v410
      %537 = vst.msk [vmem:[%s172 + $0x8] sm:$0xff] %vm326, %v413
      %538 = vst.msk [vmem:[%s172 + $0x10] sm:$0xff] %vm326, %v418
      %539 = vst.msk [vmem:[%s172 + $0x18] sm:$0xff] %vm326, %v421
      %540 = vst.msk [vmem:[%s172 + $0x20] sm:$0xff] %vm326, %v426
      %541 = vst.msk [vmem:[%s172 + $0x28] sm:$0xff] %vm326, %v429
      %542 = vst.msk [vmem:[%s172 + $0x30] sm:$0xff] %vm326, %v434
      %543 = vst.msk [vmem:[%s172 + $0x38] sm:$0xff] %vm326, %v437
      %544 = vst.msk [vmem:[%s172 + $0x40] sm:$0xff] %vm326, %v442
      %545 = vst.msk [vmem:[%s172 + $0x48] sm:$0xff] %vm326, %v445
      %546 = vst.msk [vmem:[%s172 + $0x50] sm:$0xff] %vm326, %v450
      %547 = vst.msk [vmem:[%s172 + $0x58] sm:$0xff] %vm326, %v453
      %548 = vst.msk [vmem:[%s172 + $0x60] sm:$0xff] %vm326, %v458
      %549 = vst.msk [vmem:[%s172 + $0x68] sm:$0xff] %vm326, %v461
      %550 = vst.msk [vmem:[%s172 + $0x70] sm:$0xff] %vm326, %v466
      %551 = vst.msk [vmem:[%s172 + $0x78] sm:$0xff] %vm326, %v469
      %552 = vst.msk [vmem:[%s172 + $0x80] sm:$0xff] %vm326, %v474
      %553 = vst.msk [vmem:[%s172 + $0x88] sm:$0xff] %vm326, %v477
      %554 = vst.msk [vmem:[%s172 + $0x90] sm:$0xff] %vm326, %v482
      %555 = vst.msk [vmem:[%s172 + $0x98] sm:$0xff] %vm326, %v485
      %556 = vst.msk [vmem:[%s172 + $0xa0] sm:$0xff] %vm326, %v490
      %557 = vst.msk [vmem:[%s172 + $0xa8] sm:$0xff] %vm326, %v493
      %558 = vst.msk [vmem:[%s172 + $0xb0] sm:$0xff] %vm326, %v498
      %559 = vst.msk [vmem:[%s172 + $0xb8] sm:$0xff] %vm326, %v501
      %560 = vst.msk [vmem:[%s172 + $0xc0] sm:$0xff] %vm326, %v506
      %561 = vst.msk [vmem:[%s172 + $0xc8] sm:$0xff] %vm326, %v509
      %562 = vst.msk [vmem:[%s172 + $0xd0] sm:$0xff] %vm326, %v514
      %563 = vst.msk [vmem:[%s172 + $0xd8] sm:$0xff] %vm326, %v517
      %564 = vst.msk [vmem:[%s172 + $0xe0] sm:$0xff] %vm326, %v522
      %565 = vst.msk [vmem:[%s172 + $0xe8] sm:$0xff] %vm326, %v525
      %566 = vst.msk [vmem:[%s172 + $0xf0] sm:$0xff] %vm326, %v530
      %567 = vst.msk [vmem:[%s172 + $0xf8] sm:$0xff] %vm326, %v533
      %s568 = smul.u32 32, %s14
      %p569 = scmp.lt.s32.totalorder %s568, 63
      %s570 = scalar_select %p569, %s568, 63
      %s571 = smul.addr %s570, 8
      %s572 = scalar_lea.vmem %s3, %s571
      // Predicated region
      $region33: #{bottleneck_up_forward.6} parent=31 // pred_check
        %p573 = pneg %p100
      $region34: #{bottleneck_up_forward.6} parent=31 // pred_check_branch
        %575 = sbr.rel (%p573) target = $region36
      $region35: #{bottleneck_up_forward.6} parent=31 // pred_region
        %s576 = smul.u32 32, %s14
      $region36: #{bottleneck_up_forward.6} parent=31 // pred_fallthru
        _
    $region32: #{bottleneck_up_forward.6} parent=5 // pred_fallthru
      _
    %p577 = scmp.le.s32.totalorder 2, %s9
    // Predicated region
    $region37: #{bottleneck_up_forward.6} parent=5 // pred_check
      %p578 = pneg %p577
    $region38: #{bottleneck_up_forward.6} parent=5 // pred_check_branch
      %580 = sbr.rel (%p578) target = $region40
    $region39: #{bottleneck_up_forward.6} parent=5 // pred_region
      %s581 = ssub.s32 %s9, 2
      // Predicated region
      $region41: #{bottleneck_up_forward.6} parent=39 // pred_check
        %p582 = pneg %p106
      $region42: #{bottleneck_up_forward.6} parent=39 // pred_check_branch
        %584 = sbr.rel (%p582) target = $region44
      $region43: #{bottleneck_up_forward.6} parent=39 // pred_region
        %s585 = smul.u32 32, %s15
        %p586 = scmp.lt.s32.totalorder %s585, 63
        %s587 = scalar_select %p586, %s585, 63
        %s588 = smul.addr %s587, 8
        %s589 = scalar_lea.vmem %s3, %s588
      $region44: #{bottleneck_up_forward.6} parent=39 // pred_fallthru
        _
    $region40: #{bottleneck_up_forward.6} parent=5 // pred_fallthru
      _
  $region6: #{bottleneck_up_forward.6} parent=0 // loop_footer
    %s13 = sadd.s32 1, %s9
  $region7: #{bottleneck_up_forward.6} parent=0 // loop_footer_branch
    %8 = sbr.rel target = $region3
  $region8: #{bottleneck_up_forward.6} parent=0 // loop_exit
    _

// kernel: bottleneck_up_forward.5
$region0: #{bottleneck_up_forward.5}
  #allocation0 [shape = 'u32[]', space=smem, size = 0x4, offset = 0x4, fixed_abs, tag = 'smem constant byte address 0x4 - core index']
  #allocation1 [shape = 'u32[144,128]{1,0:T(1,128)}', space=vmem, size = 0x12000, scoped, tag = 'internal scratch']
  %s0 = inlined_call_operand.vmem [shape: bf16[512,128], index: 0, kind: input, shape index: {}]
  %s1 = inlined_call_operand.vmem [shape: bf16[128,128], index: 1, kind: input, shape index: {}]
  %s2 = inlined_call_operand.vmem [shape: f32[1,128], index: 2, kind: input, shape index: {}]
  %s3 = inlined_call_operand.vmem [shape: bf16[512,128], index: 3, kind: output, shape index: {}]
  %s4 = sld [smem:[#allocation0]]
  $region45: #{bottleneck_up_forward.5} parent=0
    _
  %s6 = ssub.s32 1, %s4
  %s7 = scalar_select 0, %s6, %s4
  loop: start=0, step=1, limit=4
  $region2: #{bottleneck_up_forward.5} parent=0 // loop_pre_header
    _
  $region3: #{bottleneck_up_forward.5} parent=0 // loop_header
    %s9 = sphi 0, %s13
    %p10 = scmp.ge.s32.totalorder %s9, 4
    %s19 = sphi 0, %s21
    %s22 = sphi 0, %s19
    %s23 = sphi 0, %s22
    %s39 = sphi 0, %s23
    %s43 = sphi 0, %s43
    %s45 = sphi 0, %s43
    %s46 = sphi 0, %s45
    %s60 = sphi 0, %s46
    %s64 = sphi 0, %s64
    %s66 = sphi 0, %s64
    %s67 = sphi 0, %s66
    %s81 = sphi 0, %s67
    %s87 = sphi 0, %s89
    %s90 = sphi 0, %s87
    %s91 = sphi 0, %s90
    %s107 = sphi 0, %s91
  $region4: #{bottleneck_up_forward.5} parent=0 // loop_header_branch
    %12 = sbr.rel (%p10) target = $region8
  $region5: #{bottleneck_up_forward.5} parent=0 // loop_body
    %s14 = ssub.s32 %s9, 1
    %s15 = ssub.s32 %s9, 2
    %s16 = sadd.s32 %s9, 1
    %s17 = ssub.s32 %s9, %s16
    %p18 = scmp.eq.s32.totalorder %s17, 0
    %s20 = sadd.s32 %s19, 1
    %s21 = scalar_select %p18, %s19, %s20
    %p24 = pneg %p18
    %p25 = scmp.eq.s32.totalorder %s9, 1
    %p26 = por %p24, %p25
    %p27 = scmp.ne.s32.totalorder %s19, %s22
    %p28 = scmp.eq.s32.totalorder %s9, 0
    %p29 = por %p27, %p28
    %p30 = scmp.ne.s32.totalorder %s19, %s22
    %p31 = scmp.eq.s32.totalorder %s14, 1
    %p32 = por %p30, %p31
    %p33 = scmp.ne.s32.totalorder %s22, %s23
    %p34 = scmp.eq.s32.totalorder %s14, 0
    %p35 = por %p33, %p34
    %p36 = scmp.ne.s32.totalorder %s22, %s23
    %p37 = scmp.eq.s32.totalorder %s15, 1
    %p38 = por %p36, %p37
    %p40 = scmp.ne.s32.totalorder %s23, %s39
    %p41 = scmp.eq.s32.totalorder %s15, 0
    %p42 = por %p40, %p41
    %s44 = sadd.s32 %s43, 1
    %p47 = scmp.eq.s32.totalorder %s9, 1
    %p48 = scmp.ne.s32.totalorder %s43, %s45
    %p49 = scmp.eq.s32.totalorder %s9, 0
    %p50 = por %p48, %p49
    %p51 = scmp.ne.s32.totalorder %s43, %s45
    %p52 = scmp.eq.s32.totalorder %s14, 1
    %p53 = por %p51, %p52
    %p54 = scmp.ne.s32.totalorder %s45, %s46
    %p55 = scmp.eq.s32.totalorder %s14, 0
    %p56 = por %p54, %p55
    %p57 = scmp.ne.s32.totalorder %s45, %s46
    %p58 = scmp.eq.s32.totalorder %s15, 1
    %p59 = por %p57, %p58
    %p61 = scmp.ne.s32.totalorder %s46, %s60
    %p62 = scmp.eq.s32.totalorder %s15, 0
    %p63 = por %p61, %p62
    %s65 = sadd.s32 %s64, 1
    %p68 = scmp.eq.s32.totalorder %s9, 1
    %p69 = scmp.ne.s32.totalorder %s64, %s66
    %p70 = scmp.eq.s32.totalorder %s9, 0
    %p71 = por %p69, %p70
    %p72 = scmp.ne.s32.totalorder %s64, %s66
    %p73 = scmp.eq.s32.totalorder %s14, 1
    %p74 = por %p72, %p73
    %p75 = scmp.ne.s32.totalorder %s66, %s67
    %p76 = scmp.eq.s32.totalorder %s14, 0
    %p77 = por %p75, %p76
    %p78 = scmp.ne.s32.totalorder %s66, %s67
    %p79 = scmp.eq.s32.totalorder %s15, 1
    %p80 = por %p78, %p79
    %p82 = scmp.ne.s32.totalorder %s67, %s81
    %p83 = scmp.eq.s32.totalorder %s15, 0
    %p84 = por %p82, %p83
    %s85 = ssub.s32 %s9, %s16
    %p86 = scmp.eq.s32.totalorder %s85, 0
    %s88 = sadd.s32 %s87, 1
    %s89 = scalar_select %p86, %s87, %s88
    %p92 = pneg %p86
    %p93 = scmp.eq.s32.totalorder %s9, 1
    %p94 = por %p92, %p93
    %p95 = scmp.ne.s32.totalorder %s87, %s90
    %p96 = scmp.eq.s32.totalorder %s9, 0
    %p97 = por %p95, %p96
    %p98 = scmp.ne.s32.totalorder %s87, %s90
    %p99 = scmp.eq.s32.totalorder %s14, 1
    %p100 = por %p98, %p99
    %p101 = scmp.ne.s32.totalorder %s90, %s91
    %p102 = scmp.eq.s32.totalorder %s14, 0
    %p103 = por %p101, %p102
    %p104 = scmp.ne.s32.totalorder %s90, %s91
    %p105 = scmp.eq.s32.totalorder %s15, 1
    %p106 = por %p104, %p105
    %p108 = scmp.ne.s32.totalorder %s91, %s107
    %p109 = scmp.eq.s32.totalorder %s15, 0
    %p110 = por %p108, %p109
    %p111 = scmp.le.s32.totalorder 1, %s9
    %p112 = scmp.lt.s32.totalorder %s9, 3
    %p113 = pnand %p111, %p112
    %p114 = pneg %p113
    // Predicated region
    $region9: #{bottleneck_up_forward.5} parent=5 // pred_check
      _
    $region10: #{bottleneck_up_forward.5} parent=5 // pred_check_branch
      %116 = sbr.rel (%p113) target = $region12
    $region11: #{bottleneck_up_forward.5} parent=5 // pred_region
      %s117 = ssub.s32 %s9, 1
      // Predicated region
      $region13: #{bottleneck_up_forward.5} parent=11 // pred_check
        %p118 = pneg %p56
      $region14: #{bottleneck_up_forward.5} parent=11 // pred_check_branch
        %120 = sbr.rel (%p118) target = $region16
      $region15: #{bottleneck_up_forward.5} parent=11 // pred_region
        _
      $region16: #{bottleneck_up_forward.5} parent=11 // pred_fallthru
        _
      // Predicated region
      $region17: #{bottleneck_up_forward.5} parent=11 // pred_check
        %p121 = pneg %p77
      $region18: #{bottleneck_up_forward.5} parent=11 // pred_check_branch
        %123 = sbr.rel (%p121) target = $region20
      $region19: #{bottleneck_up_forward.5} parent=11 // pred_region
        _
      $region20: #{bottleneck_up_forward.5} parent=11 // pred_fallthru
        _
    $region12: #{bottleneck_up_forward.5} parent=5 // pred_fallthru
      _
    %p124 = scmp.lt.s32.totalorder %s9, 2
    // Predicated region
    $region21: #{bottleneck_up_forward.5} parent=5 // pred_check
      %p125 = pneg %p124
    $region22: #{bottleneck_up_forward.5} parent=5 // pred_check_branch
      %127 = sbr.rel (%p125) target = $region24
    $region23: #{bottleneck_up_forward.5} parent=5 // pred_region
      // Predicated region
      $region25: #{bottleneck_up_forward.5} parent=23 // pred_check
        %p128 = pneg %p29
      $region26: #{bottleneck_up_forward.5} parent=23 // pred_check_branch
        %130 = sbr.rel (%p128) target = $region28
      $region27: #{bottleneck_up_forward.5} parent=23 // pred_region
        %s131 = smul.u32 32, %s9
        %p132 = scmp.lt.s32.totalorder %s131, 63
        %s133 = scalar_select %p132, %s131, 63
        %s134 = smul.addr %s133, 4
        %s135 = scalar_lea.vmem %s0, %s134
        %s136 = smul.u32 32, %s9
      $region28: #{bottleneck_up_forward.5} parent=23 // pred_fallthru
        _
    $region24: #{bottleneck_up_forward.5} parent=5 // pred_fallthru
      _
    %p137 = scmp.le.s32.totalorder 1, %s9
    %p138 = scmp.lt.s32.totalorder %s9, 3
    %p139 = pnand %p137, %p138
    %p140 = pneg %p139
    // Predicated region
    $region29: #{bottleneck_up_forward.5} parent=5 // pred_check
      _
    $region30: #{bottleneck_up_forward.5} parent=5 // pred_check_branch
      %142 = sbr.rel (%p139) target = $region32
    $region31: #{bottleneck_up_forward.5} parent=5 // pred_region
      %s143 = ssub.s32 %s9, 1
      %s144 = smul.u32 32, %s14
      %p145 = scmp.lt.s32.totalorder %s144, 63
      %s146 = scalar_select %p145, %s144, 63
      %s147 = smul.addr %s146, 4
      %s148 = scalar_lea.vmem %s0, %s147
      %p149 = pneg %p35
      %p150 = pneg %p32
      %p151 = pneg %p56
      %p152 = pneg %p53
      %p153 = pneg %p77
      %p154 = pneg %p74
      %p155 = pneg %p103
      %p156 = pneg %p100
      %s157 = smul.u32 32, %s14
      %p158 = scmp.lt.s32.totalorder %s157, 63
      %s159 = scalar_select %p158, %s157, 63
      %s160 = smul.addr %s159, 4
      %s161 = scalar_lea.vmem %s3, %s160
      %s162 = smul.u32 32, %s14
      %p163 = scmp.lt.s32.totalorder %s162, 63
      %s164 = scalar_select %p163, %s162, 63
      %s165 = smul.addr %s164, 4
      %s166 = scalar_lea.vmem %s0, %s165
      %s167 = smul.u32 32, %s14
      %s168 = smul.u32 32, %s14
      %p169 = scmp.lt.s32.totalorder %s168, 63
      %s170 = scalar_select %p169, %s168, 63
      %s171 = smul.addr %s170, 4
      %s172 = scalar_lea.vmem %s3, %s171
      %s173 = smul.u32 32, %s14
      %v175 = vld [vmem:[%s166] sm:$0xf]
      %v176 = vld [vmem:[%s166 + $0x4] sm:$0xf]
      %v177 = vld [vmem:[%s166 + $0x8] sm:$0xf]
      %v178 = vld [vmem:[%s166 + $0xc] sm:$0xf]
      %v179 = vld [vmem:[%s166 + $0x10] sm:$0xf]
      %v180 = vld [vmem:[%s166 + $0x14] sm:$0xf]
      %v181 = vld [vmem:[%s166 + $0x18] sm:$0xf]
      %v182 = vld [vmem:[%s166 + $0x1c] sm:$0xf]
      %v183 = vld [vmem:[%s166 + $0x20] sm:$0xf]
      %v184 = vld [vmem:[%s166 + $0x24] sm:$0xf]
      %v185 = vld [vmem:[%s166 + $0x28] sm:$0xf]
      %v186 = vld [vmem:[%s166 + $0x2c] sm:$0xf]
      %v187 = vld [vmem:[%s166 + $0x30] sm:$0xf]
      %v188 = vld [vmem:[%s166 + $0x34] sm:$0xf]
      %v189 = vld [vmem:[%s166 + $0x38] sm:$0xf]
      %v190 = vld [vmem:[%s166 + $0x3c] sm:$0xf]
      %v191 = vld [vmem:[%s166 + $0x40] sm:$0xf]
      %v192 = vld [vmem:[%s166 + $0x44] sm:$0xf]
      %v193 = vld [vmem:[%s166 + $0x48] sm:$0xf]
      %v194 = vld [vmem:[%s166 + $0x4c] sm:$0xf]
      %v195 = vld [vmem:[%s166 + $0x50] sm:$0xf]
      %v196 = vld [vmem:[%s166 + $0x54] sm:$0xf]
      %v197 = vld [vmem:[%s166 + $0x58] sm:$0xf]
      %v198 = vld [vmem:[%s166 + $0x5c] sm:$0xf]
      %v199 = vld [vmem:[%s166 + $0x60] sm:$0xf]
      %v200 = vld [vmem:[%s166 + $0x64] sm:$0xf]
      %v201 = vld [vmem:[%s166 + $0x68] sm:$0xf]
      %v202 = vld [vmem:[%s166 + $0x6c] sm:$0xf]
      %v203 = vld [vmem:[%s166 + $0x70] sm:$0xf]
      %v204 = vld [vmem:[%s166 + $0x74] sm:$0xf]
      %v205 = vld [vmem:[%s166 + $0x78] sm:$0xf]
      %v206 = vld [vmem:[%s166 + $0x7c] sm:$0xf]
      %v207 = vld [vmem:[%s1] sm:$0xf]
      %v208 = vld [vmem:[%s1 + $0x4] sm:$0xf]
      %v209 = vld [vmem:[%s1 + $0x8] sm:$0xf]
      %v210 = vld [vmem:[%s1 + $0xc] sm:$0xf]
      %v211 = vld [vmem:[%s1 + $0x10] sm:$0xf]
      %v212 = vld [vmem:[%s1 + $0x14] sm:$0xf]
      %v213 = vld [vmem:[%s1 + $0x18] sm:$0xf]
      %v214 = vld [vmem:[%s1 + $0x1c] sm:$0xf]
      %v215 = vld [vmem:[%s1 + $0x20] sm:$0xf]
      %v216 = vld [vmem:[%s1 + $0x24] sm:$0xf]
      %v217 = vld [vmem:[%s1 + $0x28] sm:$0xf]
      %v218 = vld [vmem:[%s1 + $0x2c] sm:$0xf]
      %v219 = vld [vmem:[%s1 + $0x30] sm:$0xf]
      %v220 = vld [vmem:[%s1 + $0x34] sm:$0xf]
      %v221 = vld [vmem:[%s1 + $0x38] sm:$0xf]
      %v222 = vld [vmem:[%s1 + $0x3c] sm:$0xf]
      %v223 = vld [vmem:[%s2] sm:$0x1]
      %v225 = vlaneseq
      %v226 = vshrl.u32 %v225, 7
      %v227 = vsub.s32 0, %v226
      %v228 = vrot.slane %v223, %v227
      %v262 = vunpack.c.l.b16 %v175
      %v263 = vunpack.c.l.b16 %v176
      %v264 = vunpack.c.l.b16 %v177
      %v265 = vunpack.c.l.b16 %v178
      %v266 = vunpack.c.l.b16 %v179
      %v267 = vunpack.c.l.b16 %v180
      %v268 = vunpack.c.l.b16 %v181
      %v269 = vunpack.c.l.b16 %v182
      %v270 = vunpack.c.l.b16 %v183
      %v271 = vunpack.c.l.b16 %v184
      %v272 = vunpack.c.l.b16 %v185
      %v273 = vunpack.c.l.b16 %v186
      %v274 = vunpack.c.l.b16 %v187
      %v275 = vunpack.c.l.b16 %v188
      %v276 = vunpack.c.l.b16 %v189
      %v277 = vunpack.c.l.b16 %v190
      %v278 = vunpack.c.l.b16 %v191
      %v279 = vunpack.c.l.b16 %v192
      %v280 = vunpack.c.l.b16 %v193
      %v281 = vunpack.c.l.b16 %v194
      %v282 = vunpack.c.l.b16 %v195
      %v283 = vunpack.c.l.b16 %v196
      %v284 = vunpack.c.l.b16 %v197
      %v285 = vunpack.c.l.b16 %v198
      %v286 = vunpack.c.l.b16 %v199
      %v287 = vunpack.c.l.b16 %v200
      %v288 = vunpack.c.l.b16 %v201
      %v289 = vunpack.c.l.b16 %v202
      %v290 = vunpack.c.l.b16 %v203
      %v291 = vunpack.c.l.b16 %v204
      %v292 = vunpack.c.l.b16 %v205
      %v293 = vunpack.c.l.b16 %v206
      %v294 = vpack.c.b16 %v263, %v262
      %v295 = vpack.c.b16 %v265, %v264
      %v296 = vpack.c.b16 %v267, %v266
      %v297 = vpack.c.b16 %v269, %v268
      %v298 = vpack.c.b16 %v271, %v270
      %v299 = vpack.c.b16 %v273, %v272
      %v300 = vpack.c.b16 %v275, %v274
      %v301 = vpack.c.b16 %v277, %v276
      %v302 = vpack.c.b16 %v279, %v278
      %v303 = vpack.c.b16 %v281, %v280
      %v304 = vpack.c.b16 %v283, %v282
      %v305 = vpack.c.b16 %v285, %v284
      %v306 = vpack.c.b16 %v287, %v286
      %v307 = vpack.c.b16 %v289, %v288
      %v308 = vpack.c.b16 %v291, %v290
      %v309 = vpack.c.b16 %v293, %v292
      %v342 = vunpack.c.l.b16 %v207
      %v343 = vunpack.c.l.b16 %v208
      %v344 = vunpack.c.l.b16 %v209
      %v345 = vunpack.c.l.b16 %v210
      %v346 = vunpack.c.l.b16 %v211
      %v347 = vunpack.c.l.b16 %v212
      %v348 = vunpack.c.l.b16 %v213
      %v349 = vunpack.c.l.b16 %v214
      %v350 = vunpack.c.l.b16 %v215
      %v351 = vunpack.c.l.b16 %v216
      %v352 = vunpack.c.l.b16 %v217
      %v353 = vunpack.c.l.b16 %v218
      %v354 = vunpack.c.l.b16 %v219
      %v355 = vunpack.c.l.b16 %v220
      %v356 = vunpack.c.l.b16 %v221
      %v357 = vunpack.c.l.b16 %v222
      %v358 = vpack.c.b16 %v343, %v342
      %v359 = vpack.c.b16 %v345, %v344
      %v360 = vpack.c.b16 %v347, %v346
      %v361 = vpack.c.b16 %v349, %v348
      %v362 = vpack.c.b16 %v351, %v350
      %v363 = vpack.c.b16 %v353, %v352
      %v364 = vpack.c.b16 %v355, %v354
      %v365 = vpack.c.b16 %v357, %v356
      %374 = vmatprep.subr.bf16.mxu0 0
      %375 = vmatpush1.bf16.msra.mxu0 %v365
      %376 = vmatprep.subr.bf16.mxu0 0
      %377 = vmatpush1.bf16.msra.mxu0 %v364
      %378 = vmatprep.subr.bf16.mxu0 0
      %379 = vmatpush1.bf16.msra.mxu0 %v363
      %380 = vmatprep.subr.bf16.mxu0 0
      %381 = vmatpush1.bf16.msra.mxu0 %v362
      %382 = vmatprep.subr.bf16.mxu0 0
      %383 = vmatpush1.bf16.msra.mxu0 %v361
      %384 = vmatprep.subr.bf16.mxu0 0
      %385 = vmatpush1.bf16.msra.mxu0 %v360
      %386 = vmatprep.subr.bf16.mxu0 0
      %387 = vmatpush1.bf16.msra.mxu0 %v359
      %388 = vmatprep.subr.bf16.mxu0 0
      %389 = vmatpush1.bf16.msra.mxu0 %v358
      %390 = vmatprep.subr.bf16.mxu0 0
      %391 = vmatpush2.bf16.msra.mxu0 0
      %392 = vmatprep.subr.bf16.mxu0 0
      %393 = vmatpush2.bf16.msra.mxu0 0
      %394 = vmatprep.subr.bf16.mxu0 0
      %395 = vmatpush2.bf16.msra.mxu0 0
      %396 = vmatprep.subr.bf16.mxu0 0
      %397 = vmatpush2.bf16.msra.mxu0 0
      %398 = vmatprep.subr.bf16.mxu0 0
      %399 = vmatpush2.bf16.msra.mxu0 0
      %400 = vmatprep.subr.bf16.mxu0 0
      %401 = vmatpush2.bf16.msra.mxu0 0
      %402 = vmatprep.subr.bf16.mxu0 0
      %403 = vmatpush2.bf16.msra.mxu0 0
      %404 = vmatprep.subr.bf16.mxu0 0
      %405 = vmatpush2.bf16.msra.mxu0 0
      %406 = vmatprep.mubr.bf16.mxu0 0
      %407 = vmatmul.mubr.bf16.gmra.mxu0 %v294
      %v408 = vpop.f32.mrf.mxu0
      %v409 = vadd.f32 %v228, %v408
      %v410 = vpop.f32.mrf.mxu0
      %v411 = vpop.f32.mrf.mxu0
      %v412 = vadd.f32 %v228, %v411
      %v413 = vpop.f32.mrf.mxu0
      %414 = vmatprep.mubr.bf16.mxu0 0
      %415 = vmatmul.mubr.bf16.gmra.mxu0 %v295
      %v416 = vpop.f32.mrf.mxu0
      %v417 = vadd.f32 %v228, %v416
      %v418 = vpop.f32.mrf.mxu0
      %v419 = vpop.f32.mrf.mxu0
      %v420 = vadd.f32 %v228, %v419
      %v421 = vpop.f32.mrf.mxu0
      %422 = vmatprep.mubr.bf16.mxu0 0
      %423 = vmatmul.mubr.bf16.gmra.mxu0 %v296
      %v424 = vpop.f32.mrf.mxu0
      %v425 = vadd.f32 %v228, %v424
      %v426 = vpop.f32.mrf.mxu0
      %v427 = vpop.f32.mrf.mxu0
      %v428 = vadd.f32 %v228, %v427
      %v429 = vpop.f32.mrf.mxu0
      %430 = vmatprep.mubr.bf16.mxu0 0
      %431 = vmatmul.mubr.bf16.gmra.mxu0 %v297
      %v432 = vpop.f32.mrf.mxu0
      %v433 = vadd.f32 %v228, %v432
      %v434 = vpop.f32.mrf.mxu0
      %v435 = vpop.f32.mrf.mxu0
      %v436 = vadd.f32 %v228, %v435
      %v437 = vpop.f32.mrf.mxu0
      %438 = vmatprep.mubr.bf16.mxu0 0
      %439 = vmatmul.mubr.bf16.gmra.mxu0 %v298
      %v440 = vpop.f32.mrf.mxu0
      %v441 = vadd.f32 %v228, %v440
      %v442 = vpop.f32.mrf.mxu0
      %v443 = vpop.f32.mrf.mxu0
      %v444 = vadd.f32 %v228, %v443
      %v445 = vpop.f32.mrf.mxu0
      %446 = vmatprep.mubr.bf16.mxu0 0
      %447 = vmatmul.mubr.bf16.gmra.mxu0 %v299
      %v448 = vpop.f32.mrf.mxu0
      %v449 = vadd.f32 %v228, %v448
      %v450 = vpop.f32.mrf.mxu0
      %v451 = vpop.f32.mrf.mxu0
      %v452 = vadd.f32 %v228, %v451
      %v453 = vpop.f32.mrf.mxu0
      %454 = vmatprep.mubr.bf16.mxu0 0
      %455 = vmatmul.mubr.bf16.gmra.mxu0 %v300
      %v456 = vpop.f32.mrf.mxu0
      %v457 = vadd.f32 %v228, %v456
      %v458 = vpop.f32.mrf.mxu0
      %v459 = vpop.f32.mrf.mxu0
      %v460 = vadd.f32 %v228, %v459
      %v461 = vpop.f32.mrf.mxu0
      %462 = vmatprep.mubr.bf16.mxu0 0
      %463 = vmatmul.mubr.bf16.gmra.mxu0 %v301
      %v464 = vpop.f32.mrf.mxu0
      %v465 = vadd.f32 %v228, %v464
      %v466 = vpop.f32.mrf.mxu0
      %v467 = vpop.f32.mrf.mxu0
      %v468 = vadd.f32 %v228, %v467
      %v469 = vpop.f32.mrf.mxu0
      %470 = vmatprep.mubr.bf16.mxu0 0
      %471 = vmatmul.mubr.bf16.gmra.mxu0 %v302
      %v472 = vpop.f32.mrf.mxu0
      %v473 = vadd.f32 %v228, %v472
      %v474 = vpop.f32.mrf.mxu0
      %v475 = vpop.f32.mrf.mxu0
      %v476 = vadd.f32 %v228, %v475
      %v477 = vpop.f32.mrf.mxu0
      %478 = vmatprep.mubr.bf16.mxu0 0
      %479 = vmatmul.mubr.bf16.gmra.mxu0 %v303
      %v480 = vpop.f32.mrf.mxu0
      %v481 = vadd.f32 %v228, %v480
      %v482 = vpop.f32.mrf.mxu0
      %v483 = vpop.f32.mrf.mxu0
      %v484 = vadd.f32 %v228, %v483
      %v485 = vpop.f32.mrf.mxu0
      %486 = vmatprep.mubr.bf16.mxu0 0
      %487 = vmatmul.mubr.bf16.gmra.mxu0 %v304
      %v488 = vpop.f32.mrf.mxu0
      %v489 = vadd.f32 %v228, %v488
      %v490 = vpop.f32.mrf.mxu0
      %v491 = vpop.f32.mrf.mxu0
      %v492 = vadd.f32 %v228, %v491
      %v493 = vpop.f32.mrf.mxu0
      %494 = vmatprep.mubr.bf16.mxu0 0
      %495 = vmatmul.mubr.bf16.gmra.mxu0 %v305
      %v496 = vpop.f32.mrf.mxu0
      %v497 = vadd.f32 %v228, %v496
      %v498 = vpop.f32.mrf.mxu0
      %v499 = vpop.f32.mrf.mxu0
      %v500 = vadd.f32 %v228, %v499
      %v501 = vpop.f32.mrf.mxu0
      %502 = vmatprep.mubr.bf16.mxu0 0
      %503 = vmatmul.mubr.bf16.gmra.mxu0 %v306
      %v504 = vpop.f32.mrf.mxu0
      %v505 = vadd.f32 %v228, %v504
      %v506 = vpop.f32.mrf.mxu0
      %v507 = vpop.f32.mrf.mxu0
      %v508 = vadd.f32 %v228, %v507
      %v509 = vpop.f32.mrf.mxu0
      %510 = vmatprep.mubr.bf16.mxu0 0
      %511 = vmatmul.mubr.bf16.gmra.mxu0 %v307
      %v512 = vpop.f32.mrf.mxu0
      %v513 = vadd.f32 %v228, %v512
      %v514 = vpop.f32.mrf.mxu0
      %v515 = vpop.f32.mrf.mxu0
      %v516 = vadd.f32 %v228, %v515
      %v517 = vpop.f32.mrf.mxu0
      %518 = vmatprep.mubr.bf16.mxu0 0
      %519 = vmatmul.mubr.bf16.gmra.mxu0 %v308
      %v520 = vpop.f32.mrf.mxu0
      %v521 = vadd.f32 %v228, %v520
      %v522 = vpop.f32.mrf.mxu0
      %v523 = vpop.f32.mrf.mxu0
      %v524 = vadd.f32 %v228, %v523
      %v525 = vpop.f32.mrf.mxu0
      %526 = vmatprep.mubr.bf16.mxu0 0
      %527 = vmatmul.mubr.bf16.gmra.mxu0 %v309
      %v528 = vpop.f32.mrf.mxu0
      %v529 = vadd.f32 %v228, %v528
      %v530 = vpop.f32.mrf.mxu0
      %v531 = vpop.f32.mrf.mxu0
      %v532 = vadd.f32 %v228, %v531
      %v533 = vpop.f32.mrf.mxu0
      %534 = vdwg.mxu0
      %v535 = vmax.f32 %v409, 0.0
      %v536 = vmax.f32 %v412, 0.0
      %v537 = vmax.f32 %v417, 0.0
      %v538 = vmax.f32 %v420, 0.0
      %v539 = vmax.f32 %v425, 0.0
      %v540 = vmax.f32 %v428, 0.0
      %v541 = vmax.f32 %v433, 0.0
      %v542 = vmax.f32 %v436, 0.0
      %v543 = vmax.f32 %v441, 0.0
      %v544 = vmax.f32 %v444, 0.0
      %v545 = vmax.f32 %v449, 0.0
      %v546 = vmax.f32 %v452, 0.0
      %v547 = vmax.f32 %v457, 0.0
      %v548 = vmax.f32 %v460, 0.0
      %v549 = vmax.f32 %v465, 0.0
      %v550 = vmax.f32 %v468, 0.0
      %v551 = vmax.f32 %v473, 0.0
      %v552 = vmax.f32 %v476, 0.0
      %v553 = vmax.f32 %v481, 0.0
      %v554 = vmax.f32 %v484, 0.0
      %v555 = vmax.f32 %v489, 0.0
      %v556 = vmax.f32 %v492, 0.0
      %v557 = vmax.f32 %v497, 0.0
      %v558 = vmax.f32 %v500, 0.0
      %v559 = vmax.f32 %v505, 0.0
      %v560 = vmax.f32 %v508, 0.0
      %v561 = vmax.f32 %v513, 0.0
      %v562 = vmax.f32 %v516, 0.0
      %v563 = vmax.f32 %v521, 0.0
      %v564 = vmax.f32 %v524, 0.0
      %v565 = vmax.f32 %v529, 0.0
      %v566 = vmax.f32 %v532, 0.0
      %v567 = vpack.c.bf16 %v536, %v535
      %v568 = vpack.c.bf16 %v538, %v537
      %v569 = vpack.c.bf16 %v540, %v539
      %v570 = vpack.c.bf16 %v542, %v541
      %v571 = vpack.c.bf16 %v544, %v543
      %v572 = vpack.c.bf16 %v546, %v545
      %v573 = vpack.c.bf16 %v548, %v547
      %v574 = vpack.c.bf16 %v550, %v549
      %v575 = vpack.c.bf16 %v552, %v551
      %v576 = vpack.c.bf16 %v554, %v553
      %v577 = vpack.c.bf16 %v556, %v555
      %v578 = vpack.c.bf16 %v558, %v557
      %v579 = vpack.c.bf16 %v560, %v559
      %v580 = vpack.c.bf16 %v562, %v561
      %v581 = vpack.c.bf16 %v564, %v563
      %v582 = vpack.c.bf16 %v566, %v565
      %v599 = vunpack.c.l.b16 %v567
      %v600 = vunpack.c.h.b16 %v567
      %v601 = vunpack.c.l.b16 %v568
      %v602 = vunpack.c.h.b16 %v568
      %v603 = vunpack.c.l.b16 %v569
      %v604 = vunpack.c.h.b16 %v569
      %v605 = vunpack.c.l.b16 %v570
      %v606 = vunpack.c.h.b16 %v570
      %v607 = vunpack.c.l.b16 %v571
      %v608 = vunpack.c.h.b16 %v571
      %v609 = vunpack.c.l.b16 %v572
      %v610 = vunpack.c.h.b16 %v572
      %v611 = vunpack.c.l.b16 %v573
      %v612 = vunpack.c.h.b16 %v573
      %v613 = vunpack.c.l.b16 %v574
      %v614 = vunpack.c.h.b16 %v574
      %v615 = vunpack.c.l.b16 %v575
      %v616 = vunpack.c.h.b16 %v575
      %v617 = vunpack.c.l.b16 %v576
      %v618 = vunpack.c.h.b16 %v576
      %v619 = vunpack.c.l.b16 %v577
      %v620 = vunpack.c.h.b16 %v577
      %v621 = vunpack.c.l.b16 %v578
      %v622 = vunpack.c.h.b16 %v578
      %v623 = vunpack.c.l.b16 %v579
      %v624 = vunpack.c.h.b16 %v579
      %v625 = vunpack.c.l.b16 %v580
      %v626 = vunpack.c.h.b16 %v580
      %v627 = vunpack.c.l.b16 %v581
      %v628 = vunpack.c.h.b16 %v581
      %v629 = vunpack.c.l.b16 %v582
      %v630 = vunpack.c.h.b16 %v582
      %v631 = vpack.c.b16 %v599, %v599
      %v632 = vpack.c.b16 %v600, %v600
      %v633 = vpack.c.b16 %v601, %v601
      %v634 = vpack.c.b16 %v602, %v602
      %v635 = vpack.c.b16 %v603, %v603
      %v636 = vpack.c.b16 %v604, %v604
      %v637 = vpack.c.b16 %v605, %v605
      %v638 = vpack.c.b16 %v606, %v606
      %v639 = vpack.c.b16 %v607, %v607
      %v640 = vpack.c.b16 %v608, %v608
      %v641 = vpack.c.b16 %v609, %v609
      %v642 = vpack.c.b16 %v610, %v610
      %v643 = vpack.c.b16 %v611, %v611
      %v644 = vpack.c.b16 %v612, %v612
      %v645 = vpack.c.b16 %v613, %v613
      %v646 = vpack.c.b16 %v614, %v614
      %v647 = vpack.c.b16 %v615, %v615
      %v648 = vpack.c.b16 %v616, %v616
      %v649 = vpack.c.b16 %v617, %v617
      %v650 = vpack.c.b16 %v618, %v618
      %v651 = vpack.c.b16 %v619, %v619
      %v652 = vpack.c.b16 %v620, %v620
      %v653 = vpack.c.b16 %v621, %v621
      %v654 = vpack.c.b16 %v622, %v622
      %v655 = vpack.c.b16 %v623, %v623
      %v656 = vpack.c.b16 %v624, %v624
      %v657 = vpack.c.b16 %v625, %v625
      %v658 = vpack.c.b16 %v626, %v626
      %v659 = vpack.c.b16 %v627, %v627
      %v660 = vpack.c.b16 %v628, %v628
      %v661 = vpack.c.b16 %v629, %v629
      %v662 = vpack.c.b16 %v630, %v630
      %695 = vst [vmem:[%s172] sm:$0xf] %v631
      %696 = vst [vmem:[%s172 + $0x4] sm:$0xf] %v632
      %697 = vst [vmem:[%s172 + $0x8] sm:$0xf] %v633
      %698 = vst [vmem:[%s172 + $0xc] sm:$0xf] %v634
      %699 = vst [vmem:[%s172 + $0x10] sm:$0xf] %v635
      %700 = vst [vmem:[%s172 + $0x14] sm:$0xf] %v636
      %701 = vst [vmem:[%s172 + $0x18] sm:$0xf] %v637
      %702 = vst [vmem:[%s172 + $0x1c] sm:$0xf] %v638
      %703 = vst [vmem:[%s172 + $0x20] sm:$0xf] %v639
      %704 = vst [vmem:[%s172 + $0x24] sm:$0xf] %v640
      %705 = vst [vmem:[%s172 + $0x28] sm:$0xf] %v641
      %706 = vst [vmem:[%s172 + $0x2c] sm:$0xf] %v642
      %707 = vst [vmem:[%s172 + $0x30] sm:$0xf] %v643
      %708 = vst [vmem:[%s172 + $0x34] sm:$0xf] %v644
      %709 = vst [vmem:[%s172 + $0x38] sm:$0xf] %v645
      %710 = vst [vmem:[%s172 + $0x3c] sm:$0xf] %v646
      %711 = vst [vmem:[%s172 + $0x40] sm:$0xf] %v647
      %712 = vst [vmem:[%s172 + $0x44] sm:$0xf] %v648
      %713 = vst [vmem:[%s172 + $0x48] sm:$0xf] %v649
      %714 = vst [vmem:[%s172 + $0x4c] sm:$0xf] %v650
      %715 = vst [vmem:[%s172 + $0x50] sm:$0xf] %v651
      %716 = vst [vmem:[%s172 + $0x54] sm:$0xf] %v652
      %717 = vst [vmem:[%s172 + $0x58] sm:$0xf] %v653
      %718 = vst [vmem:[%s172 + $0x5c] sm:$0xf] %v654
      %719 = vst [vmem:[%s172 + $0x60] sm:$0xf] %v655
      %720 = vst [vmem:[%s172 + $0x64] sm:$0xf] %v656
      %721 = vst [vmem:[%s172 + $0x68] sm:$0xf] %v657
      %722 = vst [vmem:[%s172 + $0x6c] sm:$0xf] %v658
      %723 = vst [vmem:[%s172 + $0x70] sm:$0xf] %v659
      %724 = vst [vmem:[%s172 + $0x74] sm:$0xf] %v660
      %725 = vst [vmem:[%s172 + $0x78] sm:$0xf] %v661
      %726 = vst [vmem:[%s172 + $0x7c] sm:$0xf] %v662
      %s727 = smul.u32 32, %s14
      %p728 = scmp.lt.s32.totalorder %s727, 63
      %s729 = scalar_select %p728, %s727, 63
      %s730 = smul.addr %s729, 4
      %s731 = scalar_lea.vmem %s3, %s730
      // Predicated region
      $region33: #{bottleneck_up_forward.5} parent=31 // pred_check
        %p732 = pneg %p100
      $region34: #{bottleneck_up_forward.5} parent=31 // pred_check_branch
        %734 = sbr.rel (%p732) target = $region36
      $region35: #{bottleneck_up_forward.5} parent=31 // pred_region
        %s735 = smul.u32 32, %s14
      $region36: #{bottleneck_up_forward.5} parent=31 // pred_fallthru
        _
    $region32: #{bottleneck_up_forward.5} parent=5 // pred_fallthru
      _
    %p736 = scmp.le.s32.totalorder 2, %s9
    // Predicated region
    $region37: #{bottleneck_up_forward.5} parent=5 // pred_check
      %p737 = pneg %p736
    $region38: #{bottleneck_up_forward.5} parent=5 // pred_check_branch
      %739 = sbr.rel (%p737) target = $region40
    $region39: #{bottleneck_up_forward.5} parent=5 // pred_region
      %s740 = ssub.s32 %s9, 2
      // Predicated region
      $region41: #{bottleneck_up_forward.5} parent=39 // pred_check
        %p741 = pneg %p106
      $region42: #{bottleneck_up_forward.5} parent=39 // pred_check_branch
        %743 = sbr.rel (%p741) target = $region44
      $region43: #{bottleneck_up_forward.5} parent=39 // pred_region
        %s744 = smul.u32 32, %s15
        %p745 = scmp.lt.s32.totalorder %s744, 63
        %s746 = scalar_select %p745, %s744, 63
        %s747 = smul.addr %s746, 4
        %s748 = scalar_lea.vmem %s3, %s747
      $region44: #{bottleneck_up_forward.5} parent=39 // pred_fallthru
        _
    $region40: #{bottleneck_up_forward.5} parent=5 // pred_fallthru
      _
  $region6: #{bottleneck_up_forward.5} parent=0 // loop_footer
    %s13 = sadd.s32 1, %s9
  $region7: #{bottleneck_up_forward.5} parent=0 // loop_footer_branch
    %8 = sbr.rel target = $region3
  $region8: #{bottleneck_up_forward.5} parent=0 // loop_exit
    _

// kernel: bottleneck_up_forward.7
$region0: #{bottleneck_up_forward.7}
  #allocation0 [shape = 'u32[]', space=smem, size = 0x4, offset = 0x4, fixed_abs, tag = 'smem constant byte address 0x4 - core index']
  #allocation1 [shape = 'u32[144,128]{1,0:T(1,128)}', space=vmem, size = 0x12000, scoped, tag = 'internal scratch']
  %s0 = inlined_call_operand.vmem [shape: bf16[1922,32], index: 0, kind: input, shape index: {}]
  %s1 = inlined_call_operand.vmem [shape: bf16[32,64], index: 1, kind: input, shape index: {}]
  %s2 = inlined_call_operand.vmem [shape: f32[1,64], index: 2, kind: input, shape index: {}]
  %s3 = inlined_call_operand.vmem [shape: f32[1922,64], index: 3, kind: input, shape index: {}]
  %s4 = inlined_call_operand.vmem [shape: f32[1922,64], index: 4, kind: output, shape index: {}]
  %s5 = sld [smem:[#allocation0]]
  $region97: #{bottleneck_up_forward.7} parent=0
    _
  %s7 = ssub.s32 1, %s5
  %s8 = scalar_select 0, %s7, %s5
  $region1: #{bottleneck_up_forward.7} parent=0
    #allocation2 [shape = 'u8[999424]{0}', space=vmem, size = 0xf4000, scoped, tag = 'output window, operand 0']
    loop: start=0, step=1, limit=4
    $region2: #{bottleneck_up_forward.7} parent=1 // loop_pre_header
      _
    $region3: #{bottleneck_up_forward.7} parent=1 // loop_header
      %s10 = sphi 0, %s14
      %p11 = scmp.ge.s32.totalorder %s10, 4
      %s20 = sphi 0, %s22
      %s23 = sphi 0, %s20
      %s24 = sphi 0, %s23
      %s40 = sphi 0, %s24
      %s44 = sphi 0, %s44
      %s46 = sphi 0, %s44
      %s47 = sphi 0, %s46
      %s61 = sphi 0, %s47
      %s65 = sphi 0, %s65
      %s67 = sphi 0, %s65
      %s68 = sphi 0, %s67
      %s82 = sphi 0, %s68
      %s88 = sphi 0, %s90
      %s91 = sphi 0, %s88
      %s92 = sphi 0, %s91
      %s108 = sphi 0, %s92
      %s114 = sphi 0, %s116
      %s117 = sphi 0, %s114
      %s118 = sphi 0, %s117
      %s134 = sphi 0, %s118
    $region4: #{bottleneck_up_forward.7} parent=1 // loop_header_branch
      %13 = sbr.rel (%p11) target = $region8
    $region5: #{bottleneck_up_forward.7} parent=1 // loop_body
      %s15 = ssub.s32 %s10, 1
      %s16 = ssub.s32 %s10, 2
      %s17 = sadd.s32 %s10, 1
      %s18 = ssub.s32 %s10, %s17
      %p19 = scmp.eq.s32.totalorder %s18, 0
      %s21 = sadd.s32 %s20, 1
      %s22 = scalar_select %p19, %s20, %s21
      %p25 = pneg %p19
      %p26 = scmp.eq.s32.totalorder %s10, 1
      %p27 = por %p25, %p26
      %p28 = scmp.ne.s32.totalorder %s20, %s23
      %p29 = scmp.eq.s32.totalorder %s10, 0
      %p30 = por %p28, %p29
      %p31 = scmp.ne.s32.totalorder %s20, %s23
      %p32 = scmp.eq.s32.totalorder %s15, 1
      %p33 = por %p31, %p32
      %p34 = scmp.ne.s32.totalorder %s23, %s24
      %p35 = scmp.eq.s32.totalorder %s15, 0
      %p36 = por %p34, %p35
      %p37 = scmp.ne.s32.totalorder %s23, %s24
      %p38 = scmp.eq.s32.totalorder %s16, 1
      %p39 = por %p37, %p38
      %p41 = scmp.ne.s32.totalorder %s24, %s40
      %p42 = scmp.eq.s32.totalorder %s16, 0
      %p43 = por %p41, %p42
      %s45 = sadd.s32 %s44, 1
      %p48 = scmp.eq.s32.totalorder %s10, 1
      %p49 = scmp.ne.s32.totalorder %s44, %s46
      %p50 = scmp.eq.s32.totalorder %s10, 0
      %p51 = por %p49, %p50
      %p52 = scmp.ne.s32.totalorder %s44, %s46
      %p53 = scmp.eq.s32.totalorder %s15, 1
      %p54 = por %p52, %p53
      %p55 = scmp.ne.s32.totalorder %s46, %s47
      %p56 = scmp.eq.s32.totalorder %s15, 0
      %p57 = por %p55, %p56
      %p58 = scmp.ne.s32.totalorder %s46, %s47
      %p59 = scmp.eq.s32.totalorder %s16, 1
      %p60 = por %p58, %p59
      %p62 = scmp.ne.s32.totalorder %s47, %s61
      %p63 = scmp.eq.s32.totalorder %s16, 0
      %p64 = por %p62, %p63
      %s66 = sadd.s32 %s65, 1
      %p69 = scmp.eq.s32.totalorder %s10, 1
      %p70 = scmp.ne.s32.totalorder %s65, %s67
      %p71 = scmp.eq.s32.totalorder %s10, 0
      %p72 = por %p70, %p71
      %p73 = scmp.ne.s32.totalorder %s65, %s67
      %p74 = scmp.eq.s32.totalorder %s15, 1
      %p75 = por %p73, %p74
      %p76 = scmp.ne.s32.totalorder %s67, %s68
      %p77 = scmp.eq.s32.totalorder %s15, 0
      %p78 = por %p76, %p77
      %p79 = scmp.ne.s32.totalorder %s67, %s68
      %p80 = scmp.eq.s32.totalorder %s16, 1
      %p81 = por %p79, %p80
      %p83 = scmp.ne.s32.totalorder %s68, %s82
      %p84 = scmp.eq.s32.totalorder %s16, 0
      %p85 = por %p83, %p84
      %s86 = ssub.s32 %s10, %s17
      %p87 = scmp.eq.s32.totalorder %s86, 0
      %s89 = sadd.s32 %s88, 1
      %s90 = scalar_select %p87, %s88, %s89
      %p93 = pneg %p87
      %p94 = scmp.eq.s32.totalorder %s10, 1
      %p95 = por %p93, %p94
      %p96 = scmp.ne.s32.totalorder %s88, %s91
      %p97 = scmp.eq.s32.totalorder %s10, 0
      %p98 = por %p96, %p97
      %p99 = scmp.ne.s32.totalorder %s88, %s91
      %p100 = scmp.eq.s32.totalorder %s15, 1
      %p101 = por %p99, %p100
      %p102 = scmp.ne.s32.totalorder %s91, %s92
      %p103 = scmp.eq.s32.totalorder %s15, 0
      %p104 = por %p102, %p103
      %p105 = scmp.ne.s32.totalorder %s91, %s92
      %p106 = scmp.eq.s32.totalorder %s16, 1
      %p107 = por %p105, %p106
      %p109 = scmp.ne.s32.totalorder %s92, %s108
      %p110 = scmp.eq.s32.totalorder %s16, 0
      %p111 = por %p109, %p110
      %s112 = ssub.s32 %s10, %s17
      %p113 = scmp.eq.s32.totalorder %s112, 0
      %s115 = sadd.s32 %s114, 1
      %s116 = scalar_select %p113, %s114, %s115
      %p119 = pneg %p113
      %p120 = scmp.eq.s32.totalorder %s10, 1
      %p121 = por %p119, %p120
      %p122 = scmp.ne.s32.totalorder %s114, %s117
      %p123 = scmp.eq.s32.totalorder %s10, 0
      %p124 = por %p122, %p123
      %p125 = scmp.ne.s32.totalorder %s114, %s117
      %p126 = scmp.eq.s32.totalorder %s15, 1
      %p127 = por %p125, %p126
      %p128 = scmp.ne.s32.totalorder %s117, %s118
      %p129 = scmp.eq.s32.totalorder %s15, 0
      %p130 = por %p128, %p129
      %p131 = scmp.ne.s32.totalorder %s117, %s118
      %p132 = scmp.eq.s32.totalorder %s16, 1
      %p133 = por %p131, %p132
      %p135 = scmp.ne.s32.totalorder %s118, %s134
      %p136 = scmp.eq.s32.totalorder %s16, 0
      %p137 = por %p135, %p136
      %p138 = scmp.le.s32.totalorder 1, %s10
      %p139 = scmp.lt.s32.totalorder %s10, 3
      %p140 = pnand %p138, %p139
      %p141 = pneg %p140
      // Predicated region
      $region9: #{bottleneck_up_forward.7} parent=5 // pred_check
        _
      $region10: #{bottleneck_up_forward.7} parent=5 // pred_check_branch
        %143 = sbr.rel (%p140) target = $region12
      $region11: #{bottleneck_up_forward.7} parent=5 // pred_region
        %s144 = ssub.s32 %s10, 1
        // Predicated region
        $region13: #{bottleneck_up_forward.7} parent=11 // pred_check
          %p145 = pneg %p57
        $region14: #{bottleneck_up_forward.7} parent=11 // pred_check_branch
          %147 = sbr.rel (%p145) target = $region16
        $region15: #{bottleneck_up_forward.7} parent=11 // pred_region
          _
        $region16: #{bottleneck_up_forward.7} parent=11 // pred_fallthru
          _
        // Predicated region
        $region17: #{bottleneck_up_forward.7} parent=11 // pred_check
          %p148 = pneg %p78
        $region18: #{bottleneck_up_forward.7} parent=11 // pred_check_branch
          %150 = sbr.rel (%p148) target = $region20
        $region19: #{bottleneck_up_forward.7} parent=11 // pred_region
          _
        $region20: #{bottleneck_up_forward.7} parent=11 // pred_fallthru
          _
      $region12: #{bottleneck_up_forward.7} parent=5 // pred_fallthru
        _
      %p151 = scmp.lt.s32.totalorder %s10, 2
      // Predicated region
      $region21: #{bottleneck_up_forward.7} parent=5 // pred_check
        %p152 = pneg %p151
      $region22: #{bottleneck_up_forward.7} parent=5 // pred_check_branch
        %154 = sbr.rel (%p152) target = $region24
      $region23: #{bottleneck_up_forward.7} parent=5 // pred_region
        // Predicated region
        $region25: #{bottleneck_up_forward.7} parent=23 // pred_check
          %p155 = pneg %p30
        $region26: #{bottleneck_up_forward.7} parent=23 // pred_check_branch
          %157 = sbr.rel (%p155) target = $region28
        $region27: #{bottleneck_up_forward.7} parent=23 // pred_region
          %s158 = smul.u32 122, %s10
          %s159 = ssub.s32 241, %s158
          %p160 = scmp.lt.s32.totalorder %s159, 122
          %s161 = scalar_select %p160, %s159, 122
          %s162 = smul.u32 64, %s161
          %p163 = scmp.lt.s32.totalorder %s158, 240
          %s164 = scalar_select %p163, %s158, 240
          %s165 = smul.addr %s164, 4
          %s166 = scalar_lea.vmem %s0, %s165
          %s167 = smul.u32 122, %s10
          %s168 = ssub.s32 241, %s167
          %p169 = scmp.lt.s32.totalorder %s168, 122
          %s170 = scalar_select %p169, %s168, 122
          %s171 = smul.u32 64, %s170
        $region28: #{bottleneck_up_forward.7} parent=23 // pred_fallthru
          _
        // Predicated region
        $region29: #{bottleneck_up_forward.7} parent=23 // pred_check
          %p172 = pneg %p98
        $region30: #{bottleneck_up_forward.7} parent=23 // pred_check_branch
          %174 = sbr.rel (%p172) target = $region32
        $region31: #{bottleneck_up_forward.7} parent=23 // pred_region
          %s175 = smul.u32 122, %s10
          %s176 = ssub.s32 241, %s175
          %p177 = scmp.lt.s32.totalorder %s176, 122
          %s178 = scalar_select %p177, %s176, 122
          %s179 = smul.u32 128, %s178
          %p180 = scmp.lt.s32.totalorder %s175, 240
          %s181 = scalar_select %p180, %s175, 240
          %s182 = smul.addr %s181, 8
          %s183 = scalar_lea.vmem %s3, %s182
          %s184 = smul.u32 122, %s10
          %s185 = ssub.s32 241, %s184
          %p186 = scmp.lt.s32.totalorder %s185, 122
          %s187 = scalar_select %p186, %s185, 122
          %s188 = smul.u32 128, %s187
        $region32: #{bottleneck_up_forward.7} parent=23 // pred_fallthru
          _
      $region24: #{bottleneck_up_forward.7} parent=5 // pred_fallthru
        _
      %p189 = scmp.le.s32.totalorder 1, %s10
      %p190 = scmp.lt.s32.totalorder %s10, 3
      %p191 = pnand %p189, %p190
      %p192 = pneg %p191
      // Predicated region
      $region33: #{bottleneck_up_forward.7} parent=5 // pred_check
        _
      $region34: #{bottleneck_up_forward.7} parent=5 // pred_check_branch
        %194 = sbr.rel (%p191) target = $region36
      $region35: #{bottleneck_up_forward.7} parent=5 // pred_region
        %s195 = ssub.s32 %s10, 1
        %s196 = smul.u32 122, %s15
        %s197 = ssub.s32 241, %s196
        %p198 = scmp.lt.s32.totalorder %s197, 122
        %s199 = scalar_select %p198, %s197, 122
        %s200 = smul.u32 64, %s199
        %p201 = scmp.lt.s32.totalorder %s196, 240
        %s202 = scalar_select %p201, %s196, 240
        %s203 = smul.addr %s202, 4
        %s204 = scalar_lea.vmem %s0, %s203
        %p205 = pneg %p36
        %p206 = pneg %p33
        %p207 = pneg %p57
        %p208 = pneg %p54
        %p209 = pneg %p78
        %p210 = pneg %p75
        %s211 = smul.u32 122, %s15
        %s212 = ssub.s32 241, %s211
        %p213 = scmp.lt.s32.totalorder %s212, 122
        %s214 = scalar_select %p213, %s212, 122
        %s215 = smul.u32 128, %s214
        %p216 = scmp.lt.s32.totalorder %s211, 240
        %s217 = scalar_select %p216, %s211, 240
        %s218 = smul.addr %s217, 8
        %s219 = scalar_lea.vmem %s3, %s218
        %p220 = pneg %p104
        %p221 = pneg %p101
        %p222 = pneg %p130
        %p223 = pneg %p127
        %s224 = sand.u32 %s117, 1
        %s225 = sand.u32 %s117, 1
        %s226 = smul.addr %s225, 976
        %s227 = scalar_lea.vmem [#allocation2], %s226
        %s228 = smul.u32 122, %s15
        %s229 = ssub.s32 241, %s228
        %p230 = scmp.lt.s32.totalorder %s229, 122
        %s231 = scalar_select %p230, %s229, 122
        %s232 = smul.u32 64, %s231
        %p233 = scmp.lt.s32.totalorder %s228, 240
        %s234 = scalar_select %p233, %s228, 240
        %s235 = smul.addr %s234, 4
        %s236 = scalar_lea.vmem %s0, %s235
        %s237 = smul.u32 122, %s15
        %s238 = ssub.s32 241, %s237
        %p239 = scmp.lt.s32.totalorder %s238, 122
        %s240 = scalar_select %p239, %s238, 122
        %s241 = smul.u32 64, %s240
        %s242 = smul.u32 122, %s15
        %s243 = ssub.s32 241, %s242
        %p244 = scmp.lt.s32.totalorder %s243, 122
        %s245 = scalar_select %p244, %s243, 122
        %s246 = smul.u32 128, %s245
        %p247 = scmp.lt.s32.totalorder %s242, 240
        %s248 = scalar_select %p247, %s242, 240
        %s249 = smul.addr %s248, 8
        %s250 = scalar_lea.vmem %s3, %s249
        %s251 = smul.u32 122, %s15
        %s252 = ssub.s32 241, %s251
        %p253 = scmp.lt.s32.totalorder %s252, 122
        %s254 = scalar_select %p253, %s252, 122
        %s255 = smul.u32 128, %s254
        %s256 = smul.u32 122, %s15
        %s257 = ssub.s32 241, %s256
        %p258 = scmp.lt.s32.totalorder %s257, 122
        %s259 = scalar_select %p258, %s257, 122
        %s260 = smul.u32 128, %s259
        %v262 = vld [vmem:[%s236] sm:$0xf]
        %v263 = vld [vmem:[%s236 + $0x4] sm:$0xf]
        %v264 = vld [vmem:[%s236 + $0x8] sm:$0xf]
        %v265 = vld [vmem:[%s236 + $0xc] sm:$0xf]
        %v266 = vld [vmem:[%s236 + $0x10] sm:$0xf]
        %v267 = vld [vmem:[%s236 + $0x14] sm:$0xf]
        %v268 = vld [vmem:[%s236 + $0x18] sm:$0xf]
        %v269 = vld [vmem:[%s236 + $0x1c] sm:$0xf]
        %v270 = vld [vmem:[%s236 + $0x20] sm:$0xf]
        %v271 = vld [vmem:[%s236 + $0x24] sm:$0xf]
        %v272 = vld [vmem:[%s236 + $0x28] sm:$0xf]
        %v273 = vld [vmem:[%s236 + $0x2c] sm:$0xf]
        %v274 = vld [vmem:[%s236 + $0x30] sm:$0xf]
        %v275 = vld [vmem:[%s236 + $0x34] sm:$0xf]
        %v276 = vld [vmem:[%s236 + $0x38] sm:$0xf]
        %v277 = vld [vmem:[%s236 + $0x3c] sm:$0xf]
        %v278 = vld [vmem:[%s236 + $0x40] sm:$0xf]
        %v279 = vld [vmem:[%s236 + $0x44] sm:$0xf]
        %v280 = vld [vmem:[%s236 + $0x48] sm:$0xf]
        %v281 = vld [vmem:[%s236 + $0x4c] sm:$0xf]
        %v282 = vld [vmem:[%s236 + $0x50] sm:$0xf]
        %v283 = vld [vmem:[%s236 + $0x54] sm:$0xf]
        %v284 = vld [vmem:[%s236 + $0x58] sm:$0xf]
        %v285 = vld [vmem:[%s236 + $0x5c] sm:$0xf]
        %v286 = vld [vmem:[%s236 + $0x60] sm:$0xf]
        %v287 = vld [vmem:[%s236 + $0x64] sm:$0xf]
        %v288 = vld [vmem:[%s236 + $0x68] sm:$0xf]
        %v289 = vld [vmem:[%s236 + $0x6c] sm:$0xf]
        %v290 = vld [vmem:[%s236 + $0x70] sm:$0xf]
        %v291 = vld [vmem:[%s236 + $0x74] sm:$0xf]
        %v292 = vld [vmem:[%s236 + $0x78] sm:$0xf]
        %v293 = vld [vmem:[%s236 + $0x7c] sm:$0xf]
        %v294 = vld [vmem:[%s236 + $0x80] sm:$0xf]
        %v295 = vld [vmem:[%s236 + $0x84] sm:$0xf]
        %v296 = vld [vmem:[%s236 + $0x88] sm:$0xf]
        %v297 = vld [vmem:[%s236 + $0x8c] sm:$0xf]
        %v298 = vld [vmem:[%s236 + $0x90] sm:$0xf]
        %v299 = vld [vmem:[%s236 + $0x94] sm:$0xf]
        %v300 = vld [vmem:[%s236 + $0x98] sm:$0xf]
        %v301 = vld [vmem:[%s236 + $0x9c] sm:$0xf]
        %v302 = vld [vmem:[%s236 + $0xa0] sm:$0xf]
        %v303 = vld [vmem:[%s236 + $0xa4] sm:$0xf]
        %v304 = vld [vmem:[%s236 + $0xa8] sm:$0xf]
        %v305 = vld [vmem:[%s236 + $0xac] sm:$0xf]
        %v306 = vld [vmem:[%s236 + $0xb0] sm:$0xf]
        %v307 = vld [vmem:[%s236 + $0xb4] sm:$0xf]
        %v308 = vld [vmem:[%s236 + $0xb8] sm:$0xf]
        %v309 = vld [vmem:[%s236 + $0xbc] sm:$0xf]
        %v310 = vld [vmem:[%s236 + $0xc0] sm:$0xf]
        %v311 = vld [vmem:[%s236 + $0xc4] sm:$0xf]
        %v312 = vld [vmem:[%s236 + $0xc8] sm:$0xf]
        %v313 = vld [vmem:[%s236 + $0xcc] sm:$0xf]
        %v314 = vld [vmem:[%s236 + $0xd0] sm:$0xf]
        %v315 = vld [vmem:[%s236 + $0xd4] sm:$0xf]
        %v316 = vld [vmem:[%s236 + $0xd8] sm:$0xf]
        %v317 = vld [vmem:[%s236 + $0xdc] sm:$0xf]
        %v318 = vld [vmem:[%s236 + $0xe0] sm:$0xf]
        %v319 = vld [vmem:[%s236 + $0xe4] sm:$0xf]
        %v320 = vld [vmem:[%s236 + $0xe8] sm:$0xf]
        %v321 = vld [vmem:[%s236 + $0xec] sm:$0xf]
        %v322 = vld [vmem:[%s236 + $0xf0] sm:$0xf]
        %v323 = vld [vmem:[%s236 + $0xf4] sm:$0xf]
        %v324 = vld [vmem:[%s236 + $0xf8] sm:$0xf]
        %v325 = vld [vmem:[%s236 + $0xfc] sm:$0xf]
        %v326 = vld [vmem:[%s236 + $0x100] sm:$0xf]
        %v327 = vld [vmem:[%s236 + $0x104] sm:$0xf]
        %v328 = vld [vmem:[%s236 + $0x108] sm:$0xf]
        %v329 = vld [vmem:[%s236 + $0x10c] sm:$0xf]
        %v330 = vld [vmem:[%s236 + $0x110] sm:$0xf]
        %v331 = vld [vmem:[%s236 + $0x114] sm:$0xf]
        %v332 = vld [vmem:[%s236 + $0x118] sm:$0xf]
        %v333 = vld [vmem:[%s236 + $0x11c] sm:$0xf]
        %v334 = vld [vmem:[%s236 + $0x120] sm:$0xf]
        %v335 = vld [vmem:[%s236 + $0x124] sm:$0xf]
        %v336 = vld [vmem:[%s236 + $0x128] sm:$0xf]
        %v337 = vld [vmem:[%s236 + $0x12c] sm:$0xf]
        %v338 = vld [vmem:[%s236 + $0x130] sm:$0xf]
        %v339 = vld [vmem:[%s236 + $0x134] sm:$0xf]
        %v340 = vld [vmem:[%s236 + $0x138] sm:$0xf]
        %v341 = vld [vmem:[%s236 + $0x13c] sm:$0xf]
        %v342 = vld [vmem:[%s236 + $0x140] sm:$0xf]
        %v343 = vld [vmem:[%s236 + $0x144] sm:$0xf]
        %v344 = vld [vmem:[%s236 + $0x148] sm:$0xf]
        %v345 = vld [vmem:[%s236 + $0x14c] sm:$0xf]
        %v346 = vld [vmem:[%s236 + $0x150] sm:$0xf]
        %v347 = vld [vmem:[%s236 + $0x154] sm:$0xf]
        %v348 = vld [vmem:[%s236 + $0x158] sm:$0xf]
        %v349 = vld [vmem:[%s236 + $0x15c] sm:$0xf]
        %v350 = vld [vmem:[%s236 + $0x160] sm:$0xf]
        %v351 = vld [vmem:[%s236 + $0x164] sm:$0xf]
        %v352 = vld [vmem:[%s236 + $0x168] sm:$0xf]
        %v353 = vld [vmem:[%s236 + $0x16c] sm:$0xf]
        %v354 = vld [vmem:[%s236 + $0x170] sm:$0xf]
        %v355 = vld [vmem:[%s236 + $0x174] sm:$0xf]
        %v356 = vld [vmem:[%s236 + $0x178] sm:$0xf]
        %v357 = vld [vmem:[%s236 + $0x17c] sm:$0xf]
        %v358 = vld [vmem:[%s236 + $0x180] sm:$0xf]
        %v359 = vld [vmem:[%s236 + $0x184] sm:$0xf]
        %v360 = vld [vmem:[%s236 + $0x188] sm:$0xf]
        %v361 = vld [vmem:[%s236 + $0x18c] sm:$0xf]
        %v362 = vld [vmem:[%s236 + $0x190] sm:$0xf]
        %v363 = vld [vmem:[%s236 + $0x194] sm:$0xf]
        %v364 = vld [vmem:[%s236 + $0x198] sm:$0xf]
        %v365 = vld [vmem:[%s236 + $0x19c] sm:$0xf]
        %v366 = vld [vmem:[%s236 + $0x1a0] sm:$0xf]
        %v367 = vld [vmem:[%s236 + $0x1a4] sm:$0xf]
        %v368 = vld [vmem:[%s236 + $0x1a8] sm:$0xf]
        %v369 = vld [vmem:[%s236 + $0x1ac] sm:$0xf]
        %v370 = vld [vmem:[%s236 + $0x1b0] sm:$0xf]
        %v371 = vld [vmem:[%s236 + $0x1b4] sm:$0xf]
        %v372 = vld [vmem:[%s236 + $0x1b8] sm:$0xf]
        %v373 = vld [vmem:[%s236 + $0x1bc] sm:$0xf]
        %v374 = vld [vmem:[%s236 + $0x1c0] sm:$0xf]
        %v375 = vld [vmem:[%s236 + $0x1c4] sm:$0xf]
        %v376 = vld [vmem:[%s236 + $0x1c8] sm:$0xf]
        %v377 = vld [vmem:[%s236 + $0x1cc] sm:$0xf]
        %v378 = vld [vmem:[%s236 + $0x1d0] sm:$0xf]
        %v379 = vld [vmem:[%s236 + $0x1d4] sm:$0xf]
        %v380 = vld [vmem:[%s236 + $0x1d8] sm:$0xf]
        %v381 = vld [vmem:[%s236 + $0x1dc] sm:$0xf]
        %v382 = vld [vmem:[%s236 + $0x1e0] sm:$0xf]
        %v383 = vld [vmem:[%s236 + $0x1e4] sm:$0xf]
        %v384 = vld [vmem:[%s1] sm:$0xf]
        %v385 = vld [vmem:[%s1 + $0x4] sm:$0xf]
        %v386 = vld [vmem:[%s1 + $0x8] sm:$0xf]
        %v387 = vld [vmem:[%s1 + $0xc] sm:$0xf]
        %v388 = vld [vmem:[%s2] sm:$0x1]
        %v390 = vlaneseq
        %v391 = vshrl.u32 %v390, 7
        %v392 = vsub.s32 0, %v391
        %v393 = vrot.slane %v388, %v392
        %v517 = vunpack.c.l.b16 %v262
        %v518 = vunpack.c.l.b16 %v263
        %v519 = vunpack.c.l.b16 %v264
        %v520 = vunpack.c.l.b16 %v265
        %v521 = vunpack.c.l.b16 %v266
        %v522 = vunpack.c.l.b16 %v267
        %v523 = vunpack.c.l.b16 %v268
        %v524 = vunpack.c.l.b16 %v269
        %v525 = vunpack.c.l.b16 %v270
        %v526 = vunpack.c.l.b16 %v271
        %v527 = vunpack.c.l.b16 %v272
        %v528 = vunpack.c.l.b16 %v273
        %v529 = vunpack.c.l.b16 %v274
        %v530 = vunpack.c.l.b16 %v275
        %v531 = vunpack.c.l.b16 %v276
        %v532 = vunpack.c.l.b16 %v277
        %v533 = vunpack.c.l.b16 %v278
        %v534 = vunpack.c.l.b16 %v279
        %v535 = vunpack.c.l.b16 %v280
        %v536 = vunpack.c.l.b16 %v281
        %v537 = vunpack.c.l.b16 %v282
        %v538 = vunpack.c.l.b16 %v283
        %v539 = vunpack.c.l.b16 %v284
        %v540 = vunpack.c.l.b16 %v285
        %v541 = vunpack.c.l.b16 %v286
        %v542 = vunpack.c.l.b16 %v287
        %v543 = vunpack.c.l.b16 %v288
        %v544 = vunpack.c.l.b16 %v289
        %v545 = vunpack.c.l.b16 %v290
        %v546 = vunpack.c.l.b16 %v291
        %v547 = vunpack.c.l.b16 %v292
        %v548 = vunpack.c.l.b16 %v293
        %v549 = vunpack.c.l.b16 %v294
        %v550 = vunpack.c.l.b16 %v295
        %v551 = vunpack.c.l.b16 %v296
        %v552 = vunpack.c.l.b16 %v297
        %v553 = vunpack.c.l.b16 %v298
        %v554 = vunpack.c.l.b16 %v299
        %v555 = vunpack.c.l.b16 %v300
        %v556 = vunpack.c.l.b16 %v301
        %v557 = vunpack.c.l.b16 %v302
        %v558 = vunpack.c.l.b16 %v303
        %v559 = vunpack.c.l.b16 %v304
        %v560 = vunpack.c.l.b16 %v305
        %v561 = vunpack.c.l.b16 %v306
        %v562 = vunpack.c.l.b16 %v307
        %v563 = vunpack.c.l.b16 %v308
        %v564 = vunpack.c.l.b16 %v309
        %v565 = vunpack.c.l.b16 %v310
        %v566 = vunpack.c.l.b16 %v311
        %v567 = vunpack.c.l.b16 %v312
        %v568 = vunpack.c.l.b16 %v313
        %v569 = vunpack.c.l.b16 %v314
        %v570 = vunpack.c.l.b16 %v315
        %v571 = vunpack.c.l.b16 %v316
        %v572 = vunpack.c.l.b16 %v317
        %v573 = vunpack.c.l.b16 %v318
        %v574 = vunpack.c.l.b16 %v319
        %v575 = vunpack.c.l.b16 %v320
        %v576 = vunpack.c.l.b16 %v321
        %v577 = vunpack.c.l.b16 %v322
        %v578 = vunpack.c.l.b16 %v323
        %v579 = vunpack.c.l.b16 %v324
        %v580 = vunpack.c.l.b16 %v325
        %v581 = vunpack.c.l.b16 %v326
        %v582 = vunpack.c.l.b16 %v327
        %v583 = vunpack.c.l.b16 %v328
        %v584 = vunpack.c.l.b16 %v329
        %v585 = vunpack.c.l.b16 %v330
        %v586 = vunpack.c.l.b16 %v331
        %v587 = vunpack.c.l.b16 %v332
        %v588 = vunpack.c.l.b16 %v333
        %v589 = vunpack.c.l.b16 %v334
        %v590 = vunpack.c.l.b16 %v335
        %v591 = vunpack.c.l.b16 %v336
        %v592 = vunpack.c.l.b16 %v337
        %v593 = vunpack.c.l.b16 %v338
        %v594 = vunpack.c.l.b16 %v339
        %v595 = vunpack.c.l.b16 %v340
        %v596 = vunpack.c.l.b16 %v341
        %v597 = vunpack.c.l.b16 %v342
        %v598 = vunpack.c.l.b16 %v343
        %v599 = vunpack.c.l.b16 %v344
        %v600 = vunpack.c.l.b16 %v345
        %v601 = vunpack.c.l.b16 %v346
        %v602 = vunpack.c.l.b16 %v347
        %v603 = vunpack.c.l.b16 %v348
        %v604 = vunpack.c.l.b16 %v349
        %v605 = vunpack.c.l.b16 %v350
        %v606 = vunpack.c.l.b16 %v351
        %v607 = vunpack.c.l.b16 %v352
        %v608 = vunpack.c.l.b16 %v353
        %v609 = vunpack.c.l.b16 %v354
        %v610 = vunpack.c.l.b16 %v355
        %v611 = vunpack.c.l.b16 %v356
        %v612 = vunpack.c.l.b16 %v357
        %v613 = vunpack.c.l.b16 %v358
        %v614 = vunpack.c.l.b16 %v359
        %v615 = vunpack.c.l.b16 %v360
        %v616 = vunpack.c.l.b16 %v361
        %v617 = vunpack.c.l.b16 %v362
        %v618 = vunpack.c.l.b16 %v363
        %v619 = vunpack.c.l.b16 %v364
        %v620 = vunpack.c.l.b16 %v365
        %v621 = vunpack.c.l.b16 %v366
        %v622 = vunpack.c.l.b16 %v367
        %v623 = vunpack.c.l.b16 %v368
        %v624 = vunpack.c.l.b16 %v369
        %v625 = vunpack.c.l.b16 %v370
        %v626 = vunpack.c.l.b16 %v371
        %v627 = vunpack.c.l.b16 %v372
        %v628 = vunpack.c.l.b16 %v373
        %v629 = vunpack.c.l.b16 %v374
        %v630 = vunpack.c.l.b16 %v375
        %v631 = vunpack.c.l.b16 %v376
        %v632 = vunpack.c.l.b16 %v377
        %v633 = vunpack.c.l.b16 %v378
        %v634 = vunpack.c.l.b16 %v379
        %v635 = vunpack.c.l.b16 %v380
        %v636 = vunpack.c.l.b16 %v381
        %v637 = vunpack.c.l.b16 %v382
        %v638 = vunpack.c.l.b16 %v383
        %v639 = vpack.c.b16 %v518, %v517
        %v640 = vpack.c.b16 %v520, %v519
        %v641 = vpack.c.b16 %v522, %v521
        %v642 = vpack.c.b16 %v524, %v523
        %v643 = vpack.c.b16 %v526, %v525
        %v644 = vpack.c.b16 %v528, %v527
        %v645 = vpack.c.b16 %v530, %v529
        %v646 = vpack.c.b16 %v532, %v531
        %v647 = vpack.c.b16 %v534, %v533
        %v648 = vpack.c.b16 %v536, %v535
        %v649 = vpack.c.b16 %v538, %v537
        %v650 = vpack.c.b16 %v540, %v539
        %v651 = vpack.c.b16 %v542, %v541
        %v652 = vpack.c.b16 %v544, %v543
        %v653 = vpack.c.b16 %v546, %v545
        %v654 = vpack.c.b16 %v548, %v547
        %v655 = vpack.c.b16 %v550, %v549
        %v656 = vpack.c.b16 %v552, %v551
        %v657 = vpack.c.b16 %v554, %v553
        %v658 = vpack.c.b16 %v556, %v555
        %v659 = vpack.c.b16 %v558, %v557
        %v660 = vpack.c.b16 %v560, %v559
        %v661 = vpack.c.b16 %v562, %v561
        %v662 = vpack.c.b16 %v564, %v563
        %v663 = vpack.c.b16 %v566, %v565
        %v664 = vpack.c.b16 %v568, %v567
        %v665 = vpack.c.b16 %v570, %v569
        %v666 = vpack.c.b16 %v572, %v571
        %v667 = vpack.c.b16 %v574, %v573
        %v668 = vpack.c.b16 %v576, %v575
        %v669 = vpack.c.b16 %v578, %v577
        %v670 = vpack.c.b16 %v580, %v579
        %v671 = vpack.c.b16 %v582, %v581
        %v672 = vpack.c.b16 %v584, %v583
        %v673 = vpack.c.b16 %v586, %v585
        %v674 = vpack.c.b16 %v588, %v587
        %v675 = vpack.c.b16 %v590, %v589
        %v676 = vpack.c.b16 %v592, %v591
        %v677 = vpack.c.b16 %v594, %v593
        %v678 = vpack.c.b16 %v596, %v595
        %v679 = vpack.c.b16 %v598, %v597
        %v680 = vpack.c.b16 %v600, %v599
        %v681 = vpack.c.b16 %v602, %v601
        %v682 = vpack.c.b16 %v604, %v603
        %v683 = vpack.c.b16 %v606, %v605
        %v684 = vpack.c.b16 %v608, %v607
        %v685 = vpack.c.b16 %v610, %v609
        %v686 = vpack.c.b16 %v612, %v611
        %v687 = vpack.c.b16 %v614, %v613
        %v688 = vpack.c.b16 %v616, %v615
        %v689 = vpack.c.b16 %v618, %v617
        %v690 = vpack.c.b16 %v620, %v619
        %v691 = vpack.c.b16 %v622, %v621
        %v692 = vpack.c.b16 %v624, %v623
        %v693 = vpack.c.b16 %v626, %v625
        %v694 = vpack.c.b16 %v628, %v627
        %v695 = vpack.c.b16 %v630, %v629
        %v696 = vpack.c.b16 %v632, %v631
        %v697 = vpack.c.b16 %v634, %v633
        %v698 = vpack.c.b16 %v636, %v635
        %v699 = vpack.c.b16 %v638, %v637
        %v704 = vunpack.c.l.b16 %v384
        %v705 = vunpack.c.l.b16 %v385
        %v706 = vunpack.c.l.b16 %v386
        %v707 = vunpack.c.l.b16 %v387
        %v708 = vpack.c.b16 %v705, %v704
        %v709 = vpack.c.b16 %v707, %v706
        %vm712 = vcmask 261120
        %v714 = vsel %vm712, %v639, 0
        %v717 = vsel %vm712, %v640, 0
        %v720 = vsel %vm712, %v641, 0
        %v723 = vsel %vm712, %v642, 0
        %v726 = vsel %vm712, %v643, 0
        %v729 = vsel %vm712, %v644, 0
        %v732 = vsel %vm712, %v645, 0
        %v735 = vsel %vm712, %v646, 0
        %v738 = vsel %vm712, %v647, 0
        %v741 = vsel %vm712, %v648, 0
        %v744 = vsel %vm712, %v649, 0
        %v747 = vsel %vm712, %v650, 0
        %v750 = vsel %vm712, %v651, 0
        %v753 = vsel %vm712, %v652, 0
        %v756 = vsel %vm712, %v653, 0
        %v759 = vsel %vm712, %v654, 0
        %v762 = vsel %vm712, %v655, 0
        %v765 = vsel %vm712, %v656, 0
        %v768 = vsel %vm712, %v657, 0
        %v771 = vsel %vm712, %v658, 0
        %v774 = vsel %vm712, %v659, 0
        %v777 = vsel %vm712, %v660, 0
        %v780 = vsel %vm712, %v661, 0
        %v783 = vsel %vm712, %v662, 0
        %v786 = vsel %vm712, %v663, 0
        %v789 = vsel %vm712, %v664, 0
        %v792 = vsel %vm712, %v665, 0
        %v795 = vsel %vm712, %v666, 0
        %v798 = vsel %vm712, %v667, 0
        %v801 = vsel %vm712, %v668, 0
        %v804 = vsel %vm712, %v669, 0
        %v807 = vsel %vm712, %v670, 0
        %v810 = vsel %vm712, %v671, 0
        %v813 = vsel %vm712, %v672, 0
        %v816 = vsel %vm712, %v673, 0
        %v819 = vsel %vm712, %v674, 0
        %v822 = vsel %vm712, %v675, 0
        %v825 = vsel %vm712, %v676, 0
        %v828 = vsel %vm712, %v677, 0
        %v831 = vsel %vm712, %v678, 0
        %v834 = vsel %vm712, %v679, 0
        %v837 = vsel %vm712, %v680, 0
        %v840 = vsel %vm712, %v681, 0
        %v843 = vsel %vm712, %v682, 0
        %v846 = vsel %vm712, %v683, 0
        %v849 = vsel %vm712, %v684, 0
        %v852 = vsel %vm712, %v685, 0
        %v855 = vsel %vm712, %v686, 0
        %v858 = vsel %vm712, %v687, 0
        %v861 = vsel %vm712, %v688, 0
        %v864 = vsel %vm712, %v689, 0
        %v867 = vsel %vm712, %v690, 0
        %v870 = vsel %vm712, %v691, 0
        %v873 = vsel %vm712, %v692, 0
        %v876 = vsel %vm712, %v693, 0
        %v879 = vsel %vm712, %v694, 0
        %v882 = vsel %vm712, %v695, 0
        %v885 = vsel %vm712, %v696, 0
        %v888 = vsel %vm712, %v697, 0
        %v891 = vsel %vm712, %v698, 0
        %v894 = vsel %vm712, %v699, 0
        %896 = vmatprep.subr.bf16.mxu0 0
        %897 = vmatpush1.bf16.msra.mxu0 0
        %898 = vmatprep.subr.bf16.mxu0 0
        %899 = vmatpush1.bf16.msra.mxu0 0
        %900 = vmatprep.subr.bf16.mxu0 0
        %901 = vmatpush1.bf16.msra.mxu0 0
        %902 = vmatprep.subr.bf16.mxu0 0
        %903 = vmatpush1.bf16.msra.mxu0 0
        %904 = vmatprep.subr.bf16.mxu0 0
        %905 = vmatpush1.bf16.msra.mxu0 0
        %906 = vmatprep.subr.bf16.mxu0 0
        %907 = vmatpush1.bf16.msra.mxu0 0
        %908 = vmatprep.subr.bf16.mxu0 0
        %909 = vmatpush1.bf16.msra.mxu0 %v709
        %910 = vmatprep.subr.bf16.mxu0 0
        %911 = vmatpush1.bf16.msra.mxu0 %v708
        %912 = vmatprep.subr.bf16.mxu0 0
        %913 = vmatpush2.bf16.msra.mxu0 0
        %914 = vmatprep.subr.bf16.mxu0 0
        %915 = vmatpush2.bf16.msra.mxu0 0
        %916 = vmatprep.subr.bf16.mxu0 0
        %917 = vmatpush2.bf16.msra.mxu0 0
        %918 = vmatprep.subr.bf16.mxu0 0
        %919 = vmatpush2.bf16.msra.mxu0 0
        %920 = vmatprep.subr.bf16.mxu0 0
        %921 = vmatpush2.bf16.msra.mxu0 0
        %922 = vmatprep.subr.bf16.mxu0 0
        %923 = vmatpush2.bf16.msra.mxu0 0
        %924 = vmatprep.subr.bf16.mxu0 0
        %925 = vmatpush2.bf16.msra.mxu0 0
        %926 = vmatprep.subr.bf16.mxu0 0
        %927 = vmatpush2.bf16.msra.mxu0 0
        %928 = vmatprep.mubr.bf16.mxu0 0
        %929 = vmatmul.mubr.bf16.gmra.mxu0 %v714
        %v930 = vpop.f32.mrf.mxu0
        %v931 = vadd.f32 %v393, %v930
        %v932 = vpop.f32.mrf.mxu0
        %v933 = vpop.f32.mrf.mxu0
        %v934 = vadd.f32 %v393, %v933
        %v935 = vpop.f32.mrf.mxu0
        %936 = vmatprep.mubr.bf16.mxu0 0
        %937 = vmatmul.mubr.bf16.gmra.mxu0 %v717
        %v938 = vpop.f32.mrf.mxu0
        %v939 = vadd.f32 %v393, %v938
        %v940 = vpop.f32.mrf.mxu0
        %v941 = vpop.f32.mrf.mxu0
        %v942 = vadd.f32 %v393, %v941
        %v943 = vpop.f32.mrf.mxu0
        %944 = vmatprep.mubr.bf16.mxu0 0
        %945 = vmatmul.mubr.bf16.gmra.mxu0 %v720
        %v946 = vpop.f32.mrf.mxu0
        %v947 = vadd.f32 %v393, %v946
        %v948 = vpop.f32.mrf.mxu0
        %v949 = vpop.f32.mrf.mxu0
        %v950 = vadd.f32 %v393, %v949
        %v951 = vpop.f32.mrf.mxu0
        %952 = vmatprep.mubr.bf16.mxu0 0
        %953 = vmatmul.mubr.bf16.gmra.mxu0 %v723
        %v954 = vpop.f32.mrf.mxu0
        %v955 = vadd.f32 %v393, %v954
        %v956 = vpop.f32.mrf.mxu0
        %v957 = vpop.f32.mrf.mxu0
        %v958 = vadd.f32 %v393, %v957
        %v959 = vpop.f32.mrf.mxu0
        %960 = vmatprep.mubr.bf16.mxu0 0
        %961 = vmatmul.mubr.bf16.gmra.mxu0 %v726
        %v962 = vpop.f32.mrf.mxu0
        %v963 = vadd.f32 %v393, %v962
        %v964 = vpop.f32.mrf.mxu0
        %v965 = vpop.f32.mrf.mxu0
        %v966 = vadd.f32 %v393, %v965
        %v967 = vpop.f32.mrf.mxu0
        %968 = vmatprep.mubr.bf16.mxu0 0
        %969 = vmatmul.mubr.bf16.gmra.mxu0 %v729
        %v970 = vpop.f32.mrf.mxu0
        %v971 = vadd.f32 %v393, %v970
        %v972 = vpop.f32.mrf.mxu0
        %v973 = vpop.f32.mrf.mxu0
        %v974 = vadd.f32 %v393, %v973
        %v975 = vpop.f32.mrf.mxu0
        %976 = vmatprep.mubr.bf16.mxu0 0
        %977 = vmatmul.mubr.bf16.gmra.mxu0 %v732
        %v978 = vpop.f32.mrf.mxu0
        %v979 = vadd.f32 %v393, %v978
        %v980 = vpop.f32.mrf.mxu0
        %v981 = vpop.f32.mrf.mxu0
        %v982 = vadd.f32 %v393, %v981
        %v983 = vpop.f32.mrf.mxu0
        %984 = vmatprep.mubr.bf16.mxu0 0
        %985 = vmatmul.mubr.bf16.gmra.mxu0 %v735
        %v986 = vpop.f32.mrf.mxu0
        %v987 = vadd.f32 %v393, %v986
        %v988 = vpop.f32.mrf.mxu0
        %v989 = vpop.f32.mrf.mxu0
        %v990 = vadd.f32 %v393, %v989
        %v991 = vpop.f32.mrf.mxu0
        %992 = vmatprep.mubr.bf16.mxu0 0
        %993 = vmatmul.mubr.bf16.gmra.mxu0 %v738
        %v994 = vpop.f32.mrf.mxu0
        %v995 = vadd.f32 %v393, %v994
        %v996 = vpop.f32.mrf.mxu0
        %v997 = vpop.f32.mrf.mxu0
        %v998 = vadd.f32 %v393, %v997
        %v999 = vpop.f32.mrf.mxu0
        %1000 = vmatprep.mubr.bf16.mxu0 0
        %1001 = vmatmul.mubr.bf16.gmra.mxu0 %v741
        %v1002 = vpop.f32.mrf.mxu0
        %v1003 = vadd.f32 %v393, %v1002
        %v1004 = vpop.f32.mrf.mxu0
        %v1005 = vpop.f32.mrf.mxu0
        %v1006 = vadd.f32 %v393, %v1005
        %v1007 = vpop.f32.mrf.mxu0
        %1008 = vmatprep.mubr.bf16.mxu0 0
        %1009 = vmatmul.mubr.bf16.gmra.mxu0 %v744
        %v1010 = vpop.f32.mrf.mxu0
        %v1011 = vadd.f32 %v393, %v1010
        %v1012 = vpop.f32.mrf.mxu0
        %v1013 = vpop.f32.mrf.mxu0
        %v1014 = vadd.f32 %v393, %v1013
        %v1015 = vpop.f32.mrf.mxu0
        %1016 = vmatprep.mubr.bf16.mxu0 0
        %1017 = vmatmul.mubr.bf16.gmra.mxu0 %v747
        %v1018 = vpop.f32.mrf.mxu0
        %v1019 = vadd.f32 %v393, %v1018
        %v1020 = vpop.f32.mrf.mxu0
        %v1021 = vpop.f32.mrf.mxu0
        %v1022 = vadd.f32 %v393, %v1021
        %v1023 = vpop.f32.mrf.mxu0
        %1024 = vmatprep.mubr.bf16.mxu0 0
        %1025 = vmatmul.mubr.bf16.gmra.mxu0 %v750
        %v1026 = vpop.f32.mrf.mxu0
        %v1027 = vadd.f32 %v393, %v1026
        %v1028 = vpop.f32.mrf.mxu0
        %v1029 = vpop.f32.mrf.mxu0
        %v1030 = vadd.f32 %v393, %v1029
        %v1031 = vpop.f32.mrf.mxu0
        %1032 = vmatprep.mubr.bf16.mxu0 0
        %1033 = vmatmul.mubr.bf16.gmra.mxu0 %v753
        %v1034 = vpop.f32.mrf.mxu0
        %v1035 = vadd.f32 %v393, %v1034
        %v1036 = vpop.f32.mrf.mxu0
        %v1037 = vpop.f32.mrf.mxu0
        %v1038 = vadd.f32 %v393, %v1037
        %v1039 = vpop.f32.mrf.mxu0
        %1040 = vmatprep.mubr.bf16.mxu0 0
        %1041 = vmatmul.mubr.bf16.gmra.mxu0 %v756
        %v1042 = vpop.f32.mrf.mxu0
        %v1043 = vadd.f32 %v393, %v1042
        %v1044 = vpop.f32.mrf.mxu0
        %v1045 = vpop.f32.mrf.mxu0
        %v1046 = vadd.f32 %v393, %v1045
        %v1047 = vpop.f32.mrf.mxu0
        %1048 = vmatprep.mubr.bf16.mxu0 0
        %1049 = vmatmul.mubr.bf16.gmra.mxu0 %v759
        %v1050 = vpop.f32.mrf.mxu0
        %v1051 = vadd.f32 %v393, %v1050
        %v1052 = vpop.f32.mrf.mxu0
        %v1053 = vpop.f32.mrf.mxu0
        %v1054 = vadd.f32 %v393, %v1053
        %v1055 = vpop.f32.mrf.mxu0
        %1056 = vmatprep.mubr.bf16.mxu0 0
        %1057 = vmatmul.mubr.bf16.gmra.mxu0 %v762
        %v1058 = vpop.f32.mrf.mxu0
        %v1059 = vadd.f32 %v393, %v1058
        %v1060 = vpop.f32.mrf.mxu0
        %v1061 = vpop.f32.mrf.mxu0
        %v1062 = vadd.f32 %v393, %v1061
        %v1063 = vpop.f32.mrf.mxu0
        %1064 = vmatprep.mubr.bf16.mxu0 0
        %1065 = vmatmul.mubr.bf16.gmra.mxu0 %v765
        %v1066 = vpop.f32.mrf.mxu0
        %v1067 = vadd.f32 %v393, %v1066
        %v1068 = vpop.f32.mrf.mxu0
        %v1069 = vpop.f32.mrf.mxu0
        %v1070 = vadd.f32 %v393, %v1069
        %v1071 = vpop.f32.mrf.mxu0
        %1072 = vmatprep.mubr.bf16.mxu0 0
        %1073 = vmatmul.mubr.bf16.gmra.mxu0 %v768
        %v1074 = vpop.f32.mrf.mxu0
        %v1075 = vadd.f32 %v393, %v1074
        %v1076 = vpop.f32.mrf.mxu0
        %v1077 = vpop.f32.mrf.mxu0
        %v1078 = vadd.f32 %v393, %v1077
        %v1079 = vpop.f32.mrf.mxu0
        %1080 = vmatprep.mubr.bf16.mxu0 0
        %1081 = vmatmul.mubr.bf16.gmra.mxu0 %v771
        %v1082 = vpop.f32.mrf.mxu0
        %v1083 = vadd.f32 %v393, %v1082
        %v1084 = vpop.f32.mrf.mxu0
        %v1085 = vpop.f32.mrf.mxu0
        %v1086 = vadd.f32 %v393, %v1085
        %v1087 = vpop.f32.mrf.mxu0
        %1088 = vmatprep.mubr.bf16.mxu0 0
        %1089 = vmatmul.mubr.bf16.gmra.mxu0 %v774
        %v1090 = vpop.f32.mrf.mxu0
        %v1091 = vadd.f32 %v393, %v1090
        %v1092 = vpop.f32.mrf.mxu0
        %v1093 = vpop.f32.mrf.mxu0
        %v1094 = vadd.f32 %v393, %v1093
        %v1095 = vpop.f32.mrf.mxu0
        %1096 = vmatprep.mubr.bf16.mxu0 0
        %1097 = vmatmul.mubr.bf16.gmra.mxu0 %v777
        %v1098 = vpop.f32.mrf.mxu0
        %v1099 = vadd.f32 %v393, %v1098
        %v1100 = vpop.f32.mrf.mxu0
        %v1101 = vpop.f32.mrf.mxu0
        %v1102 = vadd.f32 %v393, %v1101
        %v1103 = vpop.f32.mrf.mxu0
        %1104 = vmatprep.mubr.bf16.mxu0 0
        %1105 = vmatmul.mubr.bf16.gmra.mxu0 %v780
        %v1106 = vpop.f32.mrf.mxu0
        %v1107 = vadd.f32 %v393, %v1106
        %v1108 = vpop.f32.mrf.mxu0
        %v1109 = vpop.f32.mrf.mxu0
        %v1110 = vadd.f32 %v393, %v1109
        %v1111 = vpop.f32.mrf.mxu0
        %1112 = vmatprep.mubr.bf16.mxu0 0
        %1113 = vmatmul.mubr.bf16.gmra.mxu0 %v783
        %v1114 = vpop.f32.mrf.mxu0
        %v1115 = vadd.f32 %v393, %v1114
        %v1116 = vpop.f32.mrf.mxu0
        %v1117 = vpop.f32.mrf.mxu0
        %v1118 = vadd.f32 %v393, %v1117
        %v1119 = vpop.f32.mrf.mxu0
        %1120 = vmatprep.mubr.bf16.mxu0 0
        %1121 = vmatmul.mubr.bf16.gmra.mxu0 %v786
        %v1122 = vpop.f32.mrf.mxu0
        %v1123 = vadd.f32 %v393, %v1122
        %v1124 = vpop.f32.mrf.mxu0
        %v1125 = vpop.f32.mrf.mxu0
        %v1126 = vadd.f32 %v393, %v1125
        %v1127 = vpop.f32.mrf.mxu0
        %1128 = vmatprep.mubr.bf16.mxu0 0
        %1129 = vmatmul.mubr.bf16.gmra.mxu0 %v789
        %v1130 = vpop.f32.mrf.mxu0
        %v1131 = vadd.f32 %v393, %v1130
        %v1132 = vpop.f32.mrf.mxu0
        %v1133 = vpop.f32.mrf.mxu0
        %v1134 = vadd.f32 %v393, %v1133
        %v1135 = vpop.f32.mrf.mxu0
        %1136 = vmatprep.mubr.bf16.mxu0 0
        %1137 = vmatmul.mubr.bf16.gmra.mxu0 %v792
        %v1138 = vpop.f32.mrf.mxu0
        %v1139 = vadd.f32 %v393, %v1138
        %v1140 = vpop.f32.mrf.mxu0
        %v1141 = vpop.f32.mrf.mxu0
        %v1142 = vadd.f32 %v393, %v1141
        %v1143 = vpop.f32.mrf.mxu0
        %1144 = vmatprep.mubr.bf16.mxu0 0
        %1145 = vmatmul.mubr.bf16.gmra.mxu0 %v795
        %v1146 = vpop.f32.mrf.mxu0
        %v1147 = vadd.f32 %v393, %v1146
        %v1148 = vpop.f32.mrf.mxu0
        %v1149 = vpop.f32.mrf.mxu0
        %v1150 = vadd.f32 %v393, %v1149
        %v1151 = vpop.f32.mrf.mxu0
        %1152 = vmatprep.mubr.bf16.mxu0 0
        %1153 = vmatmul.mubr.bf16.gmra.mxu0 %v798
        %v1154 = vpop.f32.mrf.mxu0
        %v1155 = vadd.f32 %v393, %v1154
        %v1156 = vpop.f32.mrf.mxu0
        %v1157 = vpop.f32.mrf.mxu0
        %v1158 = vadd.f32 %v393, %v1157
        %v1159 = vpop.f32.mrf.mxu0
        %1160 = vmatprep.mubr.bf16.mxu0 0
        %1161 = vmatmul.mubr.bf16.gmra.mxu0 %v801
        %v1162 = vpop.f32.mrf.mxu0
        %v1163 = vadd.f32 %v393, %v1162
        %v1164 = vpop.f32.mrf.mxu0
        %v1165 = vpop.f32.mrf.mxu0
        %v1166 = vadd.f32 %v393, %v1165
        %v1167 = vpop.f32.mrf.mxu0
        %1168 = vmatprep.mubr.bf16.mxu0 0
        %1169 = vmatmul.mubr.bf16.gmra.mxu0 %v804
        %v1170 = vpop.f32.mrf.mxu0
        %v1171 = vadd.f32 %v393, %v1170
        %v1172 = vpop.f32.mrf.mxu0
        %v1173 = vpop.f32.mrf.mxu0
        %v1174 = vadd.f32 %v393, %v1173
        %v1175 = vpop.f32.mrf.mxu0
        %1176 = vmatprep.mubr.bf16.mxu0 0
        %1177 = vmatmul.mubr.bf16.gmra.mxu0 %v807
        %v1178 = vpop.f32.mrf.mxu0
        %v1179 = vadd.f32 %v393, %v1178
        %v1180 = vpop.f32.mrf.mxu0
        %v1181 = vpop.f32.mrf.mxu0
        %v1182 = vadd.f32 %v393, %v1181
        %v1183 = vpop.f32.mrf.mxu0
        %1184 = vmatprep.mubr.bf16.mxu0 0
        %1185 = vmatmul.mubr.bf16.gmra.mxu0 %v810
        %v1186 = vpop.f32.mrf.mxu0
        %v1187 = vadd.f32 %v393, %v1186
        %v1188 = vpop.f32.mrf.mxu0
        %v1189 = vpop.f32.mrf.mxu0
        %v1190 = vadd.f32 %v393, %v1189
        %v1191 = vpop.f32.mrf.mxu0
        %1192 = vmatprep.mubr.bf16.mxu0 0
        %1193 = vmatmul.mubr.bf16.gmra.mxu0 %v813
        %v1194 = vpop.f32.mrf.mxu0
        %v1195 = vadd.f32 %v393, %v1194
        %v1196 = vpop.f32.mrf.mxu0
        %v1197 = vpop.f32.mrf.mxu0
        %v1198 = vadd.f32 %v393, %v1197
        %v1199 = vpop.f32.mrf.mxu0
        %1200 = vmatprep.mubr.bf16.mxu0 0
        %1201 = vmatmul.mubr.bf16.gmra.mxu0 %v816
        %v1202 = vpop.f32.mrf.mxu0
        %v1203 = vadd.f32 %v393, %v1202
        %v1204 = vpop.f32.mrf.mxu0
        %v1205 = vpop.f32.mrf.mxu0
        %v1206 = vadd.f32 %v393, %v1205
        %v1207 = vpop.f32.mrf.mxu0
        %1208 = vmatprep.mubr.bf16.mxu0 0
        %1209 = vmatmul.mubr.bf16.gmra.mxu0 %v819
        %v1210 = vpop.f32.mrf.mxu0
        %v1211 = vadd.f32 %v393, %v1210
        %v1212 = vpop.f32.mrf.mxu0
        %v1213 = vpop.f32.mrf.mxu0
        %v1214 = vadd.f32 %v393, %v1213
        %v1215 = vpop.f32.mrf.mxu0
        %1216 = vmatprep.mubr.bf16.mxu0 0
        %1217 = vmatmul.mubr.bf16.gmra.mxu0 %v822
        %v1218 = vpop.f32.mrf.mxu0
        %v1219 = vadd.f32 %v393, %v1218
        %v1220 = vpop.f32.mrf.mxu0
        %v1221 = vpop.f32.mrf.mxu0
        %v1222 = vadd.f32 %v393, %v1221
        %v1223 = vpop.f32.mrf.mxu0
        %1224 = vmatprep.mubr.bf16.mxu0 0
        %1225 = vmatmul.mubr.bf16.gmra.mxu0 %v825
        %v1226 = vpop.f32.mrf.mxu0
        %v1227 = vadd.f32 %v393, %v1226
        %v1228 = vpop.f32.mrf.mxu0
        %v1229 = vpop.f32.mrf.mxu0
        %v1230 = vadd.f32 %v393, %v1229
        %v1231 = vpop.f32.mrf.mxu0
        %1232 = vmatprep.mubr.bf16.mxu0 0
        %1233 = vmatmul.mubr.bf16.gmra.mxu0 %v828
        %v1234 = vpop.f32.mrf.mxu0
        %v1235 = vadd.f32 %v393, %v1234
        %v1236 = vpop.f32.mrf.mxu0
        %v1237 = vpop.f32.mrf.mxu0
        %v1238 = vadd.f32 %v393, %v1237
        %v1239 = vpop.f32.mrf.mxu0
        %1240 = vmatprep.mubr.bf16.mxu0 0
        %1241 = vmatmul.mubr.bf16.gmra.mxu0 %v831
        %v1242 = vpop.f32.mrf.mxu0
        %v1243 = vadd.f32 %v393, %v1242
        %v1244 = vpop.f32.mrf.mxu0
        %v1245 = vpop.f32.mrf.mxu0
        %v1246 = vadd.f32 %v393, %v1245
        %v1247 = vpop.f32.mrf.mxu0
        %1248 = vmatprep.mubr.bf16.mxu0 0
        %1249 = vmatmul.mubr.bf16.gmra.mxu0 %v834
        %v1250 = vpop.f32.mrf.mxu0
        %v1251 = vadd.f32 %v393, %v1250
        %v1252 = vpop.f32.mrf.mxu0
        %v1253 = vpop.f32.mrf.mxu0
        %v1254 = vadd.f32 %v393, %v1253
        %v1255 = vpop.f32.mrf.mxu0
        %1256 = vmatprep.mubr.bf16.mxu0 0
        %1257 = vmatmul.mubr.bf16.gmra.mxu0 %v837
        %v1258 = vpop.f32.mrf.mxu0
        %v1259 = vadd.f32 %v393, %v1258
        %v1260 = vpop.f32.mrf.mxu0
        %v1261 = vpop.f32.mrf.mxu0
        %v1262 = vadd.f32 %v393, %v1261
        %v1263 = vpop.f32.mrf.mxu0
        %1264 = vmatprep.mubr.bf16.mxu0 0
        %1265 = vmatmul.mubr.bf16.gmra.mxu0 %v840
        %v1266 = vpop.f32.mrf.mxu0
        %v1267 = vadd.f32 %v393, %v1266
        %v1268 = vpop.f32.mrf.mxu0
        %v1269 = vpop.f32.mrf.mxu0
        %v1270 = vadd.f32 %v393, %v1269
        %v1271 = vpop.f32.mrf.mxu0
        %1272 = vmatprep.mubr.bf16.mxu0 0
        %1273 = vmatmul.mubr.bf16.gmra.mxu0 %v843
        %v1274 = vpop.f32.mrf.mxu0
        %v1275 = vadd.f32 %v393, %v1274
        %v1276 = vpop.f32.mrf.mxu0
        %v1277 = vpop.f32.mrf.mxu0
        %v1278 = vadd.f32 %v393, %v1277
        %v1279 = vpop.f32.mrf.mxu0
        %1280 = vmatprep.mubr.bf16.mxu0 0
        %1281 = vmatmul.mubr.bf16.gmra.mxu0 %v846
        %v1282 = vpop.f32.mrf.mxu0
        %v1283 = vadd.f32 %v393, %v1282
        %v1284 = vpop.f32.mrf.mxu0
        %v1285 = vpop.f32.mrf.mxu0
        %v1286 = vadd.f32 %v393, %v1285
        %v1287 = vpop.f32.mrf.mxu0
        %1288 = vmatprep.mubr.bf16.mxu0 0
        %1289 = vmatmul.mubr.bf16.gmra.mxu0 %v849
        %v1290 = vpop.f32.mrf.mxu0
        %v1291 = vadd.f32 %v393, %v1290
        %v1292 = vpop.f32.mrf.mxu0
        %v1293 = vpop.f32.mrf.mxu0
        %v1294 = vadd.f32 %v393, %v1293
        %v1295 = vpop.f32.mrf.mxu0
        %1296 = vmatprep.mubr.bf16.mxu0 0
        %1297 = vmatmul.mubr.bf16.gmra.mxu0 %v852
        %v1298 = vpop.f32.mrf.mxu0
        %v1299 = vadd.f32 %v393, %v1298
        %v1300 = vpop.f32.mrf.mxu0
        %v1301 = vpop.f32.mrf.mxu0
        %v1302 = vadd.f32 %v393, %v1301
        %v1303 = vpop.f32.mrf.mxu0
        %1304 = vmatprep.mubr.bf16.mxu0 0
        %1305 = vmatmul.mubr.bf16.gmra.mxu0 %v855
        %v1306 = vpop.f32.mrf.mxu0
        %v1307 = vadd.f32 %v393, %v1306
        %v1308 = vpop.f32.mrf.mxu0
        %v1309 = vpop.f32.mrf.mxu0
        %v1310 = vadd.f32 %v393, %v1309
        %v1311 = vpop.f32.mrf.mxu0
        %1312 = vmatprep.mubr.bf16.mxu0 0
        %1313 = vmatmul.mubr.bf16.gmra.mxu0 %v858
        %v1314 = vpop.f32.mrf.mxu0
        %v1315 = vadd.f32 %v393, %v1314
        %v1316 = vpop.f32.mrf.mxu0
        %v1317 = vpop.f32.mrf.mxu0
        %v1318 = vadd.f32 %v393, %v1317
        %v1319 = vpop.f32.mrf.mxu0
        %1320 = vmatprep.mubr.bf16.mxu0 0
        %1321 = vmatmul.mubr.bf16.gmra.mxu0 %v861
        %v1322 = vpop.f32.mrf.mxu0
        %v1323 = vadd.f32 %v393, %v1322
        %v1324 = vpop.f32.mrf.mxu0
        %v1325 = vpop.f32.mrf.mxu0
        %v1326 = vadd.f32 %v393, %v1325
        %v1327 = vpop.f32.mrf.mxu0
        %1328 = vmatprep.mubr.bf16.mxu0 0
        %1329 = vmatmul.mubr.bf16.gmra.mxu0 %v864
        %v1330 = vpop.f32.mrf.mxu0
        %v1331 = vadd.f32 %v393, %v1330
        %v1332 = vpop.f32.mrf.mxu0
        %v1333 = vpop.f32.mrf.mxu0
        %v1334 = vadd.f32 %v393, %v1333
        %v1335 = vpop.f32.mrf.mxu0
        %1336 = vmatprep.mubr.bf16.mxu0 0
        %1337 = vmatmul.mubr.bf16.gmra.mxu0 %v867
        %v1338 = vpop.f32.mrf.mxu0
        %v1339 = vadd.f32 %v393, %v1338
        %v1340 = vpop.f32.mrf.mxu0
        %v1341 = vpop.f32.mrf.mxu0
        %v1342 = vadd.f32 %v393, %v1341
        %v1343 = vpop.f32.mrf.mxu0
        %1344 = vmatprep.mubr.bf16.mxu0 0
        %1345 = vmatmul.mubr.bf16.gmra.mxu0 %v870
        %v1346 = vpop.f32.mrf.mxu0
        %v1347 = vadd.f32 %v393, %v1346
        %v1348 = vpop.f32.mrf.mxu0
        %v1349 = vpop.f32.mrf.mxu0
        %v1350 = vadd.f32 %v393, %v1349
        %v1351 = vpop.f32.mrf.mxu0
        %1352 = vmatprep.mubr.bf16.mxu0 0
        %1353 = vmatmul.mubr.bf16.gmra.mxu0 %v873
        %v1354 = vpop.f32.mrf.mxu0
        %v1355 = vadd.f32 %v393, %v1354
        %v1356 = vpop.f32.mrf.mxu0
        %v1357 = vpop.f32.mrf.mxu0
        %v1358 = vadd.f32 %v393, %v1357
        %v1359 = vpop.f32.mrf.mxu0
        %1360 = vmatprep.mubr.bf16.mxu0 0
        %1361 = vmatmul.mubr.bf16.gmra.mxu0 %v876
        %v1362 = vpop.f32.mrf.mxu0
        %v1363 = vadd.f32 %v393, %v1362
        %v1364 = vpop.f32.mrf.mxu0
        %v1365 = vpop.f32.mrf.mxu0
        %v1366 = vadd.f32 %v393, %v1365
        %v1367 = vpop.f32.mrf.mxu0
        %1368 = vmatprep.mubr.bf16.mxu0 0
        %1369 = vmatmul.mubr.bf16.gmra.mxu0 %v879
        %v1370 = vpop.f32.mrf.mxu0
        %v1371 = vadd.f32 %v393, %v1370
        %v1372 = vpop.f32.mrf.mxu0
        %v1373 = vpop.f32.mrf.mxu0
        %v1374 = vadd.f32 %v393, %v1373
        %v1375 = vpop.f32.mrf.mxu0
        %1376 = vmatprep.mubr.bf16.mxu0 0
        %1377 = vmatmul.mubr.bf16.gmra.mxu0 %v882
        %v1378 = vpop.f32.mrf.mxu0
        %v1379 = vadd.f32 %v393, %v1378
        %v1380 = vpop.f32.mrf.mxu0
        %v1381 = vpop.f32.mrf.mxu0
        %v1382 = vadd.f32 %v393, %v1381
        %v1383 = vpop.f32.mrf.mxu0
        %1384 = vmatprep.mubr.bf16.mxu0 0
        %1385 = vmatmul.mubr.bf16.gmra.mxu0 %v885
        %v1386 = vpop.f32.mrf.mxu0
        %v1387 = vadd.f32 %v393, %v1386
        %v1388 = vpop.f32.mrf.mxu0
        %v1389 = vpop.f32.mrf.mxu0
        %v1390 = vadd.f32 %v393, %v1389
        %v1391 = vpop.f32.mrf.mxu0
        %1392 = vmatprep.mubr.bf16.mxu0 0
        %1393 = vmatmul.mubr.bf16.gmra.mxu0 %v888
        %v1394 = vpop.f32.mrf.mxu0
        %v1395 = vadd.f32 %v393, %v1394
        %v1396 = vpop.f32.mrf.mxu0
        %v1397 = vpop.f32.mrf.mxu0
        %v1398 = vadd.f32 %v393, %v1397
        %v1399 = vpop.f32.mrf.mxu0
        %1400 = vmatprep.mubr.bf16.mxu0 0
        %1401 = vmatmul.mubr.bf16.gmra.mxu0 %v891
        %v1402 = vpop.f32.mrf.mxu0
        %v1403 = vadd.f32 %v393, %v1402
        %v1404 = vpop.f32.mrf.mxu0
        %v1405 = vpop.f32.mrf.mxu0
        %v1406 = vadd.f32 %v393, %v1405
        %v1407 = vpop.f32.mrf.mxu0
        %1408 = vmatprep.mubr.bf16.mxu0 0
        %1409 = vmatmul.mubr.bf16.gmra.mxu0 %v894
        %v1410 = vpop.f32.mrf.mxu0
        %v1411 = vadd.f32 %v393, %v1410
        %v1412 = vpop.f32.mrf.mxu0
        %v1413 = vpop.f32.mrf.mxu0
        %v1414 = vadd.f32 %v393, %v1413
        %v1415 = vpop.f32.mrf.mxu0
        %1416 = vdwg.mxu0
        %v1417 = vld [vmem:[%s250] sm:$0xff]
        %v1418 = vld [vmem:[%s250 + $0x8] sm:$0xff]
        %v1419 = vld [vmem:[%s250 + $0x10] sm:$0xff]
        %v1420 = vld [vmem:[%s250 + $0x18] sm:$0xff]
        %v1421 = vld [vmem:[%s250 + $0x20] sm:$0xff]
        %v1422 = vld [vmem:[%s250 + $0x28] sm:$0xff]
        %v1423 = vld [vmem:[%s250 + $0x30] sm:$0xff]
        %v1424 = vld [vmem:[%s250 + $0x38] sm:$0xff]
        %v1425 = vld [vmem:[%s250 + $0x40] sm:$0xff]
        %v1426 = vld [vmem:[%s250 + $0x48] sm:$0xff]
        %v1427 = vld [vmem:[%s250 + $0x50] sm:$0xff]
        %v1428 = vld [vmem:[%s250 + $0x58] sm:$0xff]
        %v1429 = vld [vmem:[%s250 + $0x60] sm:$0xff]
        %v1430 = vld [vmem:[%s250 + $0x68] sm:$0xff]
        %v1431 = vld [vmem:[%s250 + $0x70] sm:$0xff]
        %v1432 = vld [vmem:[%s250 + $0x78] sm:$0xff]
        %v1433 = vld [vmem:[%s250 + $0x80] sm:$0xff]
        %v1434 = vld [vmem:[%s250 + $0x88] sm:$0xff]
        %v1435 = vld [vmem:[%s250 + $0x90] sm:$0xff]
        %v1436 = vld [vmem:[%s250 + $0x98] sm:$0xff]
        %v1437 = vld [vmem:[%s250 + $0xa0] sm:$0xff]
        %v1438 = vld [vmem:[%s250 + $0xa8] sm:$0xff]
        %v1439 = vld [vmem:[%s250 + $0xb0] sm:$0xff]
        %v1440 = vld [vmem:[%s250 + $0xb8] sm:$0xff]
        %v1441 = vld [vmem:[%s250 + $0xc0] sm:$0xff]
        %v1442 = vld [vmem:[%s250 + $0xc8] sm:$0xff]
        %v1443 = vld [vmem:[%s250 + $0xd0] sm:$0xff]
        %v1444 = vld [vmem:[%s250 + $0xd8] sm:$0xff]
        %v1445 = vld [vmem:[%s250 + $0xe0] sm:$0xff]
        %v1446 = vld [vmem:[%s250 + $0xe8] sm:$0xff]
        %v1447 = vld [vmem:[%s250 + $0xf0] sm:$0xff]
        %v1448 = vld [vmem:[%s250 + $0xf8] sm:$0xff]
        %v1449 = vld [vmem:[%s250 + $0x100] sm:$0xff]
        %v1450 = vld [vmem:[%s250 + $0x108] sm:$0xff]
        %v1451 = vld [vmem:[%s250 + $0x110] sm:$0xff]
        %v1452 = vld [vmem:[%s250 + $0x118] sm:$0xff]
        %v1453 = vld [vmem:[%s250 + $0x120] sm:$0xff]
        %v1454 = vld [vmem:[%s250 + $0x128] sm:$0xff]
        %v1455 = vld [vmem:[%s250 + $0x130] sm:$0xff]
        %v1456 = vld [vmem:[%s250 + $0x138] sm:$0xff]
        %v1457 = vld [vmem:[%s250 + $0x140] sm:$0xff]
        %v1458 = vld [vmem:[%s250 + $0x148] sm:$0xff]
        %v1459 = vld [vmem:[%s250 + $0x150] sm:$0xff]
        %v1460 = vld [vmem:[%s250 + $0x158] sm:$0xff]
        %v1461 = vld [vmem:[%s250 + $0x160] sm:$0xff]
        %v1462 = vld [vmem:[%s250 + $0x168] sm:$0xff]
        %v1463 = vld [vmem:[%s250 + $0x170] sm:$0xff]
        %v1464 = vld [vmem:[%s250 + $0x178] sm:$0xff]
        %v1465 = vld [vmem:[%s250 + $0x180] sm:$0xff]
        %v1466 = vld [vmem:[%s250 + $0x188] sm:$0xff]
        %v1467 = vld [vmem:[%s250 + $0x190] sm:$0xff]
        %v1468 = vld [vmem:[%s250 + $0x198] sm:$0xff]
        %v1469 = vld [vmem:[%s250 + $0x1a0] sm:$0xff]
        %v1470 = vld [vmem:[%s250 + $0x1a8] sm:$0xff]
        %v1471 = vld [vmem:[%s250 + $0x1b0] sm:$0xff]
        %v1472 = vld [vmem:[%s250 + $0x1b8] sm:$0xff]
        %v1473 = vld [vmem:[%s250 + $0x1c0] sm:$0xff]
        %v1474 = vld [vmem:[%s250 + $0x1c8] sm:$0xff]
        %v1475 = vld [vmem:[%s250 + $0x1d0] sm:$0xff]
        %v1476 = vld [vmem:[%s250 + $0x1d8] sm:$0xff]
        %v1477 = vld [vmem:[%s250 + $0x1e0] sm:$0xff]
        %v1478 = vld [vmem:[%s250 + $0x1e8] sm:$0xff]
        %v1479 = vld [vmem:[%s250 + $0x1f0] sm:$0xff]
        %v1480 = vld [vmem:[%s250 + $0x1f8] sm:$0xff]
        %v1481 = vld [vmem:[%s250 + $0x200] sm:$0xff]
        %v1482 = vld [vmem:[%s250 + $0x208] sm:$0xff]
        %v1483 = vld [vmem:[%s250 + $0x210] sm:$0xff]
        %v1484 = vld [vmem:[%s250 + $0x218] sm:$0xff]
        %v1485 = vld [vmem:[%s250 + $0x220] sm:$0xff]
        %v1486 = vld [vmem:[%s250 + $0x228] sm:$0xff]
        %v1487 = vld [vmem:[%s250 + $0x230] sm:$0xff]
        %v1488 = vld [vmem:[%s250 + $0x238] sm:$0xff]
        %v1489 = vld [vmem:[%s250 + $0x240] sm:$0xff]
        %v1490 = vld [vmem:[%s250 + $0x248] sm:$0xff]
        %v1491 = vld [vmem:[%s250 + $0x250] sm:$0xff]
        %v1492 = vld [vmem:[%s250 + $0x258] sm:$0xff]
        %v1493 = vld [vmem:[%s250 + $0x260] sm:$0xff]
        %v1494 = vld [vmem:[%s250 + $0x268] sm:$0xff]
        %v1495 = vld [vmem:[%s250 + $0x270] sm:$0xff]
        %v1496 = vld [vmem:[%s250 + $0x278] sm:$0xff]
        %v1497 = vld [vmem:[%s250 + $0x280] sm:$0xff]
        %v1498 = vld [vmem:[%s250 + $0x288] sm:$0xff]
        %v1499 = vld [vmem:[%s250 + $0x290] sm:$0xff]
        %v1500 = vld [vmem:[%s250 + $0x298] sm:$0xff]
        %v1501 = vld [vmem:[%s250 + $0x2a0] sm:$0xff]
        %v1502 = vld [vmem:[%s250 + $0x2a8] sm:$0xff]
        %v1503 = vld [vmem:[%s250 + $0x2b0] sm:$0xff]
        %v1504 = vld [vmem:[%s250 + $0x2b8] sm:$0xff]
        %v1505 = vld [vmem:[%s250 + $0x2c0] sm:$0xff]
        %v1506 = vld [vmem:[%s250 + $0x2c8] sm:$0xff]
        %v1507 = vld [vmem:[%s250 + $0x2d0] sm:$0xff]
        %v1508 = vld [vmem:[%s250 + $0x2d8] sm:$0xff]
        %v1509 = vld [vmem:[%s250 + $0x2e0] sm:$0xff]
        %v1510 = vld [vmem:[%s250 + $0x2e8] sm:$0xff]
        %v1511 = vld [vmem:[%s250 + $0x2f0] sm:$0xff]
        %v1512 = vld [vmem:[%s250 + $0x2f8] sm:$0xff]
        %v1513 = vld [vmem:[%s250 + $0x300] sm:$0xff]
        %v1514 = vld [vmem:[%s250 + $0x308] sm:$0xff]
        %v1515 = vld [vmem:[%s250 + $0x310] sm:$0xff]
        %v1516 = vld [vmem:[%s250 + $0x318] sm:$0xff]
        %v1517 = vld [vmem:[%s250 + $0x320] sm:$0xff]
        %v1518 = vld [vmem:[%s250 + $0x328] sm:$0xff]
        %v1519 = vld [vmem:[%s250 + $0x330] sm:$0xff]
        %v1520 = vld [vmem:[%s250 + $0x338] sm:$0xff]
        %v1521 = vld [vmem:[%s250 + $0x340] sm:$0xff]
        %v1522 = vld [vmem:[%s250 + $0x348] sm:$0xff]
        %v1523 = vld [vmem:[%s250 + $0x350] sm:$0xff]
        %v1524 = vld [vmem:[%s250 + $0x358] sm:$0xff]
        %v1525 = vld [vmem:[%s250 + $0x360] sm:$0xff]
        %v1526 = vld [vmem:[%s250 + $0x368] sm:$0xff]
        %v1527 = vld [vmem:[%s250 + $0x370] sm:$0xff]
        %v1528 = vld [vmem:[%s250 + $0x378] sm:$0xff]
        %v1529 = vld [vmem:[%s250 + $0x380] sm:$0xff]
        %v1530 = vld [vmem:[%s250 + $0x388] sm:$0xff]
        %v1531 = vld [vmem:[%s250 + $0x390] sm:$0xff]
        %v1532 = vld [vmem:[%s250 + $0x398] sm:$0xff]
        %v1533 = vld [vmem:[%s250 + $0x3a0] sm:$0xff]
        %v1534 = vld [vmem:[%s250 + $0x3a8] sm:$0xff]
        %v1535 = vld [vmem:[%s250 + $0x3b0] sm:$0xff]
        %v1536 = vld [vmem:[%s250 + $0x3b8] sm:$0xff]
        %v1537 = vld [vmem:[%s250 + $0x3c0] sm:$0xff]
        %v1538 = vld [vmem:[%s250 + $0x3c8] sm:$0xff]
        %v1539 = vadd.f32 %v931, %v1417
        %v1540 = vadd.f32 %v934, %v1418
        %v1541 = vadd.f32 %v939, %v1419
        %v1542 = vadd.f32 %v942, %v1420
        %v1543 = vadd.f32 %v947, %v1421
        %v1544 = vadd.f32 %v950, %v1422
        %v1545 = vadd.f32 %v955, %v1423
        %v1546 = vadd.f32 %v958, %v1424
        %v1547 = vadd.f32 %v963, %v1425
        %v1548 = vadd.f32 %v966, %v1426
        %v1549 = vadd.f32 %v971, %v1427
        %v1550 = vadd.f32 %v974, %v1428
        %v1551 = vadd.f32 %v979, %v1429
        %v1552 = vadd.f32 %v982, %v1430
        %v1553 = vadd.f32 %v987, %v1431
        %v1554 = vadd.f32 %v990, %v1432
        %v1555 = vadd.f32 %v995, %v1433
        %v1556 = vadd.f32 %v998, %v1434
        %v1557 = vadd.f32 %v1003, %v1435
        %v1558 = vadd.f32 %v1006, %v1436
        %v1559 = vadd.f32 %v1011, %v1437
        %v1560 = vadd.f32 %v1014, %v1438
        %v1561 = vadd.f32 %v1019, %v1439
        %v1562 = vadd.f32 %v1022, %v1440
        %v1563 = vadd.f32 %v1027, %v1441
        %v1564 = vadd.f32 %v1030, %v1442
        %v1565 = vadd.f32 %v1035, %v1443
        %v1566 = vadd.f32 %v1038, %v1444
        %v1567 = vadd.f32 %v1043, %v1445
        %v1568 = vadd.f32 %v1046, %v1446
        %v1569 = vadd.f32 %v1051, %v1447
        %v1570 = vadd.f32 %v1054, %v1448
        %v1571 = vadd.f32 %v1059, %v1449
        %v1572 = vadd.f32 %v1062, %v1450
        %v1573 = vadd.f32 %v1067, %v1451
        %v1574 = vadd.f32 %v1070, %v1452
        %v1575 = vadd.f32 %v1075, %v1453
        %v1576 = vadd.f32 %v1078, %v1454
        %v1577 = vadd.f32 %v1083, %v1455
        %v1578 = vadd.f32 %v1086, %v1456
        %v1579 = vadd.f32 %v1091, %v1457
        %v1580 = vadd.f32 %v1094, %v1458
        %v1581 = vadd.f32 %v1099, %v1459
        %v1582 = vadd.f32 %v1102, %v1460
        %v1583 = vadd.f32 %v1107, %v1461
        %v1584 = vadd.f32 %v1110, %v1462
        %v1585 = vadd.f32 %v1115, %v1463
        %v1586 = vadd.f32 %v1118, %v1464
        %v1587 = vadd.f32 %v1123, %v1465
        %v1588 = vadd.f32 %v1126, %v1466
        %v1589 = vadd.f32 %v1131, %v1467
        %v1590 = vadd.f32 %v1134, %v1468
        %v1591 = vadd.f32 %v1139, %v1469
        %v1592 = vadd.f32 %v1142, %v1470
        %v1593 = vadd.f32 %v1147, %v1471
        %v1594 = vadd.f32 %v1150, %v1472
        %v1595 = vadd.f32 %v1155, %v1473
        %v1596 = vadd.f32 %v1158, %v1474
        %v1597 = vadd.f32 %v1163, %v1475
        %v1598 = vadd.f32 %v1166, %v1476
        %v1599 = vadd.f32 %v1171, %v1477
        %v1600 = vadd.f32 %v1174, %v1478
        %v1601 = vadd.f32 %v1179, %v1479
        %v1602 = vadd.f32 %v1182, %v1480
        %v1603 = vadd.f32 %v1187, %v1481
        %v1604 = vadd.f32 %v1190, %v1482
        %v1605 = vadd.f32 %v1195, %v1483
        %v1606 = vadd.f32 %v1198, %v1484
        %v1607 = vadd.f32 %v1203, %v1485
        %v1608 = vadd.f32 %v1206, %v1486
        %v1609 = vadd.f32 %v1211, %v1487
        %v1610 = vadd.f32 %v1214, %v1488
        %v1611 = vadd.f32 %v1219, %v1489
        %v1612 = vadd.f32 %v1222, %v1490
        %v1613 = vadd.f32 %v1227, %v1491
        %v1614 = vadd.f32 %v1230, %v1492
        %v1615 = vadd.f32 %v1235, %v1493
        %v1616 = vadd.f32 %v1238, %v1494
        %v1617 = vadd.f32 %v1243, %v1495
        %v1618 = vadd.f32 %v1246, %v1496
        %v1619 = vadd.f32 %v1251, %v1497
        %v1620 = vadd.f32 %v1254, %v1498
        %v1621 = vadd.f32 %v1259, %v1499
        %v1622 = vadd.f32 %v1262, %v1500
        %v1623 = vadd.f32 %v1267, %v1501
        %v1624 = vadd.f32 %v1270, %v1502
        %v1625 = vadd.f32 %v1275, %v1503
        %v1626 = vadd.f32 %v1278, %v1504
        %v1627 = vadd.f32 %v1283, %v1505
        %v1628 = vadd.f32 %v1286, %v1506
        %v1629 = vadd.f32 %v1291, %v1507
        %v1630 = vadd.f32 %v1294, %v1508
        %v1631 = vadd.f32 %v1299, %v1509
        %v1632 = vadd.f32 %v1302, %v1510
        %v1633 = vadd.f32 %v1307, %v1511
        %v1634 = vadd.f32 %v1310, %v1512
        %v1635 = vadd.f32 %v1315, %v1513
        %v1636 = vadd.f32 %v1318, %v1514
        %v1637 = vadd.f32 %v1323, %v1515
        %v1638 = vadd.f32 %v1326, %v1516
        %v1639 = vadd.f32 %v1331, %v1517
        %v1640 = vadd.f32 %v1334, %v1518
        %v1641 = vadd.f32 %v1339, %v1519
        %v1642 = vadd.f32 %v1342, %v1520
        %v1643 = vadd.f32 %v1347, %v1521
        %v1644 = vadd.f32 %v1350, %v1522
        %v1645 = vadd.f32 %v1355, %v1523
        %v1646 = vadd.f32 %v1358, %v1524
        %v1647 = vadd.f32 %v1363, %v1525
        %v1648 = vadd.f32 %v1366, %v1526
        %v1649 = vadd.f32 %v1371, %v1527
        %v1650 = vadd.f32 %v1374, %v1528
        %v1651 = vadd.f32 %v1379, %v1529
        %v1652 = vadd.f32 %v1382, %v1530
        %v1653 = vadd.f32 %v1387, %v1531
        %v1654 = vadd.f32 %v1390, %v1532
        %v1655 = vadd.f32 %v1395, %v1533
        %v1656 = vadd.f32 %v1398, %v1534
        %v1657 = vadd.f32 %v1403, %v1535
        %v1658 = vadd.f32 %v1406, %v1536
        %v1659 = vadd.f32 %v1411, %v1537
        %v1660 = vadd.f32 %v1414, %v1538
        %v1661 = vmax.f32 %v1539, 0.0
        %v1662 = vmax.f32 %v1540, 0.0
        %v1663 = vmax.f32 %v1541, 0.0
        %v1664 = vmax.f32 %v1542, 0.0
        %v1665 = vmax.f32 %v1543, 0.0
        %v1666 = vmax.f32 %v1544, 0.0
        %v1667 = vmax.f32 %v1545, 0.0
        %v1668 = vmax.f32 %v1546, 0.0
        %v1669 = vmax.f32 %v1547, 0.0
        %v1670 = vmax.f32 %v1548, 0.0
        %v1671 = vmax.f32 %v1549, 0.0
        %v1672 = vmax.f32 %v1550, 0.0
        %v1673 = vmax.f32 %v1551, 0.0
        %v1674 = vmax.f32 %v1552, 0.0
        %v1675 = vmax.f32 %v1553, 0.0
        %v1676 = vmax.f32 %v1554, 0.0
        %v1677 = vmax.f32 %v1555, 0.0
        %v1678 = vmax.f32 %v1556, 0.0
        %v1679 = vmax.f32 %v1557, 0.0
        %v1680 = vmax.f32 %v1558, 0.0
        %v1681 = vmax.f32 %v1559, 0.0
        %v1682 = vmax.f32 %v1560, 0.0
        %v1683 = vmax.f32 %v1561, 0.0
        %v1684 = vmax.f32 %v1562, 0.0
        %v1685 = vmax.f32 %v1563, 0.0
        %v1686 = vmax.f32 %v1564, 0.0
        %v1687 = vmax.f32 %v1565, 0.0
        %v1688 = vmax.f32 %v1566, 0.0
        %v1689 = vmax.f32 %v1567, 0.0
        %v1690 = vmax.f32 %v1568, 0.0
        %v1691 = vmax.f32 %v1569, 0.0
        %v1692 = vmax.f32 %v1570, 0.0
        %v1693 = vmax.f32 %v1571, 0.0
        %v1694 = vmax.f32 %v1572, 0.0
        %v1695 = vmax.f32 %v1573, 0.0
        %v1696 = vmax.f32 %v1574, 0.0
        %v1697 = vmax.f32 %v1575, 0.0
        %v1698 = vmax.f32 %v1576, 0.0
        %v1699 = vmax.f32 %v1577, 0.0
        %v1700 = vmax.f32 %v1578, 0.0
        %v1701 = vmax.f32 %v1579, 0.0
        %v1702 = vmax.f32 %v1580, 0.0
        %v1703 = vmax.f32 %v1581, 0.0
        %v1704 = vmax.f32 %v1582, 0.0
        %v1705 = vmax.f32 %v1583, 0.0
        %v1706 = vmax.f32 %v1584, 0.0
        %v1707 = vmax.f32 %v1585, 0.0
        %v1708 = vmax.f32 %v1586, 0.0
        %v1709 = vmax.f32 %v1587, 0.0
        %v1710 = vmax.f32 %v1588, 0.0
        %v1711 = vmax.f32 %v1589, 0.0
        %v1712 = vmax.f32 %v1590, 0.0
        %v1713 = vmax.f32 %v1591, 0.0
        %v1714 = vmax.f32 %v1592, 0.0
        %v1715 = vmax.f32 %v1593, 0.0
        %v1716 = vmax.f32 %v1594, 0.0
        %v1717 = vmax.f32 %v1595, 0.0
        %v1718 = vmax.f32 %v1596, 0.0
        %v1719 = vmax.f32 %v1597, 0.0
        %v1720 = vmax.f32 %v1598, 0.0
        %v1721 = vmax.f32 %v1599, 0.0
        %v1722 = vmax.f32 %v1600, 0.0
        %v1723 = vmax.f32 %v1601, 0.0
        %v1724 = vmax.f32 %v1602, 0.0
        %v1725 = vmax.f32 %v1603, 0.0
        %v1726 = vmax.f32 %v1604, 0.0
        %v1727 = vmax.f32 %v1605, 0.0
        %v1728 = vmax.f32 %v1606, 0.0
        %v1729 = vmax.f32 %v1607, 0.0
        %v1730 = vmax.f32 %v1608, 0.0
        %v1731 = vmax.f32 %v1609, 0.0
        %v1732 = vmax.f32 %v1610, 0.0
        %v1733 = vmax.f32 %v1611, 0.0
        %v1734 = vmax.f32 %v1612, 0.0
        %v1735 = vmax.f32 %v1613, 0.0
        %v1736 = vmax.f32 %v1614, 0.0
        %v1737 = vmax.f32 %v1615, 0.0
        %v1738 = vmax.f32 %v1616, 0.0
        %v1739 = vmax.f32 %v1617, 0.0
        %v1740 = vmax.f32 %v1618, 0.0
        %v1741 = vmax.f32 %v1619, 0.0
        %v1742 = vmax.f32 %v1620, 0.0
        %v1743 = vmax.f32 %v1621, 0.0
        %v1744 = vmax.f32 %v1622, 0.0
        %v1745 = vmax.f32 %v1623, 0.0
        %v1746 = vmax.f32 %v1624, 0.0
        %v1747 = vmax.f32 %v1625, 0.0
        %v1748 = vmax.f32 %v1626, 0.0
        %v1749 = vmax.f32 %v1627, 0.0
        %v1750 = vmax.f32 %v1628, 0.0
        %v1751 = vmax.f32 %v1629, 0.0
        %v1752 = vmax.f32 %v1630, 0.0
        %v1753 = vmax.f32 %v1631, 0.0
        %v1754 = vmax.f32 %v1632, 0.0
        %v1755 = vmax.f32 %v1633, 0.0
        %v1756 = vmax.f32 %v1634, 0.0
        %v1757 = vmax.f32 %v1635, 0.0
        %v1758 = vmax.f32 %v1636, 0.0
        %v1759 = vmax.f32 %v1637, 0.0
        %v1760 = vmax.f32 %v1638, 0.0
        %v1761 = vmax.f32 %v1639, 0.0
        %v1762 = vmax.f32 %v1640, 0.0
        %v1763 = vmax.f32 %v1641, 0.0
        %v1764 = vmax.f32 %v1642, 0.0
        %v1765 = vmax.f32 %v1643, 0.0
        %v1766 = vmax.f32 %v1644, 0.0
        %v1767 = vmax.f32 %v1645, 0.0
        %v1768 = vmax.f32 %v1646, 0.0
        %v1769 = vmax.f32 %v1647, 0.0
        %v1770 = vmax.f32 %v1648, 0.0
        %v1771 = vmax.f32 %v1649, 0.0
        %v1772 = vmax.f32 %v1650, 0.0
        %v1773 = vmax.f32 %v1651, 0.0
        %v1774 = vmax.f32 %v1652, 0.0
        %v1775 = vmax.f32 %v1653, 0.0
        %v1776 = vmax.f32 %v1654, 0.0
        %v1777 = vmax.f32 %v1655, 0.0
        %v1778 = vmax.f32 %v1656, 0.0
        %v1779 = vmax.f32 %v1657, 0.0
        %v1780 = vmax.f32 %v1658, 0.0
        %v1781 = vmax.f32 %v1659, 0.0
        %v1782 = vmax.f32 %v1660, 0.0
        %vm1783 = vcmask 523264
        %1784 = vst.msk [vmem:[%s227] sm:$0xff] %vm1783, %v1661
        %1785 = vst.msk [vmem:[%s227 + $0x8] sm:$0xff] %vm1783, %v1662
        %1786 = vst.msk [vmem:[%s227 + $0x10] sm:$0xff] %vm1783, %v1663
        %1787 = vst.msk [vmem:[%s227 + $0x18] sm:$0xff] %vm1783, %v1664
        %1788 = vst.msk [vmem:[%s227 + $0x20] sm:$0xff] %vm1783, %v1665
        %1789 = vst.msk [vmem:[%s227 + $0x28] sm:$0xff] %vm1783, %v1666
        %1790 = vst.msk [vmem:[%s227 + $0x30] sm:$0xff] %vm1783, %v1667
        %1791 = vst.msk [vmem:[%s227 + $0x38] sm:$0xff] %vm1783, %v1668
        %1792 = vst.msk [vmem:[%s227 + $0x40] sm:$0xff] %vm1783, %v1669
        %1793 = vst.msk [vmem:[%s227 + $0x48] sm:$0xff] %vm1783, %v1670
        %1794 = vst.msk [vmem:[%s227 + $0x50] sm:$0xff] %vm1783, %v1671
        %1795 = vst.msk [vmem:[%s227 + $0x58] sm:$0xff] %vm1783, %v1672
        %1796 = vst.msk [vmem:[%s227 + $0x60] sm:$0xff] %vm1783, %v1673
        %1797 = vst.msk [vmem:[%s227 + $0x68] sm:$0xff] %vm1783, %v1674
        %1798 = vst.msk [vmem:[%s227 + $0x70] sm:$0xff] %vm1783, %v1675
        %1799 = vst.msk [vmem:[%s227 + $0x78] sm:$0xff] %vm1783, %v1676
        %1800 = vst.msk [vmem:[%s227 + $0x80] sm:$0xff] %vm1783, %v1677
        %1801 = vst.msk [vmem:[%s227 + $0x88] sm:$0xff] %vm1783, %v1678
        %1802 = vst.msk [vmem:[%s227 + $0x90] sm:$0xff] %vm1783, %v1679
        %1803 = vst.msk [vmem:[%s227 + $0x98] sm:$0xff] %vm1783, %v1680
        %1804 = vst.msk [vmem:[%s227 + $0xa0] sm:$0xff] %vm1783, %v1681
        %1805 = vst.msk [vmem:[%s227 + $0xa8] sm:$0xff] %vm1783, %v1682
        %1806 = vst.msk [vmem:[%s227 + $0xb0] sm:$0xff] %vm1783, %v1683
        %1807 = vst.msk [vmem:[%s227 + $0xb8] sm:$0xff] %vm1783, %v1684
        %1808 = vst.msk [vmem:[%s227 + $0xc0] sm:$0xff] %vm1783, %v1685
        %1809 = vst.msk [vmem:[%s227 + $0xc8] sm:$0xff] %vm1783, %v1686
        %1810 = vst.msk [vmem:[%s227 + $0xd0] sm:$0xff] %vm1783, %v1687
        %1811 = vst.msk [vmem:[%s227 + $0xd8] sm:$0xff] %vm1783, %v1688
        %1812 = vst.msk [vmem:[%s227 + $0xe0] sm:$0xff] %vm1783, %v1689
        %1813 = vst.msk [vmem:[%s227 + $0xe8] sm:$0xff] %vm1783, %v1690
        %1814 = vst.msk [vmem:[%s227 + $0xf0] sm:$0xff] %vm1783, %v1691
        %1815 = vst.msk [vmem:[%s227 + $0xf8] sm:$0xff] %vm1783, %v1692
        %1816 = vst.msk [vmem:[%s227 + $0x100] sm:$0xff] %vm1783, %v1693
        %1817 = vst.msk [vmem:[%s227 + $0x108] sm:$0xff] %vm1783, %v1694
        %1818 = vst.msk [vmem:[%s227 + $0x110] sm:$0xff] %vm1783, %v1695
        %1819 = vst.msk [vmem:[%s227 + $0x118] sm:$0xff] %vm1783, %v1696
        %1820 = vst.msk [vmem:[%s227 + $0x120] sm:$0xff] %vm1783, %v1697
        %1821 = vst.msk [vmem:[%s227 + $0x128] sm:$0xff] %vm1783, %v1698
        %1822 = vst.msk [vmem:[%s227 + $0x130] sm:$0xff] %vm1783, %v1699
        %1823 = vst.msk [vmem:[%s227 + $0x138] sm:$0xff] %vm1783, %v1700
        %1824 = vst.msk [vmem:[%s227 + $0x140] sm:$0xff] %vm1783, %v1701
        %1825 = vst.msk [vmem:[%s227 + $0x148] sm:$0xff] %vm1783, %v1702
        %1826 = vst.msk [vmem:[%s227 + $0x150] sm:$0xff] %vm1783, %v1703
        %1827 = vst.msk [vmem:[%s227 + $0x158] sm:$0xff] %vm1783, %v1704
        %1828 = vst.msk [vmem:[%s227 + $0x160] sm:$0xff] %vm1783, %v1705
        %1829 = vst.msk [vmem:[%s227 + $0x168] sm:$0xff] %vm1783, %v1706
        %1830 = vst.msk [vmem:[%s227 + $0x170] sm:$0xff] %vm1783, %v1707
        %1831 = vst.msk [vmem:[%s227 + $0x178] sm:$0xff] %vm1783, %v1708
        %1832 = vst.msk [vmem:[%s227 + $0x180] sm:$0xff] %vm1783, %v1709
        %1833 = vst.msk [vmem:[%s227 + $0x188] sm:$0xff] %vm1783, %v1710
        %1834 = vst.msk [vmem:[%s227 + $0x190] sm:$0xff] %vm1783, %v1711
        %1835 = vst.msk [vmem:[%s227 + $0x198] sm:$0xff] %vm1783, %v1712
        %1836 = vst.msk [vmem:[%s227 + $0x1a0] sm:$0xff] %vm1783, %v1713
        %1837 = vst.msk [vmem:[%s227 + $0x1a8] sm:$0xff] %vm1783, %v1714
        %1838 = vst.msk [vmem:[%s227 + $0x1b0] sm:$0xff] %vm1783, %v1715
        %1839 = vst.msk [vmem:[%s227 + $0x1b8] sm:$0xff] %vm1783, %v1716
        %1840 = vst.msk [vmem:[%s227 + $0x1c0] sm:$0xff] %vm1783, %v1717
        %1841 = vst.msk [vmem:[%s227 + $0x1c8] sm:$0xff] %vm1783, %v1718
        %1842 = vst.msk [vmem:[%s227 + $0x1d0] sm:$0xff] %vm1783, %v1719
        %1843 = vst.msk [vmem:[%s227 + $0x1d8] sm:$0xff] %vm1783, %v1720
        %1844 = vst.msk [vmem:[%s227 + $0x1e0] sm:$0xff] %vm1783, %v1721
        %1845 = vst.msk [vmem:[%s227 + $0x1e8] sm:$0xff] %vm1783, %v1722
        %1846 = vst.msk [vmem:[%s227 + $0x1f0] sm:$0xff] %vm1783, %v1723
        %1847 = vst.msk [vmem:[%s227 + $0x1f8] sm:$0xff] %vm1783, %v1724
        %1848 = vst.msk [vmem:[%s227 + $0x200] sm:$0xff] %vm1783, %v1725
        %1849 = vst.msk [vmem:[%s227 + $0x208] sm:$0xff] %vm1783, %v1726
        %1850 = vst.msk [vmem:[%s227 + $0x210] sm:$0xff] %vm1783, %v1727
        %1851 = vst.msk [vmem:[%s227 + $0x218] sm:$0xff] %vm1783, %v1728
        %1852 = vst.msk [vmem:[%s227 + $0x220] sm:$0xff] %vm1783, %v1729
        %1853 = vst.msk [vmem:[%s227 + $0x228] sm:$0xff] %vm1783, %v1730
        %1854 = vst.msk [vmem:[%s227 + $0x230] sm:$0xff] %vm1783, %v1731
        %1855 = vst.msk [vmem:[%s227 + $0x238] sm:$0xff] %vm1783, %v1732
        %1856 = vst.msk [vmem:[%s227 + $0x240] sm:$0xff] %vm1783, %v1733
        %1857 = vst.msk [vmem:[%s227 + $0x248] sm:$0xff] %vm1783, %v1734
        %1858 = vst.msk [vmem:[%s227 + $0x250] sm:$0xff] %vm1783, %v1735
        %1859 = vst.msk [vmem:[%s227 + $0x258] sm:$0xff] %vm1783, %v1736
        %1860 = vst.msk [vmem:[%s227 + $0x260] sm:$0xff] %vm1783, %v1737
        %1861 = vst.msk [vmem:[%s227 + $0x268] sm:$0xff] %vm1783, %v1738
        %1862 = vst.msk [vmem:[%s227 + $0x270] sm:$0xff] %vm1783, %v1739
        %1863 = vst.msk [vmem:[%s227 + $0x278] sm:$0xff] %vm1783, %v1740
        %1864 = vst.msk [vmem:[%s227 + $0x280] sm:$0xff] %vm1783, %v1741
        %1865 = vst.msk [vmem:[%s227 + $0x288] sm:$0xff] %vm1783, %v1742
        %1866 = vst.msk [vmem:[%s227 + $0x290] sm:$0xff] %vm1783, %v1743
        %1867 = vst.msk [vmem:[%s227 + $0x298] sm:$0xff] %vm1783, %v1744
        %1868 = vst.msk [vmem:[%s227 + $0x2a0] sm:$0xff] %vm1783, %v1745
        %1869 = vst.msk [vmem:[%s227 + $0x2a8] sm:$0xff] %vm1783, %v1746
        %1870 = vst.msk [vmem:[%s227 + $0x2b0] sm:$0xff] %vm1783, %v1747
        %1871 = vst.msk [vmem:[%s227 + $0x2b8] sm:$0xff] %vm1783, %v1748
        %1872 = vst.msk [vmem:[%s227 + $0x2c0] sm:$0xff] %vm1783, %v1749
        %1873 = vst.msk [vmem:[%s227 + $0x2c8] sm:$0xff] %vm1783, %v1750
        %1874 = vst.msk [vmem:[%s227 + $0x2d0] sm:$0xff] %vm1783, %v1751
        %1875 = vst.msk [vmem:[%s227 + $0x2d8] sm:$0xff] %vm1783, %v1752
        %1876 = vst.msk [vmem:[%s227 + $0x2e0] sm:$0xff] %vm1783, %v1753
        %1877 = vst.msk [vmem:[%s227 + $0x2e8] sm:$0xff] %vm1783, %v1754
        %1878 = vst.msk [vmem:[%s227 + $0x2f0] sm:$0xff] %vm1783, %v1755
        %1879 = vst.msk [vmem:[%s227 + $0x2f8] sm:$0xff] %vm1783, %v1756
        %1880 = vst.msk [vmem:[%s227 + $0x300] sm:$0xff] %vm1783, %v1757
        %1881 = vst.msk [vmem:[%s227 + $0x308] sm:$0xff] %vm1783, %v1758
        %1882 = vst.msk [vmem:[%s227 + $0x310] sm:$0xff] %vm1783, %v1759
        %1883 = vst.msk [vmem:[%s227 + $0x318] sm:$0xff] %vm1783, %v1760
        %1884 = vst.msk [vmem:[%s227 + $0x320] sm:$0xff] %vm1783, %v1761
        %1885 = vst.msk [vmem:[%s227 + $0x328] sm:$0xff] %vm1783, %v1762
        %1886 = vst.msk [vmem:[%s227 + $0x330] sm:$0xff] %vm1783, %v1763
        %1887 = vst.msk [vmem:[%s227 + $0x338] sm:$0xff] %vm1783, %v1764
        %1888 = vst.msk [vmem:[%s227 + $0x340] sm:$0xff] %vm1783, %v1765
        %1889 = vst.msk [vmem:[%s227 + $0x348] sm:$0xff] %vm1783, %v1766
        %1890 = vst.msk [vmem:[%s227 + $0x350] sm:$0xff] %vm1783, %v1767
        %1891 = vst.msk [vmem:[%s227 + $0x358] sm:$0xff] %vm1783, %v1768
        %1892 = vst.msk [vmem:[%s227 + $0x360] sm:$0xff] %vm1783, %v1769
        %1893 = vst.msk [vmem:[%s227 + $0x368] sm:$0xff] %vm1783, %v1770
        %1894 = vst.msk [vmem:[%s227 + $0x370] sm:$0xff] %vm1783, %v1771
        %1895 = vst.msk [vmem:[%s227 + $0x378] sm:$0xff] %vm1783, %v1772
        %1896 = vst.msk [vmem:[%s227 + $0x380] sm:$0xff] %vm1783, %v1773
        %1897 = vst.msk [vmem:[%s227 + $0x388] sm:$0xff] %vm1783, %v1774
        %1898 = vst.msk [vmem:[%s227 + $0x390] sm:$0xff] %vm1783, %v1775
        %1899 = vst.msk [vmem:[%s227 + $0x398] sm:$0xff] %vm1783, %v1776
        %1900 = vst.msk [vmem:[%s227 + $0x3a0] sm:$0xff] %vm1783, %v1777
        %1901 = vst.msk [vmem:[%s227 + $0x3a8] sm:$0xff] %vm1783, %v1778
        %1902 = vst.msk [vmem:[%s227 + $0x3b0] sm:$0xff] %vm1783, %v1779
        %1903 = vst.msk [vmem:[%s227 + $0x3b8] sm:$0xff] %vm1783, %v1780
        %1904 = vst.msk [vmem:[%s227 + $0x3c0] sm:$0xff] %vm1783, %v1781
        %1905 = vst.msk [vmem:[%s227 + $0x3c8] sm:$0xff] %vm1783, %v1782
        %s1906 = sand.u32 %s117, 1
        %s1907 = sand.u32 %s117, 1
        %s1908 = smul.addr %s1907, 976
        %s1909 = scalar_lea.vmem [#allocation2], %s1908
        // Predicated region
        $region37: #{bottleneck_up_forward.7} parent=35 // pred_check
          %p1910 = pneg %p127
        $region38: #{bottleneck_up_forward.7} parent=35 // pred_check_branch
          %1912 = sbr.rel (%p1910) target = $region40
        $region39: #{bottleneck_up_forward.7} parent=35 // pred_region
          %s1913 = smul.u32 122, %s15
          %s1914 = ssub.s32 241, %s1913
          %p1915 = scmp.lt.s32.totalorder %s1914, 122
          %s1916 = scalar_select %p1915, %s1914, 122
          %s1917 = smul.u32 128, %s1916
          %p1918 = scmp.ne.s32.totalorder 0, %s1917
          %s1919 = smul.addr %s1913, 8
          %s1920 = scalar_lea.vmem %s4, %s1919
          // Predicated region
          $region41: #{bottleneck_up_forward.7} parent=39 // pred_check
            %p1921 = pneg %p1918
          $region42: #{bottleneck_up_forward.7} parent=39 // pred_check_branch
            %1923 = sbr.rel (%p1921) target = $region44
          $region43: #{bottleneck_up_forward.7} parent=39 // pred_region
            // Predicated region
            $region45: #{bottleneck_up_forward.7} parent=43 // pred_check
              _
            $region46: #{bottleneck_up_forward.7} parent=43 // pred_check_branch
              %1925 = sbr.rel (0) target = $region48
            $region47: #{bottleneck_up_forward.7} parent=43 // pred_region
              // Predicated region
              $region67: #{bottleneck_up_forward.7} parent=47 // pred_check
                _
              $region68: #{bottleneck_up_forward.7} parent=47 // pred_check_branch
                %2101 = sbr.rel (0) target = $region70
              $region69: #{bottleneck_up_forward.7} parent=47 // pred_region
                %s2102 = sshrl.u32 %s1916, 6
                // While loop
                $region71: #{bottleneck_up_forward.7} parent=69 // loop_pre_header
                  _
                $region72: #{bottleneck_up_forward.7} parent=69 // loop_header
                  %s2104 = sphi 0, %s2106
                  %p2105 = scmp.ge.s32.totalorder %s2104, %s2102
                  %s2109 = sphi 0, %s2242
                  %s2110 = sphi %s1909, %s2245
                  %s2111 = sphi %s1920, %s2246
                $region73: #{bottleneck_up_forward.7} parent=69 // loop_header_branch
                  %2108 = sbr.rel (%p2105) target = $region77
                $region74: #{bottleneck_up_forward.7} parent=69 // loop_body
                  %v2112 = vld [vmem:[%s2110] sm:$0xff]
                  %2113 = vst [vmem:[%s2111] sm:$0xff] %v2112
                  %v2114 = vld [vmem:[%s2110 + $0x8] sm:$0xff]
                  %2115 = vst [vmem:[%s2111 + $0x8] sm:$0xff] %v2114
                  %v2116 = vld [vmem:[%s2110 + $0x10] sm:$0xff]
                  %2117 = vst [vmem:[%s2111 + $0x10] sm:$0xff] %v2116
                  %v2118 = vld [vmem:[%s2110 + $0x18] sm:$0xff]
                  %2119 = vst [vmem:[%s2111 + $0x18] sm:$0xff] %v2118
                  %v2120 = vld [vmem:[%s2110 + $0x20] sm:$0xff]
                  %2121 = vst [vmem:[%s2111 + $0x20] sm:$0xff] %v2120
                  %v2122 = vld [vmem:[%s2110 + $0x28] sm:$0xff]
                  %2123 = vst [vmem:[%s2111 + $0x28] sm:$0xff] %v2122
                  %v2124 = vld [vmem:[%s2110 + $0x30] sm:$0xff]
                  %2125 = vst [vmem:[%s2111 + $0x30] sm:$0xff] %v2124
                  %v2126 = vld [vmem:[%s2110 + $0x38] sm:$0xff]
                  %2127 = vst [vmem:[%s2111 + $0x38] sm:$0xff] %v2126
                  %v2128 = vld [vmem:[%s2110 + $0x40] sm:$0xff]
                  %2129 = vst [vmem:[%s2111 + $0x40] sm:$0xff] %v2128
                  %v2130 = vld [vmem:[%s2110 + $0x48] sm:$0xff]
                  %2131 = vst [vmem:[%s2111 + $0x48] sm:$0xff] %v2130
                  %v2132 = vld [vmem:[%s2110 + $0x50] sm:$0xff]
                  %2133 = vst [vmem:[%s2111 + $0x50] sm:$0xff] %v2132
                  %v2134 = vld [vmem:[%s2110 + $0x58] sm:$0xff]
                  %2135 = vst [vmem:[%s2111 + $0x58] sm:$0xff] %v2134
                  %v2136 = vld [vmem:[%s2110 + $0x60] sm:$0xff]
                  %2137 = vst [vmem:[%s2111 + $0x60] sm:$0xff] %v2136
                  %v2138 = vld [vmem:[%s2110 + $0x68] sm:$0xff]
                  %2139 = vst [vmem:[%s2111 + $0x68] sm:$0xff] %v2138
                  %v2140 = vld [vmem:[%s2110 + $0x70] sm:$0xff]
                  %2141 = vst [vmem:[%s2111 + $0x70] sm:$0xff] %v2140
                  %v2142 = vld [vmem:[%s2110 + $0x78] sm:$0xff]
                  %2143 = vst [vmem:[%s2111 + $0x78] sm:$0xff] %v2142
                  %v2144 = vld [vmem:[%s2110 + $0x80] sm:$0xff]
                  %2145 = vst [vmem:[%s2111 + $0x80] sm:$0xff] %v2144
                  %v2146 = vld [vmem:[%s2110 + $0x88] sm:$0xff]
                  %2147 = vst [vmem:[%s2111 + $0x88] sm:$0xff] %v2146
                  %v2148 = vld [vmem:[%s2110 + $0x90] sm:$0xff]
                  %2149 = vst [vmem:[%s2111 + $0x90] sm:$0xff] %v2148
                  %v2150 = vld [vmem:[%s2110 + $0x98] sm:$0xff]
                  %2151 = vst [vmem:[%s2111 + $0x98] sm:$0xff] %v2150
                  %v2152 = vld [vmem:[%s2110 + $0xa0] sm:$0xff]
                  %2153 = vst [vmem:[%s2111 + $0xa0] sm:$0xff] %v2152
                  %v2154 = vld [vmem:[%s2110 + $0xa8] sm:$0xff]
                  %2155 = vst [vmem:[%s2111 + $0xa8] sm:$0xff] %v2154
                  %v2156 = vld [vmem:[%s2110 + $0xb0] sm:$0xff]
                  %2157 = vst [vmem:[%s2111 + $0xb0] sm:$0xff] %v2156
                  %v2158 = vld [vmem:[%s2110 + $0xb8] sm:$0xff]
                  %2159 = vst [vmem:[%s2111 + $0xb8] sm:$0xff] %v2158
                  %v2160 = vld [vmem:[%s2110 + $0xc0] sm:$0xff]
                  %2161 = vst [vmem:[%s2111 + $0xc0] sm:$0xff] %v2160
                  %v2162 = vld [vmem:[%s2110 + $0xc8] sm:$0xff]
                  %2163 = vst [vmem:[%s2111 + $0xc8] sm:$0xff] %v2162
                  %v2164 = vld [vmem:[%s2110 + $0xd0] sm:$0xff]
                  %2165 = vst [vmem:[%s2111 + $0xd0] sm:$0xff] %v2164
                  %v2166 = vld [vmem:[%s2110 + $0xd8] sm:$0xff]
                  %2167 = vst [vmem:[%s2111 + $0xd8] sm:$0xff] %v2166
                  %v2168 = vld [vmem:[%s2110 + $0xe0] sm:$0xff]
                  %2169 = vst [vmem:[%s2111 + $0xe0] sm:$0xff] %v2168
                  %v2170 = vld [vmem:[%s2110 + $0xe8] sm:$0xff]
                  %2171 = vst [vmem:[%s2111 + $0xe8] sm:$0xff] %v2170
                  %v2172 = vld [vmem:[%s2110 + $0xf0] sm:$0xff]
                  %2173 = vst [vmem:[%s2111 + $0xf0] sm:$0xff] %v2172
                  %v2174 = vld [vmem:[%s2110 + $0xf8] sm:$0xff]
                  %2175 = vst [vmem:[%s2111 + $0xf8] sm:$0xff] %v2174
                  %v2176 = vld [vmem:[%s2110 + $0x100] sm:$0xff]
                  %2177 = vst [vmem:[%s2111 + $0x100] sm:$0xff] %v2176
                  %v2178 = vld [vmem:[%s2110 + $0x108] sm:$0xff]
                  %2179 = vst [vmem:[%s2111 + $0x108] sm:$0xff] %v2178
                  %v2180 = vld [vmem:[%s2110 + $0x110] sm:$0xff]
                  %2181 = vst [vmem:[%s2111 + $0x110] sm:$0xff] %v2180
                  %v2182 = vld [vmem:[%s2110 + $0x118] sm:$0xff]
                  %2183 = vst [vmem:[%s2111 + $0x118] sm:$0xff] %v2182
                  %v2184 = vld [vmem:[%s2110 + $0x120] sm:$0xff]
                  %2185 = vst [vmem:[%s2111 + $0x120] sm:$0xff] %v2184
                  %v2186 = vld [vmem:[%s2110 + $0x128] sm:$0xff]
                  %2187 = vst [vmem:[%s2111 + $0x128] sm:$0xff] %v2186
                  %v2188 = vld [vmem:[%s2110 + $0x130] sm:$0xff]
                  %2189 = vst [vmem:[%s2111 + $0x130] sm:$0xff] %v2188
                  %v2190 = vld [vmem:[%s2110 + $0x138] sm:$0xff]
                  %2191 = vst [vmem:[%s2111 + $0x138] sm:$0xff] %v2190
                  %v2192 = vld [vmem:[%s2110 + $0x140] sm:$0xff]
                  %2193 = vst [vmem:[%s2111 + $0x140] sm:$0xff] %v2192
                  %v2194 = vld [vmem:[%s2110 + $0x148] sm:$0xff]
                  %2195 = vst [vmem:[%s2111 + $0x148] sm:$0xff] %v2194
                  %v2196 = vld [vmem:[%s2110 + $0x150] sm:$0xff]
                  %2197 = vst [vmem:[%s2111 + $0x150] sm:$0xff] %v2196
                  %v2198 = vld [vmem:[%s2110 + $0x158] sm:$0xff]
                  %2199 = vst [vmem:[%s2111 + $0x158] sm:$0xff] %v2198
                  %v2200 = vld [vmem:[%s2110 + $0x160] sm:$0xff]
                  %2201 = vst [vmem:[%s2111 + $0x160] sm:$0xff] %v2200
                  %v2202 = vld [vmem:[%s2110 + $0x168] sm:$0xff]
                  %2203 = vst [vmem:[%s2111 + $0x168] sm:$0xff] %v2202
                  %v2204 = vld [vmem:[%s2110 + $0x170] sm:$0xff]
                  %2205 = vst [vmem:[%s2111 + $0x170] sm:$0xff] %v2204
                  %v2206 = vld [vmem:[%s2110 + $0x178] sm:$0xff]
                  %2207 = vst [vmem:[%s2111 + $0x178] sm:$0xff] %v2206
                  %v2208 = vld [vmem:[%s2110 + $0x180] sm:$0xff]
                  %2209 = vst [vmem:[%s2111 + $0x180] sm:$0xff] %v2208
                  %v2210 = vld [vmem:[%s2110 + $0x188] sm:$0xff]
                  %2211 = vst [vmem:[%s2111 + $0x188] sm:$0xff] %v2210
                  %v2212 = vld [vmem:[%s2110 + $0x190] sm:$0xff]
                  %2213 = vst [vmem:[%s2111 + $0x190] sm:$0xff] %v2212
                  %v2214 = vld [vmem:[%s2110 + $0x198] sm:$0xff]
                  %2215 = vst [vmem:[%s2111 + $0x198] sm:$0xff] %v2214
                  %v2216 = vld [vmem:[%s2110 + $0x1a0] sm:$0xff]
                  %2217 = vst [vmem:[%s2111 + $0x1a0] sm:$0xff] %v2216
                  %v2218 = vld [vmem:[%s2110 + $0x1a8] sm:$0xff]
                  %2219 = vst [vmem:[%s2111 + $0x1a8] sm:$0xff] %v2218
                  %v2220 = vld [vmem:[%s2110 + $0x1b0] sm:$0xff]
                  %2221 = vst [vmem:[%s2111 + $0x1b0] sm:$0xff] %v2220
                  %v2222 = vld [vmem:[%s2110 + $0x1b8] sm:$0xff]
                  %2223 = vst [vmem:[%s2111 + $0x1b8] sm:$0xff] %v2222
                  %v2224 = vld [vmem:[%s2110 + $0x1c0] sm:$0xff]
                  %2225 = vst [vmem:[%s2111 + $0x1c0] sm:$0xff] %v2224
                  %v2226 = vld [vmem:[%s2110 + $0x1c8] sm:$0xff]
                  %2227 = vst [vmem:[%s2111 + $0x1c8] sm:$0xff] %v2226
                  %v2228 = vld [vmem:[%s2110 + $0x1d0] sm:$0xff]
                  %2229 = vst [vmem:[%s2111 + $0x1d0] sm:$0xff] %v2228
                  %v2230 = vld [vmem:[%s2110 + $0x1d8] sm:$0xff]
                  %2231 = vst [vmem:[%s2111 + $0x1d8] sm:$0xff] %v2230
                  %v2232 = vld [vmem:[%s2110 + $0x1e0] sm:$0xff]
                  %2233 = vst [vmem:[%s2111 + $0x1e0] sm:$0xff] %v2232
                  %v2234 = vld [vmem:[%s2110 + $0x1e8] sm:$0xff]
                  %2235 = vst [vmem:[%s2111 + $0x1e8] sm:$0xff] %v2234
                  %v2236 = vld [vmem:[%s2110 + $0x1f0] sm:$0xff]
                  %2237 = vst [vmem:[%s2111 + $0x1f0] sm:$0xff] %v2236
                  %v2238 = vld [vmem:[%s2110 + $0x1f8] sm:$0xff]
                  %2239 = vst [vmem:[%s2111 + $0x1f8] sm:$0xff] %v2238
                  %s2240 = sadd.s32 1, %s2109
                  %p2241 = scmp.ge.s32.totalorder %s2240, %s2102
                  %s2242 = scalar_select %p2241, 0, %s2240
                  %s2243 = smul.u32 %s2242, 512
                  %s2244 = smul.u32 %s2242, 512
                  %s2245 = scalar_lea.vmem %s1909, %s2243 [#allocation2]
                  %s2246 = scalar_lea.vmem %s1920, %s2244
                $region75: #{bottleneck_up_forward.7} parent=69 // loop_footer
                  %s2106 = sadd.s32 %s2104, 1
                $region76: #{bottleneck_up_forward.7} parent=69 // loop_footer_branch
                  %2103 = sbr.rel target = $region72
                $region77: #{bottleneck_up_forward.7} parent=69 // loop_exit
                  _
                %s2247 = sshrl.u32 %s1916, 6
                %s2248 = sand.u32 %s1916, 63
                %s2249 = smul.u32 %s2247, 64
                %s2250 = smul.u32 8, %s2249
                %s2251 = scalar_lea.vmem %s1909, %s2250 [#allocation2]
                %s2252 = smul.u32 8, %s2249
                %s2253 = scalar_lea.vmem %s1920, %s2252
                // While loop
                $region78: #{bottleneck_up_forward.7} parent=69 // loop_pre_header
                  _
                $region79: #{bottleneck_up_forward.7} parent=69 // loop_header
                  %s2255 = sphi 0, %s2257
                  %p2256 = scmp.ge.s32.totalorder %s2255, %s2248
                  %s2260 = sphi 0, %s2267
                  %s2261 = sphi %s2251, %s2270
                  %s2262 = sphi %s2253, %s2271
                $region80: #{bottleneck_up_forward.7} parent=69 // loop_header_branch
                  %2259 = sbr.rel (%p2256) target = $region84
                $region81: #{bottleneck_up_forward.7} parent=69 // loop_body
                  %v2263 = vld [vmem:[%s2261] sm:$0xff]
                  %2264 = vst [vmem:[%s2262] sm:$0xff] %v2263
                  %s2265 = sadd.s32 1, %s2260
                  %p2266 = scmp.ge.s32.totalorder %s2265, %s2248
                  %s2267 = scalar_select %p2266, 0, %s2265
                  %s2268 = smul.u32 %s2267, 8
                  %s2269 = smul.u32 %s2267, 8
                  %s2270 = scalar_lea.vmem %s2251, %s2268 [#allocation2]
                  %s2271 = scalar_lea.vmem %s2253, %s2269
                $region82: #{bottleneck_up_forward.7} parent=69 // loop_footer
                  %s2257 = sadd.s32 %s2255, 1
                $region83: #{bottleneck_up_forward.7} parent=69 // loop_footer_branch
                  %2254 = sbr.rel target = $region79
                $region84: #{bottleneck_up_forward.7} parent=69 // loop_exit
                  _
              $region70: #{bottleneck_up_forward.7} parent=47 // pred_fallthru
                _
              // Predicated region
              $region85: #{bottleneck_up_forward.7} parent=47 // pred_check
                _
              $region86: #{bottleneck_up_forward.7} parent=47 // pred_check_branch
                %2273 = sbr.rel target = $region88
              $region87: #{bottleneck_up_forward.7} parent=47 // pred_region
                _
              $region88: #{bottleneck_up_forward.7} parent=47 // pred_fallthru
                _
            $region48: #{bottleneck_up_forward.7} parent=43 // pred_fallthru
              _
            // Predicated region
            $region49: #{bottleneck_up_forward.7} parent=43 // pred_check
              _
            $region50: #{bottleneck_up_forward.7} parent=43 // pred_check_branch
              %1927 = sbr.rel target = $region52
            $region51: #{bottleneck_up_forward.7} parent=43 // pred_region
              %s1929 = ssub.s32 256, 1
              %s1930 = sshrl.u32 %s1916, 6
              // While loop
              $region53: #{bottleneck_up_forward.7} parent=51 // loop_pre_header
                _
              $region54: #{bottleneck_up_forward.7} parent=51 // loop_header
                %s1932 = sphi 0, %s1934
                %p1933 = scmp.ge.s32.totalorder %s1932, %s1930
                %s1937 = sphi 0, %s2070
                %s1938 = sphi %s1909, %s2073
                %s1939 = sphi %s1920, %s2074
              $region55: #{bottleneck_up_forward.7} parent=51 // loop_header_branch
                %1936 = sbr.rel (%p1933) target = $region59
              $region56: #{bottleneck_up_forward.7} parent=51 // loop_body
                %v1940 = vld [vmem:[%s1938] sm:%s1929]
                %1941 = vst [vmem:[%s1939] sm:%s1929] %v1940
                %v1942 = vld [vmem:[%s1938 + $0x8] sm:%s1929]
                %1943 = vst [vmem:[%s1939 + $0x8] sm:%s1929] %v1942
                %v1944 = vld [vmem:[%s1938 + $0x10] sm:%s1929]
                %1945 = vst [vmem:[%s1939 + $0x10] sm:%s1929] %v1944
                %v1946 = vld [vmem:[%s1938 + $0x18] sm:%s1929]
                %1947 = vst [vmem:[%s1939 + $0x18] sm:%s1929] %v1946
                %v1948 = vld [vmem:[%s1938 + $0x20] sm:%s1929]
                %1949 = vst [vmem:[%s1939 + $0x20] sm:%s1929] %v1948
                %v1950 = vld [vmem:[%s1938 + $0x28] sm:%s1929]
                %1951 = vst [vmem:[%s1939 + $0x28] sm:%s1929] %v1950
                %v1952 = vld [vmem:[%s1938 + $0x30] sm:%s1929]
                %1953 = vst [vmem:[%s1939 + $0x30] sm:%s1929] %v1952
                %v1954 = vld [vmem:[%s1938 + $0x38] sm:%s1929]
                %1955 = vst [vmem:[%s1939 + $0x38] sm:%s1929] %v1954
                %v1956 = vld [vmem:[%s1938 + $0x40] sm:%s1929]
                %1957 = vst [vmem:[%s1939 + $0x40] sm:%s1929] %v1956
                %v1958 = vld [vmem:[%s1938 + $0x48] sm:%s1929]
                %1959 = vst [vmem:[%s1939 + $0x48] sm:%s1929] %v1958
                %v1960 = vld [vmem:[%s1938 + $0x50] sm:%s1929]
                %1961 = vst [vmem:[%s1939 + $0x50] sm:%s1929] %v1960
                %v1962 = vld [vmem:[%s1938 + $0x58] sm:%s1929]
                %1963 = vst [vmem:[%s1939 + $0x58] sm:%s1929] %v1962
                %v1964 = vld [vmem:[%s1938 + $0x60] sm:%s1929]
                %1965 = vst [vmem:[%s1939 + $0x60] sm:%s1929] %v1964
                %v1966 = vld [vmem:[%s1938 + $0x68] sm:%s1929]
                %1967 = vst [vmem:[%s1939 + $0x68] sm:%s1929] %v1966
                %v1968 = vld [vmem:[%s1938 + $0x70] sm:%s1929]
                %1969 = vst [vmem:[%s1939 + $0x70] sm:%s1929] %v1968
                %v1970 = vld [vmem:[%s1938 + $0x78] sm:%s1929]
                %1971 = vst [vmem:[%s1939 + $0x78] sm:%s1929] %v1970
                %v1972 = vld [vmem:[%s1938 + $0x80] sm:%s1929]
                %1973 = vst [vmem:[%s1939 + $0x80] sm:%s1929] %v1972
                %v1974 = vld [vmem:[%s1938 + $0x88] sm:%s1929]
                %1975 = vst [vmem:[%s1939 + $0x88] sm:%s1929] %v1974
                %v1976 = vld [vmem:[%s1938 + $0x90] sm:%s1929]
                %1977 = vst [vmem:[%s1939 + $0x90] sm:%s1929] %v1976
                %v1978 = vld [vmem:[%s1938 + $0x98] sm:%s1929]
                %1979 = vst [vmem:[%s1939 + $0x98] sm:%s1929] %v1978
                %v1980 = vld [vmem:[%s1938 + $0xa0] sm:%s1929]
                %1981 = vst [vmem:[%s1939 + $0xa0] sm:%s1929] %v1980
                %v1982 = vld [vmem:[%s1938 + $0xa8] sm:%s1929]
                %1983 = vst [vmem:[%s1939 + $0xa8] sm:%s1929] %v1982
                %v1984 = vld [vmem:[%s1938 + $0xb0] sm:%s1929]
                %1985 = vst [vmem:[%s1939 + $0xb0] sm:%s1929] %v1984
                %v1986 = vld [vmem:[%s1938 + $0xb8] sm:%s1929]
                %1987 = vst [vmem:[%s1939 + $0xb8] sm:%s1929] %v1986
                %v1988 = vld [vmem:[%s1938 + $0xc0] sm:%s1929]
                %1989 = vst [vmem:[%s1939 + $0xc0] sm:%s1929] %v1988
                %v1990 = vld [vmem:[%s1938 + $0xc8] sm:%s1929]
                %1991 = vst [vmem:[%s1939 + $0xc8] sm:%s1929] %v1990
                %v1992 = vld [vmem:[%s1938 + $0xd0] sm:%s1929]
                %1993 = vst [vmem:[%s1939 + $0xd0] sm:%s1929] %v1992
                %v1994 = vld [vmem:[%s1938 + $0xd8] sm:%s1929]
                %1995 = vst [vmem:[%s1939 + $0xd8] sm:%s1929] %v1994
                %v1996 = vld [vmem:[%s1938 + $0xe0] sm:%s1929]
                %1997 = vst [vmem:[%s1939 + $0xe0] sm:%s1929] %v1996
                %v1998 = vld [vmem:[%s1938 + $0xe8] sm:%s1929]
                %1999 = vst [vmem:[%s1939 + $0xe8] sm:%s1929] %v1998
                %v2000 = vld [vmem:[%s1938 + $0xf0] sm:%s1929]
                %2001 = vst [vmem:[%s1939 + $0xf0] sm:%s1929] %v2000
                %v2002 = vld [vmem:[%s1938 + $0xf8] sm:%s1929]
                %2003 = vst [vmem:[%s1939 + $0xf8] sm:%s1929] %v2002
                %v2004 = vld [vmem:[%s1938 + $0x100] sm:%s1929]
                %2005 = vst [vmem:[%s1939 + $0x100] sm:%s1929] %v2004
                %v2006 = vld [vmem:[%s1938 + $0x108] sm:%s1929]
                %2007 = vst [vmem:[%s1939 + $0x108] sm:%s1929] %v2006
                %v2008 = vld [vmem:[%s1938 + $0x110] sm:%s1929]
                %2009 = vst [vmem:[%s1939 + $0x110] sm:%s1929] %v2008
                %v2010 = vld [vmem:[%s1938 + $0x118] sm:%s1929]
                %2011 = vst [vmem:[%s1939 + $0x118] sm:%s1929] %v2010
                %v2012 = vld [vmem:[%s1938 + $0x120] sm:%s1929]
                %2013 = vst [vmem:[%s1939 + $0x120] sm:%s1929] %v2012
                %v2014 = vld [vmem:[%s1938 + $0x128] sm:%s1929]
                %2015 = vst [vmem:[%s1939 + $0x128] sm:%s1929] %v2014
                %v2016 = vld [vmem:[%s1938 + $0x130] sm:%s1929]
                %2017 = vst [vmem:[%s1939 + $0x130] sm:%s1929] %v2016
                %v2018 = vld [vmem:[%s1938 + $0x138] sm:%s1929]
                %2019 = vst [vmem:[%s1939 + $0x138] sm:%s1929] %v2018
                %v2020 = vld [vmem:[%s1938 + $0x140] sm:%s1929]
                %2021 = vst [vmem:[%s1939 + $0x140] sm:%s1929] %v2020
                %v2022 = vld [vmem:[%s1938 + $0x148] sm:%s1929]
                %2023 = vst [vmem:[%s1939 + $0x148] sm:%s1929] %v2022
                %v2024 = vld [vmem:[%s1938 + $0x150] sm:%s1929]
                %2025 = vst [vmem:[%s1939 + $0x150] sm:%s1929] %v2024
                %v2026 = vld [vmem:[%s1938 + $0x158] sm:%s1929]
                %2027 = vst [vmem:[%s1939 + $0x158] sm:%s1929] %v2026
                %v2028 = vld [vmem:[%s1938 + $0x160] sm:%s1929]
                %2029 = vst [vmem:[%s1939 + $0x160] sm:%s1929] %v2028
                %v2030 = vld [vmem:[%s1938 + $0x168] sm:%s1929]
                %2031 = vst [vmem:[%s1939 + $0x168] sm:%s1929] %v2030
                %v2032 = vld [vmem:[%s1938 + $0x170] sm:%s1929]
                %2033 = vst [vmem:[%s1939 + $0x170] sm:%s1929] %v2032
                %v2034 = vld [vmem:[%s1938 + $0x178] sm:%s1929]
                %2035 = vst [vmem:[%s1939 + $0x178] sm:%s1929] %v2034
                %v2036 = vld [vmem:[%s1938 + $0x180] sm:%s1929]
                %2037 = vst [vmem:[%s1939 + $0x180] sm:%s1929] %v2036
                %v2038 = vld [vmem:[%s1938 + $0x188] sm:%s1929]
                %2039 = vst [vmem:[%s1939 + $0x188] sm:%s1929] %v2038
                %v2040 = vld [vmem:[%s1938 + $0x190] sm:%s1929]
                %2041 = vst [vmem:[%s1939 + $0x190] sm:%s1929] %v2040
                %v2042 = vld [vmem:[%s1938 + $0x198] sm:%s1929]
                %2043 = vst [vmem:[%s1939 + $0x198] sm:%s1929] %v2042
                %v2044 = vld [vmem:[%s1938 + $0x1a0] sm:%s1929]
                %2045 = vst [vmem:[%s1939 + $0x1a0] sm:%s1929] %v2044
                %v2046 = vld [vmem:[%s1938 + $0x1a8] sm:%s1929]
                %2047 = vst [vmem:[%s1939 + $0x1a8] sm:%s1929] %v2046
                %v2048 = vld [vmem:[%s1938 + $0x1b0] sm:%s1929]
                %2049 = vst [vmem:[%s1939 + $0x1b0] sm:%s1929] %v2048
                %v2050 = vld [vmem:[%s1938 + $0x1b8] sm:%s1929]
                %2051 = vst [vmem:[%s1939 + $0x1b8] sm:%s1929] %v2050
                %v2052 = vld [vmem:[%s1938 + $0x1c0] sm:%s1929]
                %2053 = vst [vmem:[%s1939 + $0x1c0] sm:%s1929] %v2052
                %v2054 = vld [vmem:[%s1938 + $0x1c8] sm:%s1929]
                %2055 = vst [vmem:[%s1939 + $0x1c8] sm:%s1929] %v2054
                %v2056 = vld [vmem:[%s1938 + $0x1d0] sm:%s1929]
                %2057 = vst [vmem:[%s1939 + $0x1d0] sm:%s1929] %v2056
                %v2058 = vld [vmem:[%s1938 + $0x1d8] sm:%s1929]
                %2059 = vst [vmem:[%s1939 + $0x1d8] sm:%s1929] %v2058
                %v2060 = vld [vmem:[%s1938 + $0x1e0] sm:%s1929]
                %2061 = vst [vmem:[%s1939 + $0x1e0] sm:%s1929] %v2060
                %v2062 = vld [vmem:[%s1938 + $0x1e8] sm:%s1929]
                %2063 = vst [vmem:[%s1939 + $0x1e8] sm:%s1929] %v2062
                %v2064 = vld [vmem:[%s1938 + $0x1f0] sm:%s1929]
                %2065 = vst [vmem:[%s1939 + $0x1f0] sm:%s1929] %v2064
                %v2066 = vld [vmem:[%s1938 + $0x1f8] sm:%s1929]
                %2067 = vst [vmem:[%s1939 + $0x1f8] sm:%s1929] %v2066
                %s2068 = sadd.s32 1, %s1937
                %p2069 = scmp.ge.s32.totalorder %s2068, %s1930
                %s2070 = scalar_select %p2069, 0, %s2068
                %s2071 = smul.u32 %s2070, 512
                %s2072 = smul.u32 %s2070, 512
                %s2073 = scalar_lea.vmem %s1909, %s2071 [#allocation2]
                %s2074 = scalar_lea.vmem %s1920, %s2072
              $region57: #{bottleneck_up_forward.7} parent=51 // loop_footer
                %s1934 = sadd.s32 %s1932, 1
              $region58: #{bottleneck_up_forward.7} parent=51 // loop_footer_branch
                %1931 = sbr.rel target = $region54
              $region59: #{bottleneck_up_forward.7} parent=51 // loop_exit
                _
              %s2075 = sshrl.u32 %s1916, 6
              %s2076 = sand.u32 %s1916, 63
              %s2077 = smul.u32 %s2075, 64
              %s2078 = smul.u32 8, %s2077
              %s2079 = scalar_lea.vmem %s1909, %s2078 [#allocation2]
              %s2080 = smul.u32 8, %s2077
              %s2081 = scalar_lea.vmem %s1920, %s2080
              // While loop
              $region60: #{bottleneck_up_forward.7} parent=51 // loop_pre_header
                _
              $region61: #{bottleneck_up_forward.7} parent=51 // loop_header
                %s2083 = sphi 0, %s2085
                %p2084 = scmp.ge.s32.totalorder %s2083, %s2076
                %s2088 = sphi 0, %s2095
                %s2089 = sphi %s2079, %s2098
                %s2090 = sphi %s2081, %s2099
              $region62: #{bottleneck_up_forward.7} parent=51 // loop_header_branch
                %2087 = sbr.rel (%p2084) target = $region66
              $region63: #{bottleneck_up_forward.7} parent=51 // loop_body
                %v2091 = vld [vmem:[%s2089] sm:%s1929]
                %2092 = vst [vmem:[%s2090] sm:%s1929] %v2091
                %s2093 = sadd.s32 1, %s2088
                %p2094 = scmp.ge.s32.totalorder %s2093, %s2076
                %s2095 = scalar_select %p2094, 0, %s2093
                %s2096 = smul.u32 %s2095, 8
                %s2097 = smul.u32 %s2095, 8
                %s2098 = scalar_lea.vmem %s2079, %s2096 [#allocation2]
                %s2099 = scalar_lea.vmem %s2081, %s2097
              $region64: #{bottleneck_up_forward.7} parent=51 // loop_footer
                %s2085 = sadd.s32 %s2083, 1
              $region65: #{bottleneck_up_forward.7} parent=51 // loop_footer_branch
                %2082 = sbr.rel target = $region61
              $region66: #{bottleneck_up_forward.7} parent=51 // loop_exit
                _
            $region52: #{bottleneck_up_forward.7} parent=43 // pred_fallthru
              _
          $region44: #{bottleneck_up_forward.7} parent=39 // pred_fallthru
            _
          %2274 = vnop
        $region40: #{bottleneck_up_forward.7} parent=35 // pred_fallthru
          _
      $region36: #{bottleneck_up_forward.7} parent=5 // pred_fallthru
        _
      %p2275 = scmp.le.s32.totalorder 2, %s10
      // Predicated region
      $region89: #{bottleneck_up_forward.7} parent=5 // pred_check
        %p2276 = pneg %p2275
      $region90: #{bottleneck_up_forward.7} parent=5 // pred_check_branch
        %2278 = sbr.rel (%p2276) target = $region92
      $region91: #{bottleneck_up_forward.7} parent=5 // pred_region
        %s2279 = ssub.s32 %s10, 2
        // Predicated region
        $region93: #{bottleneck_up_forward.7} parent=91 // pred_check
          %p2280 = pneg %p133
        $region94: #{bottleneck_up_forward.7} parent=91 // pred_check_branch
          %2282 = sbr.rel (%p2280) target = $region96
        $region95: #{bottleneck_up_forward.7} parent=91 // pred_region
          %s2283 = sand.u32 %s118, 1
          %s2284 = sand.u32 %s118, 1
          %s2285 = smul.addr %s2284, 976
          %s2286 = scalar_lea.vmem [#allocation2], %s2285
        $region96: #{bottleneck_up_forward.7} parent=91 // pred_fallthru
          _
      $region92: #{bottleneck_up_forward.7} parent=5 // pred_fallthru
        _
    $region6: #{bottleneck_up_forward.7} parent=1 // loop_footer
      %s14 = sadd.s32 1, %s10
    $region7: #{bottleneck_up_forward.7} parent=1 // loop_footer_branch
      %9 = sbr.rel target = $region3
    $region8: #{bottleneck_up_forward.7} parent=1 // loop_exit
      _

</llo_original>
